<compile_context>
chip_gen: v5e
topology: v5e:2x2
jax: 0.10.0
libtpu: 0.0.40
codegen_flags: <defaults>
</compile_context>

<pallas_src>
import functools
import math

import jax
import jax.numpy as jnp
from jax import lax
from jax.experimental import pallas as pl
from jax.experimental.pallas import tpu as pltpu

# Matmul-input dtype: bf16 on real TPU (MXU-native), f32 otherwise so the
# CPU / interpret-mode executor (no BF16xBF16=F32 dot support) still runs.
_ON_TPU = jax.default_backend() == "tpu"
COMPUTE_DTYPE = jnp.bfloat16 if _ON_TPU else jnp.float32

_INV_SQRT2 = 0.7071067811865476  # hoisted constant for the exact-erf GELU
_VMEM_LIMIT = 48 * 1024 * 1024


def _gelu_exact(x):
    # F.gelu default (exact erf form), evaluated in f32.
    return 0.5 * x * (1.0 + lax.erf(x * _INV_SQRT2))


# ----------------------------------------------------------------------------
# Generic linear kernel: y = x @ W + b, grid over batch.
# ----------------------------------------------------------------------------
def _linear_kernel(x_ref, w_ref, b_ref, o_ref):
    x = x_ref[0].astype(COMPUTE_DTYPE)                        # (N, Din)
    y = jnp.dot(x, w_ref[...], preferred_element_type=jnp.float32)
    o_ref[0] = (y + b_ref[...]).astype(o_ref.dtype)


def linear_forward(x, w, b):
    """x: (B, N, Din) f32, w: (Din, Dout) compute-dtype, b: (1, Dout) f32."""
    B, N, Din = x.shape
    Dout = w.shape[1]
    return pl.pallas_call(
        _linear_kernel,
        out_shape=jax.ShapeDtypeStruct((B, N, Dout), jnp.float32),
        grid_spec=pltpu.PrefetchScalarGridSpec(
            num_scalar_prefetch=0,
            grid=(B,),
            in_specs=[
                pl.BlockSpec((1, N, Din), lambda bb: (bb, 0, 0)),
                pl.BlockSpec((Din, Dout), lambda bb: (0, 0)),
                pl.BlockSpec((1, Dout), lambda bb: (0, 0)),
            ],
            out_specs=pl.BlockSpec((1, N, Dout), lambda bb: (bb, 0, 0)),
        ),
        compiler_params=pltpu.CompilerParams(
            dimension_semantics=("parallel",),
            vmem_limit_bytes=_VMEM_LIMIT,
        ),
    )(x, w, b)


# ----------------------------------------------------------------------------
# Fused transformer Block kernel (attention + MLP, both residuals).
# ----------------------------------------------------------------------------
def _make_block_kernel(dim, heads, seq_len):
    head_dim = dim // heads
    scale = 1.0 / math.sqrt(head_dim)
    cdt = COMPUTE_DTYPE

    def block_kernel(x_ref, wqkv_ref, wout_ref, bout_ref,
                     w1_ref, b1_ref, w2_ref, b2_ref, o_ref):
        x = x_ref[0]                                          # (N, D) f32
        xb = x.astype(cdt)

        # ---- fused QKV projection: one full-width (K=D) MXU matmul ----
        qkv = jnp.dot(xb, wqkv_ref[...],
                      preferred_element_type=jnp.float32)     # (N, 3D) f32

        # One 2-D transpose + reshape puts heads in a leading batch dim
        # (replaces `heads` narrow lane slices + concatenate).
        qkv_t = qkv.T.reshape(3 * heads, head_dim, seq_len)   # (3H, hd, N)
        q_t = qkv_t[0 * heads:1 * heads]                      # (H, hd, N)
        k_t = qkv_t[1 * heads:2 * heads]
        v_t = qkv_t[2 * heads:3 * heads]

        q = (jnp.swapaxes(q_t, 1, 2) * scale).astype(cdt)     # (H, N, hd)
        k = jnp.swapaxes(k_t, 1, 2).astype(cdt)               # (H, N, hd)
        v = v_t.astype(cdt)                                   # (H, hd, N) kept transposed

        # ---- attention for all heads in single batched contractions ----
        s = jnp.einsum("hne,hme->hnm", q, k,
                       preferred_element_type=jnp.float32)    # (H, N, N) f32
        s = s - jnp.max(s, axis=-1, keepdims=True)
        p = jnp.exp(s)
        denom = jnp.sum(p, axis=-1, keepdims=True)            # (H, N, 1) tiny
        p = p / denom
        pv = jnp.einsum("hnm,hem->hne", p.astype(cdt), v,
                        preferred_element_type=jnp.float32)   # (H, N, hd) f32

        # ---- output projection folded per-head: no concatenate ----
        proj = jnp.einsum("hne,hed->hnd", pv.astype(cdt), wout_ref[...],
                          preferred_element_type=jnp.float32)  # (H, N, D) f32
        x1 = proj.sum(axis=0) + bout_ref[...] + x               # attention residual

        # ---- MLP (GELU exact erf, elementwise math in f32) ----
        h1 = jnp.dot(x1.astype(cdt), w1_ref[...],
                     preferred_element_type=jnp.float32) + b1_ref[...]
        h1 = _gelu_exact(h1)
        y = jnp.dot(h1.astype(cdt), w2_ref[...],
                    preferred_element_type=jnp.float32) + b2_ref[...]
        o_ref[0] = (y + x1).astype(o_ref.dtype)                 # MLP residual

    return block_kernel


def block_forward(x, p, *, heads):
    B, N, D = x.shape
    Hid = p["w1"].shape[1]
    hd = D // heads
    kernel = _make_block_kernel(D, heads, N)
    wout_heads = p["wout"].reshape(heads, hd, D)   # plain-JAX reshape (free)

    def const(shape):
        return pl.BlockSpec(shape, lambda b, _s=shape: tuple(0 for _ in _s))

    return pl.pallas_call(
        kernel,
        out_shape=jax.ShapeDtypeStruct((B, N, D), jnp.float32),
        grid_spec=pltpu.PrefetchScalarGridSpec(
            num_scalar_prefetch=0,
            grid=(B,),
            in_specs=[
                pl.BlockSpec((1, N, D), lambda b: (b, 0, 0)),  # x
                const((D, 3 * D)),                             # Wqkv
                const((heads, hd, D)),                          # Wout per-head
                const((1, D)),                                  # bout  (f32)
                const((D, Hid)),                                # W1
                const((1, Hid)),                                # b1    (f32)
                const((Hid, D)),                                # W2
                const((1, D)),                                  # b2    (f32)
            ],
            out_specs=pl.BlockSpec((1, N, D), lambda b: (b, 0, 0)),
        ),
        compiler_params=pltpu.CompilerParams(
            dimension_semantics=("parallel",),
            vmem_limit_bytes=_VMEM_LIMIT,
        ),
    )(x, p["wqkv"], wout_heads, p["bout"], p["w1"], p["b1"], p["w2"], p["b2"])


# ----------------------------------------------------------------------------
# Mean-pool over sequence + out_proj (dim -> 1).
# ----------------------------------------------------------------------------
def _pool_head_kernel(x_ref, w_ref, b_ref, o_ref):
    n = x_ref.shape[1]
    xm = jnp.sum(x_ref[...], axis=1) * (1.0 / n)               # (B, D) mean
    y = jnp.sum(xm * w_ref[...], axis=-1, keepdims=True)       # (B, 1)
    o_ref[...] = (y + b_ref[...]).astype(o_ref.dtype)


def pool_head_forward(x, w_row, b):
    B, N, D = x.shape
    return pl.pallas_call(
        _pool_head_kernel,
        out_shape=jax.ShapeDtypeStruct((B, 1), jnp.float32),
        grid_spec=pltpu.PrefetchScalarGridSpec(
            num_scalar_prefetch=0,
            grid=(1,),
            in_specs=[
                pl.BlockSpec((B, N, D), lambda i: (0, 0, 0)),
                pl.BlockSpec((1, D), lambda i: (0, 0)),
                pl.BlockSpec((1, 1), lambda i: (0, 0)),
            ],
            out_specs=pl.BlockSpec((B, 1), lambda i: (0, 0)),
        ),
        compiler_params=pltpu.CompilerParams(vmem_limit_bytes=_VMEM_LIMIT),
    )(x, w_row, b)


# ----------------------------------------------------------------------------
# Full PPP forward.
# ----------------------------------------------------------------------------
def ppp_forward(params, image_emb, desc_emb, spec_emb, *, heads):
    # NB: the torch module applies `spec_proj` to the *desc* embedding and
    # `desc_proj` to the *spec* embedding; mirrored exactly here.
    img = linear_forward(image_emb, params["clap_w"], params["clap_b"])
    desc = linear_forward(desc_emb, params["spec_w"], params["spec_b"])
    spec = linear_forward(spec_emb, params["desc_w"], params["desc_b"])
    x = jnp.concatenate([img, desc, spec], axis=1)   # pure data movement (XLA)
    for blk in params["blocks"]:
        x = block_forward(x, blk, heads=heads)
    logits = pool_head_forward(x, params["out_w"], params["out_b"])
    return logits[:, 0]


# ----------------------------------------------------------------------------
# Parameters (weights pre-transposed to (in, out); matmul weights in the
# compute dtype, biases in f32).
# ----------------------------------------------------------------------------
def init_params(key, *, dim, num_blocks, heads, mlp_hidden_dim):
    cdt = COMPUTE_DTYPE
    keys = jax.random.split(key, 8 + num_blocks)

    def w(k, shape, scl):
        return (jax.random.normal(k, shape, jnp.float32) * scl).astype(cdt)

    def b(k, shape, scl=0.01):
        return jax.random.normal(k, shape, jnp.float32) * scl

    params = {
        "clap_w": w(keys[0], (512, dim), 0.03), "clap_b": b(keys[1], (1, dim)),
        "spec_w": w(keys[2], (768, dim), 0.03), "spec_b": b(keys[3], (1, dim)),
        "desc_w": w(keys[4], (768, dim), 0.03), "desc_b": b(keys[5], (1, dim)),
        "out_w": jax.random.normal(keys[6], (1, dim), jnp.float32) * 0.05,
        "out_b": jax.random.normal(keys[7], (1, 1), jnp.float32) * 0.01,
        "blocks": [],
    }
    for i in range(num_blocks):
        ks = jax.random.split(keys[8 + i], 7)
        params["blocks"].append({
            "wqkv": w(ks[0], (dim, 3 * dim), 0.05),
            "wout": w(ks[1], (dim, dim), 0.05),
            "bout": b(ks[2], (1, dim)),
            "w1": w(ks[3], (dim, mlp_hidden_dim), 0.05),
            "b1": b(ks[4], (1, mlp_hidden_dim)),
            "w2": w(ks[5], (mlp_hidden_dim, dim), 0.05),
            "b2": b(ks[6], (1, dim)),
        })
    return params


# ----------------------------------------------------------------------------
# Plain-JAX reference (precision-matched: same matmul-input dtype / f32
# accumulate policy as the kernels, so tolerances stay tight).
# ----------------------------------------------------------------------------
def _ref_linear(x, w, bias):
    y = jnp.einsum("bnd,df->bnf", x.astype(w.dtype), w,
                   preferred_element_type=jnp.float32)
    return y + bias[0]


def reference_block(x, p, *, heads):
    B, N, D = x.shape
    hd = D // heads
    cdt = p["wqkv"].dtype
    qkv = _ref_linear(x, p["wqkv"], jnp.zeros((1, 3 * D), jnp.float32))
    q, k, v = jnp.split(qkv, 3, axis=-1)
    to_heads = lambda t: t.reshape(B, N, heads, hd).transpose(0, 2, 1, 3)
    q, k, v = map(to_heads, (q, k, v))
    s = jnp.einsum("bhnd,bhmd->bhnm", (q / math.sqrt(hd)).astype(cdt),
                   k.astype(cdt), preferred_element_type=jnp.float32)
    a = jax.nn.softmax(s, axis=-1)
    o = jnp.einsum("bhnm,bhmd->bhnd", a.astype(cdt), v.astype(cdt),
                   preferred_element_type=jnp.float32)
    o = o.transpose(0, 2, 1, 3).reshape(B, N, D)
    x1 = _ref_linear(o, p["wout"], p["bout"]) + x
    h = jax.nn.gelu(_ref_linear(x1, p["w1"], p["b1"]), approximate=False)
    return _ref_linear(h, p["w2"], p["b2"]) + x1


def reference_ppp(params, image_emb, desc_emb, spec_emb, *, heads):
    img = _ref_linear(image_emb, params["clap_w"], params["clap_b"])
    desc = _ref_linear(desc_emb, params["spec_w"], params["spec_b"])
    spec = _ref_linear(spec_emb, params["desc_w"], params["desc_b"])
    x = jnp.concatenate([img, desc, spec], axis=1)
    for blk in params["blocks"]:
        x = reference_block(x, blk, heads=heads)
    xm = x.mean(axis=1)
    return jnp.sum(xm * params["out_w"], axis=-1) + params["out_b"][0, 0]


if __name__ == "__main__":
    DIM, NUM_BLOCKS, HEADS, MLP_HID = 128, 2, 4, 256
    B, N_IMG, N_DESC, N_SPEC = 2, 8, 4, 4   # total seq = 16 (tile-aligned)

    root = jax.random.PRNGKey(0)
    k_img, k_desc, k_spec, k_par = jax.random.split(root, 4)
    image_emb = jax.random.normal(k_img, (B, N_IMG, 512), jnp.float32)
    desc_emb = jax.random.normal(k_desc, (B, N_DESC, 768), jnp.float32)
    spec_emb = jax.random.normal(k_spec, (B, N_SPEC, 768), jnp.float32)
    params = init_params(k_par, dim=DIM, num_blocks=NUM_BLOCKS, heads=HEADS,
                         mlp_hidden_dim=MLP_HID)

    fwd = jax.jit(functools.partial(ppp_forward, heads=HEADS))
    out = jax.block_until_ready(fwd(params, image_emb, desc_emb, spec_emb))

    ref = jax.block_until_ready(
        reference_ppp(params, image_emb, desc_emb, spec_emb, heads=HEADS))

    assert out.shape == (B,), out.shape
    assert jnp.allclose(out, ref, atol=2e-2, rtol=2e-2), (out, ref)
    print("KERNEL_OK")
</pallas_src>

<mosaic_0001>
module attributes {stable_mosaic.version = 11 : i64} {
  func.func @_linear_kernel(%arg0: i32, %arg1: memref<1x4x768xf32, #tpu.memory_space<vmem>>, %arg2: memref<768x128xf32, #tpu.memory_space<vmem>>, %arg3: memref<1x128xf32, #tpu.memory_space<vmem>>, %arg4: memref<1x4x128xf32, #tpu.memory_space<vmem>>) attributes {dimension_semantics = [#tpu.dimension_semantics<parallel>], iteration_bounds = array<i64: 2>, scalar_prefetch = 0 : i64, scratch_operands = 0 : i64, tpu.core_type = #tpu.core_type<tc>, window_params = [{transform_indices = @transform_0, window_bounds = array<i64: 1, 4, 768>}, {pipeline_mode = #tpu.pipeline_mode<synchronous>, transform_indices = @transform_1, window_bounds = array<i64: 768, 128>}, {pipeline_mode = #tpu.pipeline_mode<synchronous>, transform_indices = @transform_2, window_bounds = array<i64: 1, 128>}, {transform_indices = @transform_3, window_bounds = array<i64: 1, 4, 128>}]} {
    %c0 = arith.constant 0 : index
    %c0_0 = arith.constant 0 : index
    %c0_1 = arith.constant 0 : index
    %0 = vector.load %arg1[%c0, %c0_0, %c0_1] : memref<1x4x768xf32, #tpu.memory_space<vmem>>, vector<1x4x768xf32>
    %1 = vector.shape_cast %0 : vector<1x4x768xf32> to vector<4x768xf32>
    %c0_2 = arith.constant 0 : index
    %c0_3 = arith.constant 0 : index
    %2 = vector.load %arg2[%c0_2, %c0_3] : memref<768x128xf32, #tpu.memory_space<vmem>>, vector<768x128xf32>
    %cst = arith.constant dense<0.000000e+00> : vector<4x128xf32>
    %3 = tpu.matmul %1, %2, %cst {dimension_numbers = #tpu.dot_dimension_numbers<[1], [0], [0], [1], [0, 0, 1, 1], [], []>} : vector<4x768xf32>, vector<768x128xf32>, vector<4x128xf32> -> vector<4x128xf32>
    %c0_4 = arith.constant 0 : index
    %c0_5 = arith.constant 0 : index
    %4 = vector.load %arg3[%c0_4, %c0_5] : memref<1x128xf32, #tpu.memory_space<vmem>>, vector<1x128xf32>
    %5 = vector.broadcast %4 : vector<1x128xf32> to vector<4x128xf32>
    %6 = arith.addf %3, %5 : vector<4x128xf32>
    %c0_6 = arith.constant 0 : index
    %c0_7 = arith.constant 0 : index
    %c0_8 = arith.constant 0 : index
    %7 = vector.load %arg4[%c0_6, %c0_7, %c0_8] : memref<1x4x128xf32, #tpu.memory_space<vmem>>, vector<1x4x128xf32>
    %8 = vector.shape_cast %7 : vector<1x4x128xf32> to vector<4x128xf32>
    %9 = vector.shape_cast %6 : vector<4x128xf32> to vector<1x4x128xf32>
    tpu.vector_store %arg4[%c0_6, %c0_7, %c0_8], %9 {strides = array<i32>} : memref<1x4x128xf32, #tpu.memory_space<vmem>>, vector<1x4x128xf32>,
    return
  }
  func.func @transform_0(%arg0: i32) -> (i32, i32, i32) {
    %c0_i32 = arith.constant 0 : i32
    %c0_i32_0 = arith.constant 0 : i32
    %c0_i32_1 = arith.constant 0 : i32
    return %arg0, %c0_i32, %c0_i32_0 : i32, i32, i32
  }
  func.func @transform_1(%arg0: i32) -> (i32, i32) {
    %c0_i32 = arith.constant 0 : i32
    %c0_i32_0 = arith.constant 0 : i32
    %c0_i32_1 = arith.constant 0 : i32
    return %c0_i32, %c0_i32_0 : i32, i32
  }
  func.func @transform_2(%arg0: i32) -> (i32, i32) {
    %c0_i32 = arith.constant 0 : i32
    %c0_i32_0 = arith.constant 0 : i32
    %c0_i32_1 = arith.constant 0 : i32
    return %c0_i32, %c0_i32_0 : i32, i32
  }
  func.func @transform_3(%arg0: i32) -> (i32, i32, i32) {
    %c0_i32 = arith.constant 0 : i32
    %c0_i32_0 = arith.constant 0 : i32
    %c0_i32_1 = arith.constant 0 : i32
    return %arg0, %c0_i32, %c0_i32_0 : i32, i32, i32
  }
}

module attributes {stable_mosaic.version = 11 : i64} {
  func.func @_linear_kernel(%arg0: i32, %arg1: memref<1x8x512xf32, #tpu.memory_space<vmem>>, %arg2: memref<512x128xf32, #tpu.memory_space<vmem>>, %arg3: memref<1x128xf32, #tpu.memory_space<vmem>>, %arg4: memref<1x8x128xf32, #tpu.memory_space<vmem>>) attributes {dimension_semantics = [#tpu.dimension_semantics<parallel>], iteration_bounds = array<i64: 2>, scalar_prefetch = 0 : i64, scratch_operands = 0 : i64, tpu.core_type = #tpu.core_type<tc>, window_params = [{transform_indices = @transform_0, window_bounds = array<i64: 1, 8, 512>}, {pipeline_mode = #tpu.pipeline_mode<synchronous>, transform_indices = @transform_1, window_bounds = array<i64: 512, 128>}, {pipeline_mode = #tpu.pipeline_mode<synchronous>, transform_indices = @transform_2, window_bounds = array<i64: 1, 128>}, {transform_indices = @transform_3, window_bounds = array<i64: 1, 8, 128>}]} {
    %c0 = arith.constant 0 : index
    %c0_0 = arith.constant 0 : index
    %c0_1 = arith.constant 0 : index
    %0 = vector.load %arg1[%c0, %c0_0, %c0_1] : memref<1x8x512xf32, #tpu.memory_space<vmem>>, vector<1x8x512xf32>
    %1 = vector.shape_cast %0 : vector<1x8x512xf32> to vector<8x512xf32>
    %c0_2 = arith.constant 0 : index
    %c0_3 = arith.constant 0 : index
    %2 = vector.load %arg2[%c0_2, %c0_3] : memref<512x128xf32, #tpu.memory_space<vmem>>, vector<512x128xf32>
    %cst = arith.constant dense<0.000000e+00> : vector<8x128xf32>
    %3 = tpu.matmul %1, %2, %cst {dimension_numbers = #tpu.dot_dimension_numbers<[1], [0], [0], [1], [0, 0, 1, 1], [], []>} : vector<8x512xf32>, vector<512x128xf32>, vector<8x128xf32> -> vector<8x128xf32>
    %c0_4 = arith.constant 0 : index
    %c0_5 = arith.constant 0 : index
    %4 = vector.load %arg3[%c0_4, %c0_5] : memref<1x128xf32, #tpu.memory_space<vmem>>, vector<1x128xf32>
    %5 = vector.broadcast %4 : vector<1x128xf32> to vector<8x128xf32>
    %6 = arith.addf %3, %5 : vector<8x128xf32>
    %c0_6 = arith.constant 0 : index
    %c0_7 = arith.constant 0 : index
    %c0_8 = arith.constant 0 : index
    %7 = vector.load %arg4[%c0_6, %c0_7, %c0_8] : memref<1x8x128xf32, #tpu.memory_space<vmem>>, vector<1x8x128xf32>
    %8 = vector.shape_cast %7 : vector<1x8x128xf32> to vector<8x128xf32>
    %9 = vector.shape_cast %6 : vector<8x128xf32> to vector<1x8x128xf32>
    tpu.vector_store %arg4[%c0_6, %c0_7, %c0_8], %9 {strides = array<i32>} : memref<1x8x128xf32, #tpu.memory_space<vmem>>, vector<1x8x128xf32>,
    return
  }
  func.func @transform_0(%arg0: i32) -> (i32, i32, i32) {
    %c0_i32 = arith.constant 0 : i32
    %c0_i32_0 = arith.constant 0 : i32
    %c0_i32_1 = arith.constant 0 : i32
    return %arg0, %c0_i32, %c0_i32_0 : i32, i32, i32
  }
  func.func @transform_1(%arg0: i32) -> (i32, i32) {
    %c0_i32 = arith.constant 0 : i32
    %c0_i32_0 = arith.constant 0 : i32
    %c0_i32_1 = arith.constant 0 : i32
    return %c0_i32, %c0_i32_0 : i32, i32
  }
  func.func @transform_2(%arg0: i32) -> (i32, i32) {
    %c0_i32 = arith.constant 0 : i32
    %c0_i32_0 = arith.constant 0 : i32
    %c0_i32_1 = arith.constant 0 : i32
    return %c0_i32, %c0_i32_0 : i32, i32
  }
  func.func @transform_3(%arg0: i32) -> (i32, i32, i32) {
    %c0_i32 = arith.constant 0 : i32
    %c0_i32_0 = arith.constant 0 : i32
    %c0_i32_1 = arith.constant 0 : i32
    return %arg0, %c0_i32, %c0_i32_0 : i32, i32, i32
  }
}

module attributes {stable_mosaic.version = 11 : i64} {
  func.func @block_kernel(%arg0: i32, %arg1: memref<1x16x128xf32, #tpu.memory_space<vmem>>, %arg2: memref<128x384xf32, #tpu.memory_space<vmem>>, %arg3: memref<4x32x128xf32, #tpu.memory_space<vmem>>, %arg4: memref<1x128xf32, #tpu.memory_space<vmem>>, %arg5: memref<128x256xf32, #tpu.memory_space<vmem>>, %arg6: memref<1x256xf32, #tpu.memory_space<vmem>>, %arg7: memref<256x128xf32, #tpu.memory_space<vmem>>, %arg8: memref<1x128xf32, #tpu.memory_space<vmem>>, %arg9: memref<1x16x128xf32, #tpu.memory_space<vmem>>) attributes {dimension_semantics = [#tpu.dimension_semantics<parallel>], iteration_bounds = array<i64: 2>, scalar_prefetch = 0 : i64, scratch_operands = 0 : i64, tpu.core_type = #tpu.core_type<tc>, window_params = [{transform_indices = @transform_0, window_bounds = array<i64: 1, 16, 128>}, {pipeline_mode = #tpu.pipeline_mode<synchronous>, transform_indices = @transform_1, window_bounds = array<i64: 128, 384>}, {pipeline_mode = #tpu.pipeline_mode<synchronous>, transform_indices = @transform_2, window_bounds = array<i64: 4, 32, 128>}, {pipeline_mode = #tpu.pipeline_mode<synchronous>, transform_indices = @transform_3, window_bounds = array<i64: 1, 128>}, {pipeline_mode = #tpu.pipeline_mode<synchronous>, transform_indices = @transform_4, window_bounds = array<i64: 128, 256>}, {pipeline_mode = #tpu.pipeline_mode<synchronous>, transform_indices = @transform_5, window_bounds = array<i64: 1, 256>}, {pipeline_mode = #tpu.pipeline_mode<synchronous>, transform_indices = @transform_6, window_bounds = array<i64: 256, 128>}, {pipeline_mode = #tpu.pipeline_mode<synchronous>, transform_indices = @transform_7, window_bounds = array<i64: 1, 128>}, {transform_indices = @transform_8, window_bounds = array<i64: 1, 16, 128>}]} {
    %c0 = arith.constant 0 : index
    %c0_0 = arith.constant 0 : index
    %c0_1 = arith.constant 0 : index
    %0 = vector.load %arg1[%c0, %c0_0, %c0_1] : memref<1x16x128xf32, #tpu.memory_space<vmem>>, vector<1x16x128xf32>
    %1 = vector.shape_cast %0 : vector<1x16x128xf32> to vector<16x128xf32>
    %c0_2 = arith.constant 0 : index
    %c0_3 = arith.constant 0 : index
    %2 = vector.load %arg2[%c0_2, %c0_3] : memref<128x384xf32, #tpu.memory_space<vmem>>, vector<128x384xf32>
    %cst = arith.constant dense<0.000000e+00> : vector<16x384xf32>
    %3 = tpu.matmul %1, %2, %cst {dimension_numbers = #tpu.dot_dimension_numbers<[1], [0], [0], [1], [0, 0, 1, 1], [], []>} : vector<16x128xf32>, vector<128x384xf32>, vector<16x384xf32> -> vector<16x384xf32>
    %4 = tpu.transpose %3, [1, 0] : vector<16x384xf32> -> vector<384x16xf32>
    %5 = vector.shape_cast %4 : vector<384x16xf32> to vector<12x32x16xf32>
    %6 = vector.extract_strided_slice %5 {offsets = [0, 0, 0], sizes = [4, 32, 16], strides = [1, 1, 1]} : vector<12x32x16xf32> to vector<4x32x16xf32>
    %7 = vector.extract_strided_slice %5 {offsets = [4, 0, 0], sizes = [4, 32, 16], strides = [1, 1, 1]} : vector<12x32x16xf32> to vector<4x32x16xf32>
    %8 = vector.extract_strided_slice %5 {offsets = [8, 0, 0], sizes = [4, 32, 16], strides = [1, 1, 1]} : vector<12x32x16xf32> to vector<4x32x16xf32>
    %9 = tpu.transpose %6, [0, 2, 1] : vector<4x32x16xf32> -> vector<4x16x32xf32>
    %cst_4 = arith.constant 0.176776692 : f32
    %10 = vector.broadcast %cst_4 : f32 to vector<4x16x32xf32>
    %11 = arith.mulf %9, %10 : vector<4x16x32xf32>
    %12 = tpu.transpose %7, [0, 2, 1] : vector<4x32x16xf32> -> vector<4x16x32xf32>
    "tpu.trace_start"() <{level = 10 : i32, message = "hne,hme->hnm"}> : () -> ()
    %cst_5 = arith.constant dense<0.000000e+00> : vector<4x16x16xf32>
    %13 = tpu.matmul %11, %12, %cst_5 {dimension_numbers = #tpu.dot_dimension_numbers<[2], [2], [1], [1], [0, 0, 0, 1, 1, 1], [0], [0]>} : vector<4x16x32xf32>, vector<4x16x32xf32>, vector<4x16x16xf32> -> vector<4x16x16xf32>
    "tpu.trace_stop"() : () -> ()
    %cst_6 = arith.constant dense<0xFF800000> : vector<4x16xf32>
    %14 = vector.multi_reduction <maximumf>, %13, %cst_6 [2] : vector<4x16x16xf32> to vector<4x16xf32>
    %15 = vector.shape_cast %14 : vector<4x16xf32> to vector<4x16x1xf32>
    %16 = vector.broadcast %15 : vector<4x16x1xf32> to vector<4x16x16xf32>
    %17 = arith.subf %13, %16 : vector<4x16x16xf32>
    %18 = math.exp %17 : vector<4x16x16xf32>
    %cst_7 = arith.constant dense<0.000000e+00> : vector<4x16xf32>
    %19 = vector.multi_reduction <add>, %18, %cst_7 [2] : vector<4x16x16xf32> to vector<4x16xf32>
    %20 = vector.shape_cast %19 : vector<4x16xf32> to vector<4x16x1xf32>
    %21 = vector.broadcast %20 : vector<4x16x1xf32> to vector<4x16x16xf32>
    %22 = arith.divf %18, %21 : vector<4x16x16xf32>
    "tpu.trace_start"() <{level = 10 : i32, message = "hnm,hem->hne"}> : () -> ()
    %cst_8 = arith.constant dense<0.000000e+00> : vector<4x16x32xf32>
    %23 = tpu.matmul %22, %8, %cst_8 {dimension_numbers = #tpu.dot_dimension_numbers<[2], [2], [1], [1], [0, 0, 0, 1, 1, 1], [0], [0]>} : vector<4x16x16xf32>, vector<4x32x16xf32>, vector<4x16x32xf32> -> vector<4x16x32xf32>
    "tpu.trace_stop"() : () -> ()
    %c0_9 = arith.constant 0 : index
    %c0_10 = arith.constant 0 : index
    %c0_11 = arith.constant 0 : index
    %24 = vector.load %arg3[%c0_9, %c0_10, %c0_11] : memref<4x32x128xf32, #tpu.memory_space<vmem>>, vector<4x32x128xf32>
    "tpu.trace_start"() <{level = 10 : i32, message = "hne,hed->hnd"}> : () -> ()
    %cst_12 = arith.constant dense<0.000000e+00> : vector<4x16x128xf32>
    %25 = tpu.matmul %23, %24, %cst_12 {dimension_numbers = #tpu.dot_dimension_numbers<[2], [1], [1], [2], [0, 0, 0, 1, 1, 2], [0], [0]>} : vector<4x16x32xf32>, vector<4x32x128xf32>, vector<4x16x128xf32> -> vector<4x16x128xf32>
    "tpu.trace_stop"() : () -> ()
    %cst_13 = arith.constant dense<0.000000e+00> : vector<16x128xf32>
    %26 = vector.multi_reduction <add>, %25, %cst_13 [0] : vector<4x16x128xf32> to vector<16x128xf32>
    %c0_14 = arith.constant 0 : index
    %c0_15 = arith.constant 0 : index
    %27 = vector.load %arg4[%c0_14, %c0_15] : memref<1x128xf32, #tpu.memory_space<vmem>>, vector<1x128xf32>
    %28 = vector.broadcast %27 : vector<1x128xf32> to vector<16x128xf32>
    %29 = arith.addf %26, %28 : vector<16x128xf32>
    %30 = arith.addf %29, %1 : vector<16x128xf32>
    %c0_16 = arith.constant 0 : index
    %c0_17 = arith.constant 0 : index
    %31 = vector.load %arg5[%c0_16, %c0_17] : memref<128x256xf32, #tpu.memory_space<vmem>>, vector<128x256xf32>
    %cst_18 = arith.constant dense<0.000000e+00> : vector<16x256xf32>
    %32 = tpu.matmul %30, %31, %cst_18 {dimension_numbers = #tpu.dot_dimension_numbers<[1], [0], [0], [1], [0, 0, 1, 1], [], []>} : vector<16x128xf32>, vector<128x256xf32>, vector<16x256xf32> -> vector<16x256xf32>
    %c0_19 = arith.constant 0 : index
    %c0_20 = arith.constant 0 : index
    %33 = vector.load %arg6[%c0_19, %c0_20] : memref<1x256xf32, #tpu.memory_space<vmem>>, vector<1x256xf32>
    %34 = vector.broadcast %33 : vector<1x256xf32> to vector<16x256xf32>
    %35 = arith.addf %32, %34 : vector<16x256xf32>
    %cst_21 = arith.constant 5.000000e-01 : f32
    %36 = vector.broadcast %cst_21 : f32 to vector<16x256xf32>
    %37 = arith.mulf %36, %35 : vector<16x256xf32>
    %cst_22 = arith.constant 0.707106769 : f32
    %38 = vector.broadcast %cst_22 : f32 to vector<16x256xf32>
    %39 = arith.mulf %35, %38 : vector<16x256xf32>
    %40 = math.erf %39 : vector<16x256xf32>
    %cst_23 = arith.constant 1.000000e+00 : f32
    %41 = vector.broadcast %cst_23 : f32 to vector<16x256xf32>
    %42 = arith.addf %41, %40 : vector<16x256xf32>
    %43 = arith.mulf %37, %42 : vector<16x256xf32>
    %c0_24 = arith.constant 0 : index
    %c0_25 = arith.constant 0 : index
    %44 = vector.load %arg7[%c0_24, %c0_25] : memref<256x128xf32, #tpu.memory_space<vmem>>, vector<256x128xf32>
    %cst_26 = arith.constant dense<0.000000e+00> : vector<16x128xf32>
    %45 = tpu.matmul %43, %44, %cst_26 {dimension_numbers = #tpu.dot_dimension_numbers<[1], [0], [0], [1], [0, 0, 1, 1], [], []>} : vector<16x256xf32>, vector<256x128xf32>, vector<16x128xf32> -> vector<16x128xf32>
    %c0_27 = arith.constant 0 : index
    %c0_28 = arith.constant 0 : index
    %46 = vector.load %arg8[%c0_27, %c0_28] : memref<1x128xf32, #tpu.memory_space<vmem>>, vector<1x128xf32>
    %47 = vector.broadcast %46 : vector<1x128xf32> to vector<16x128xf32>
    %48 = arith.addf %45, %47 : vector<16x128xf32>
    %49 = arith.addf %48, %30 : vector<16x128xf32>
    %c0_29 = arith.constant 0 : index
    %c0_30 = arith.constant 0 : index
    %c0_31 = arith.constant 0 : index
    %50 = vector.load %arg9[%c0_29, %c0_30, %c0_31] : memref<1x16x128xf32, #tpu.memory_space<vmem>>, vector<1x16x128xf32>
    %51 = vector.shape_cast %50 : vector<1x16x128xf32> to vector<16x128xf32>
    %52 = vector.shape_cast %49 : vector<16x128xf32> to vector<1x16x128xf32>
    tpu.vector_store %arg9[%c0_29, %c0_30, %c0_31], %52 {strides = array<i32>} : memref<1x16x128xf32, #tpu.memory_space<vmem>>, vector<1x16x128xf32>,
    return
  }
  func.func @transform_0(%arg0: i32) -> (i32, i32, i32) {
    %c0_i32 = arith.constant 0 : i32
    %c0_i32_0 = arith.constant 0 : i32
    %c0_i32_1 = arith.constant 0 : i32
    return %arg0, %c0_i32, %c0_i32_0 : i32, i32, i32
  }
  func.func @transform_1(%arg0: i32) -> (i32, i32) {
    %c0_i32 = arith.constant 0 : i32
    %c0_i32_0 = arith.constant 0 : i32
    %c0_i32_1 = arith.constant 0 : i32
    return %c0_i32, %c0_i32_0 : i32, i32
  }
  func.func @transform_2(%arg0: i32) -> (i32, i32, i32) {
    %c0_i32 = arith.constant 0 : i32
    %c0_i32_0 = arith.constant 0 : i32
    %c0_i32_1 = arith.constant 0 : i32
    %c0_i32_2 = arith.constant 0 : i32
    return %c0_i32, %c0_i32_0, %c0_i32_1 : i32, i32, i32
  }
  func.func @transform_3(%arg0: i32) -> (i32, i32) {
    %c0_i32 = arith.constant 0 : i32
    %c0_i32_0 = arith.constant 0 : i32
    %c0_i32_1 = arith.constant 0 : i32
    return %c0_i32, %c0_i32_0 : i32, i32
  }
  func.func @transform_4(%arg0: i32) -> (i32, i32) {
    %c0_i32 = arith.constant 0 : i32
    %c0_i32_0 = arith.constant 0 : i32
    %c0_i32_1 = arith.constant 0 : i32
    return %c0_i32, %c0_i32_0 : i32, i32
  }
  func.func @transform_5(%arg0: i32) -> (i32, i32) {
    %c0_i32 = arith.constant 0 : i32
    %c0_i32_0 = arith.constant 0 : i32
    %c0_i32_1 = arith.constant 0 : i32
    return %c0_i32, %c0_i32_0 : i32, i32
  }
  func.func @transform_6(%arg0: i32) -> (i32, i32) {
    %c0_i32 = arith.constant 0 : i32
    %c0_i32_0 = arith.constant 0 : i32
    %c0_i32_1 = arith.constant 0 : i32
    return %c0_i32, %c0_i32_0 : i32, i32
  }
  func.func @transform_7(%arg0: i32) -> (i32, i32) {
    %c0_i32 = arith.constant 0 : i32
    %c0_i32_0 = arith.constant 0 : i32
    %c0_i32_1 = arith.constant 0 : i32
    return %c0_i32, %c0_i32_0 : i32, i32
  }
  func.func @transform_8(%arg0: i32) -> (i32, i32, i32) {
    %c0_i32 = arith.constant 0 : i32
    %c0_i32_0 = arith.constant 0 : i32
    %c0_i32_1 = arith.constant 0 : i32
    return %arg0, %c0_i32, %c0_i32_0 : i32, i32, i32
  }
}

module attributes {stable_mosaic.version = 11 : i64} {
  func.func @_pool_head_kernel(%arg0: i32, %arg1: memref<2x16x128xf32, #tpu.memory_space<vmem>>, %arg2: memref<1x128xf32, #tpu.memory_space<vmem>>, %arg3: memref<1x1xf32, #tpu.memory_space<vmem>>, %arg4: memref<2x1xf32, #tpu.memory_space<vmem>>) attributes {dimension_semantics = [#tpu.dimension_semantics<arbitrary>], iteration_bounds = array<i64: 1>, scalar_prefetch = 0 : i64, scratch_operands = 0 : i64, tpu.core_type = #tpu.core_type<tc>, window_params = [{pipeline_mode = #tpu.pipeline_mode<synchronous>, transform_indices = @transform_0, window_bounds = array<i64: 2, 16, 128>}, {pipeline_mode = #tpu.pipeline_mode<synchronous>, transform_indices = @transform_1, window_bounds = array<i64: 1, 128>}, {pipeline_mode = #tpu.pipeline_mode<synchronous>, transform_indices = @transform_2, window_bounds = array<i64: 1, 1>}, {pipeline_mode = #tpu.pipeline_mode<synchronous>, transform_indices = @transform_3, window_bounds = array<i64: 2, 1>}]} {
    %c0 = arith.constant 0 : index
    %c0_0 = arith.constant 0 : index
    %c0_1 = arith.constant 0 : index
    %0 = vector.load %arg1[%c0, %c0_0, %c0_1] : memref<2x16x128xf32, #tpu.memory_space<vmem>>, vector<2x16x128xf32>
    %cst = arith.constant dense<0.000000e+00> : vector<2x128xf32>
    %1 = vector.multi_reduction <add>, %0, %cst [1] : vector<2x16x128xf32> to vector<2x128xf32>
    %cst_2 = arith.constant 6.250000e-02 : f32
    %2 = vector.broadcast %cst_2 : f32 to vector<2x128xf32>
    %3 = arith.mulf %1, %2 : vector<2x128xf32>
    %c0_3 = arith.constant 0 : index
    %c0_4 = arith.constant 0 : index
    %4 = vector.load %arg2[%c0_3, %c0_4] : memref<1x128xf32, #tpu.memory_space<vmem>>, vector<1x128xf32>
    %5 = vector.broadcast %4 : vector<1x128xf32> to vector<2x128xf32>
    %6 = arith.mulf %3, %5 : vector<2x128xf32>
    %cst_5 = arith.constant dense<0.000000e+00> : vector<2xf32>
    %7 = vector.multi_reduction <add>, %6, %cst_5 [1] : vector<2x128xf32> to vector<2xf32>
    %8 = vector.shape_cast %7 : vector<2xf32> to vector<2x1xf32>
    %c0_6 = arith.constant 0 : index
    %c0_7 = arith.constant 0 : index
    %9 = vector.load %arg3[%c0_6, %c0_7] : memref<1x1xf32, #tpu.memory_space<vmem>>, vector<1x1xf32>
    %10 = vector.broadcast %9 : vector<1x1xf32> to vector<2x1xf32>
    %11 = arith.addf %8, %10 : vector<2x1xf32>
    %c0_8 = arith.constant 0 : index
    %c0_9 = arith.constant 0 : index
    %12 = vector.load %arg4[%c0_8, %c0_9] : memref<2x1xf32, #tpu.memory_space<vmem>>, vector<2x1xf32>
    tpu.vector_store %arg4[%c0_8, %c0_9], %11 {strides = array<i32>} : memref<2x1xf32, #tpu.memory_space<vmem>>, vector<2x1xf32>,
    return
  }
  func.func @transform_0(%arg0: i32) -> (i32, i32, i32) {
    %c0_i32 = arith.constant 0 : i32
    %c0_i32_0 = arith.constant 0 : i32
    %c0_i32_1 = arith.constant 0 : i32
    %c0_i32_2 = arith.constant 0 : i32
    return %c0_i32, %c0_i32_0, %c0_i32_1 : i32, i32, i32
  }
  func.func @transform_1(%arg0: i32) -> (i32, i32) {
    %c0_i32 = arith.constant 0 : i32
    %c0_i32_0 = arith.constant 0 : i32
    %c0_i32_1 = arith.constant 0 : i32
    return %c0_i32, %c0_i32_0 : i32, i32
  }
  func.func @transform_2(%arg0: i32) -> (i32, i32) {
    %c0_i32 = arith.constant 0 : i32
    %c0_i32_0 = arith.constant 0 : i32
    %c0_i32_1 = arith.constant 0 : i32
    return %c0_i32, %c0_i32_0 : i32, i32
  }
  func.func @transform_3(%arg0: i32) -> (i32, i32) {
    %c0_i32 = arith.constant 0 : i32
    %c0_i32_0 = arith.constant 0 : i32
    %c0_i32_1 = arith.constant 0 : i32
    return %c0_i32, %c0_i32_0 : i32, i32
  }
}

</mosaic_0001>

<llo_original>
// kernel: ppp_forward.6
$region0: #{ppp_forward.6}
  #allocation0 [shape = 'u32[]', space=smem, size = 0x4, offset = 0x4, fixed_abs, tag = 'smem constant byte address 0x4 - core index']
  #allocation1 [shape = 'u32[72,128]{1,0:T(1,128)}', space=vmem, size = 0x9000, scoped, tag = 'internal scratch']
  %s0 = inlined_call_operand.hbm [shape: f32[2,8,512], index: 0, kind: input, shape index: {}]
  %s1 = inlined_call_operand.hbm [shape: f32[512,128], index: 1, kind: input, shape index: {}]
  %s2 = inlined_call_operand.vmem [shape: f32[1,128], index: 2, kind: input, shape index: {}]
  %s3 = inlined_call_operand.vmem [shape: f32[2,8,128], index: 3, kind: output, shape index: {}]
  %s4 = sld [smem:[#allocation0]]
  $region53: #{ppp_forward.6} parent=0
    _
  %s6 = ssub.s32 1, %s4
  %s7 = scalar_select 0, %s6, %s4
  $region1: #{ppp_forward.6} parent=0
    #allocation2 [shape = 'u8[32768]{0}', space=vmem, size = 0x8000, scoped, tag = 'input window, operand 0']
    #allocation3 [shape = 's32[2]{0}', space=sflag, size = 0x8, scoped, tag = 'scoped memory for ppp_forward.6']
    #allocation4 [shape = 'u8[262144]{0}', space=vmem, size = 0x40000, scoped, tag = 'input window, operand 1, single buffered']
    #allocation5 [shape = 's32[1]{0}', space=sflag, size = 0x4, scoped, tag = 'scoped memory for ppp_forward.6']
    %8 = vsyncpa [#allocation3], 0
    %s9 = scalar_lea.sflag [#allocation3], 1
    %10 = vsyncpa %s9, 0
    %11 = vsyncpa [#allocation5], 0
    loop: start=0, step=1, limit=4
    $region2: #{ppp_forward.6} parent=1 // loop_pre_header
      _
    $region3: #{ppp_forward.6} parent=1 // loop_header
      %s13 = sphi 0, %s17
      %p14 = scmp.ge.s32.totalorder %s13, 4
      %s23 = sphi 0, %s25
      %s26 = sphi 0, %s23
      %s27 = sphi 0, %s26
      %s43 = sphi 0, %s27
      %s47 = sphi 0, %s47
      %s49 = sphi 0, %s47
      %s50 = sphi 0, %s49
      %s64 = sphi 0, %s50
      %s68 = sphi 0, %s68
      %s70 = sphi 0, %s68
      %s71 = sphi 0, %s70
      %s85 = sphi 0, %s71
      %s91 = sphi 0, %s93
      %s94 = sphi 0, %s91
      %s95 = sphi 0, %s94
      %s111 = sphi 0, %s95
    $region4: #{ppp_forward.6} parent=1 // loop_header_branch
      %16 = sbr.rel (%p14) target = $region8
    $region5: #{ppp_forward.6} parent=1 // loop_body
      %s18 = ssub.s32 %s13, 1
      %s19 = ssub.s32 %s13, 2
      %s20 = sadd.s32 %s13, 1
      %s21 = ssub.s32 %s13, %s20
      %p22 = scmp.eq.s32.totalorder %s21, 0
      %s24 = sadd.s32 %s23, 1
      %s25 = scalar_select %p22, %s23, %s24
      %p28 = pneg %p22
      %p29 = scmp.eq.s32.totalorder %s13, 1
      %p30 = por %p28, %p29
      %p31 = scmp.ne.s32.totalorder %s23, %s26
      %p32 = scmp.eq.s32.totalorder %s13, 0
      %p33 = por %p31, %p32
      %p34 = scmp.ne.s32.totalorder %s23, %s26
      %p35 = scmp.eq.s32.totalorder %s18, 1
      %p36 = por %p34, %p35
      %p37 = scmp.ne.s32.totalorder %s26, %s27
      %p38 = scmp.eq.s32.totalorder %s18, 0
      %p39 = por %p37, %p38
      %p40 = scmp.ne.s32.totalorder %s26, %s27
      %p41 = scmp.eq.s32.totalorder %s19, 1
      %p42 = por %p40, %p41
      %p44 = scmp.ne.s32.totalorder %s27, %s43
      %p45 = scmp.eq.s32.totalorder %s19, 0
      %p46 = por %p44, %p45
      %s48 = sadd.s32 %s47, 1
      %p51 = scmp.eq.s32.totalorder %s13, 1
      %p52 = scmp.ne.s32.totalorder %s47, %s49
      %p53 = scmp.eq.s32.totalorder %s13, 0
      %p54 = por %p52, %p53
      %p55 = scmp.ne.s32.totalorder %s47, %s49
      %p56 = scmp.eq.s32.totalorder %s18, 1
      %p57 = por %p55, %p56
      %p58 = scmp.ne.s32.totalorder %s49, %s50
      %p59 = scmp.eq.s32.totalorder %s18, 0
      %p60 = por %p58, %p59
      %p61 = scmp.ne.s32.totalorder %s49, %s50
      %p62 = scmp.eq.s32.totalorder %s19, 1
      %p63 = por %p61, %p62
      %p65 = scmp.ne.s32.totalorder %s50, %s64
      %p66 = scmp.eq.s32.totalorder %s19, 0
      %p67 = por %p65, %p66
      %s69 = sadd.s32 %s68, 1
      %p72 = scmp.eq.s32.totalorder %s13, 1
      %p73 = scmp.ne.s32.totalorder %s68, %s70
      %p74 = scmp.eq.s32.totalorder %s13, 0
      %p75 = por %p73, %p74
      %p76 = scmp.ne.s32.totalorder %s68, %s70
      %p77 = scmp.eq.s32.totalorder %s18, 1
      %p78 = por %p76, %p77
      %p79 = scmp.ne.s32.totalorder %s70, %s71
      %p80 = scmp.eq.s32.totalorder %s18, 0
      %p81 = por %p79, %p80
      %p82 = scmp.ne.s32.totalorder %s70, %s71
      %p83 = scmp.eq.s32.totalorder %s19, 1
      %p84 = por %p82, %p83
      %p86 = scmp.ne.s32.totalorder %s71, %s85
      %p87 = scmp.eq.s32.totalorder %s19, 0
      %p88 = por %p86, %p87
      %s89 = ssub.s32 %s13, %s20
      %p90 = scmp.eq.s32.totalorder %s89, 0
      %s92 = sadd.s32 %s91, 1
      %s93 = scalar_select %p90, %s91, %s92
      %p96 = pneg %p90
      %p97 = scmp.eq.s32.totalorder %s13, 1
      %p98 = por %p96, %p97
      %p99 = scmp.ne.s32.totalorder %s91, %s94
      %p100 = scmp.eq.s32.totalorder %s13, 0
      %p101 = por %p99, %p100
      %p102 = scmp.ne.s32.totalorder %s91, %s94
      %p103 = scmp.eq.s32.totalorder %s18, 1
      %p104 = por %p102, %p103
      %p105 = scmp.ne.s32.totalorder %s94, %s95
      %p106 = scmp.eq.s32.totalorder %s18, 0
      %p107 = por %p105, %p106
      %p108 = scmp.ne.s32.totalorder %s94, %s95
      %p109 = scmp.eq.s32.totalorder %s19, 1
      %p110 = por %p108, %p109
      %p112 = scmp.ne.s32.totalorder %s95, %s111
      %p113 = scmp.eq.s32.totalorder %s19, 0
      %p114 = por %p112, %p113
      %p115 = scmp.le.s32.totalorder 1, %s13
      %p116 = scmp.lt.s32.totalorder %s13, 3
      %p117 = pnand %p115, %p116
      %p118 = pneg %p117
      // Predicated region
      $region9: #{ppp_forward.6} parent=5 // pred_check
        _
      $region10: #{ppp_forward.6} parent=5 // pred_check_branch
        %120 = sbr.rel (%p117) target = $region12
      $region11: #{ppp_forward.6} parent=5 // pred_region
        %s121 = ssub.s32 %s13, 1
        // Predicated region
        $region13: #{ppp_forward.6} parent=11 // pred_check
          %p122 = pneg %p60
        $region14: #{ppp_forward.6} parent=11 // pred_check_branch
          %124 = sbr.rel (%p122) target = $region16
        $region15: #{ppp_forward.6} parent=11 // pred_region
          %126 = vsyncadd [#allocation5], 0
          %s127 = sshll.u32 %s1, 4
          %s128 = int_to_ptr.hbm [resolvable:$true] %s127
          %s129 = sshll.u32 [#allocation4], 4
          %s130 = int_to_ptr.vmem [resolvable:$true] %s129
          %135 = dma.hbm_to_vmem [thread:$0]  %s128, 8192, %s130, [#allocation5], 128, 128, 8
        $region16: #{ppp_forward.6} parent=11 // pred_fallthru
          _
        // Predicated region
        $region17: #{ppp_forward.6} parent=11 // pred_check
          %p136 = pneg %p81
        $region18: #{ppp_forward.6} parent=11 // pred_check_branch
          %138 = sbr.rel (%p136) target = $region20
        $region19: #{ppp_forward.6} parent=11 // pred_region
          _
        $region20: #{ppp_forward.6} parent=11 // pred_fallthru
          _
      $region12: #{ppp_forward.6} parent=5 // pred_fallthru
        _
      %p139 = scmp.lt.s32.totalorder %s13, 2
      // Predicated region
      $region21: #{ppp_forward.6} parent=5 // pred_check
        %p140 = pneg %p139
      $region22: #{ppp_forward.6} parent=5 // pred_check_branch
        %142 = sbr.rel (%p140) target = $region24
      $region23: #{ppp_forward.6} parent=5 // pred_region
        // Predicated region
        $region25: #{ppp_forward.6} parent=23 // pred_check
          %p143 = pneg %p33
        $region26: #{ppp_forward.6} parent=23 // pred_check_branch
          %145 = sbr.rel (%p143) target = $region28
        $region27: #{ppp_forward.6} parent=23 // pred_region
          %s146 = sand.u32 %s23, 1
          %s147 = scalar_lea.sflag [#allocation3], %s146
          %s148 = sand.u32 %s23, 1
          %s149 = smul.addr %s148, 32
          %s150 = scalar_lea.vmem [#allocation2], %s149
          %152 = vsyncadd %s147, 0
          %s153 = smul.addr %s13, 4
          %s154 = smul.addr %s153, 8
          %s155 = scalar_lea.hbm %s0, %s154
          %s157 = sshll.u32 %s155, 4
          %s158 = int_to_ptr.hbm [resolvable:$true] %s157
          %s159 = sshll.u32 %s150, 4
          %s160 = int_to_ptr.vmem [resolvable:$true] %s159
          %162 = dma.hbm_to_vmem [thread:$0]  %s158, 512, %s160, %s147
        $region28: #{ppp_forward.6} parent=23 // pred_fallthru
          _
      $region24: #{ppp_forward.6} parent=5 // pred_fallthru
        _
      %p163 = scmp.le.s32.totalorder 1, %s13
      %p164 = scmp.lt.s32.totalorder %s13, 3
      %p165 = pnand %p163, %p164
      %p166 = pneg %p165
      // Predicated region
      $region29: #{ppp_forward.6} parent=5 // pred_check
        _
      $region30: #{ppp_forward.6} parent=5 // pred_check_branch
        %168 = sbr.rel (%p165) target = $region32
      $region31: #{ppp_forward.6} parent=5 // pred_region
        %s169 = ssub.s32 %s13, 1
        %s170 = sand.u32 %s26, 1
        %s171 = scalar_lea.sflag [#allocation3], %s170
        %s172 = sand.u32 %s26, 1
        %s173 = smul.addr %s172, 32
        %s174 = scalar_lea.vmem [#allocation2], %s173
        // Predicated region
        $region33: #{ppp_forward.6} parent=31 // pred_check
          %p175 = pneg %p39
        $region34: #{ppp_forward.6} parent=31 // pred_check_branch
          %177 = sbr.rel (%p175) target = $region36
        $region35: #{ppp_forward.6} parent=31 // pred_region
          %179 = dma.done %s171, 512
        $region36: #{ppp_forward.6} parent=31 // pred_fallthru
          _
        // Predicated region
        $region37: #{ppp_forward.6} parent=31 // pred_check
          %p180 = pneg %p60
        $region38: #{ppp_forward.6} parent=31 // pred_check_branch
          %182 = sbr.rel (%p180) target = $region40
        $region39: #{ppp_forward.6} parent=31 // pred_region
          %184 = dma.done [#allocation5], 8192
        $region40: #{ppp_forward.6} parent=31 // pred_fallthru
          _
        %s185 = sand.u32 %s26, 1
        %s186 = scalar_lea.sflag [#allocation3], %s185
        %s187 = sand.u32 %s26, 1
        %s188 = smul.addr %s187, 32
        %s189 = scalar_lea.vmem [#allocation2], %s188
        %p190 = pneg %p39
        %p191 = pneg %p36
        %p192 = pneg %p60
        %p193 = pneg %p57
        %p194 = pneg %p81
        %p195 = pneg %p78
        %p196 = pneg %p107
        %p197 = pneg %p104
        %p198 = scmp.lt.s32.totalorder %s18, 1
        %s199 = scalar_select %p198, %s18, 1
        %s200 = smul.addr %s199, 8
        %s201 = scalar_lea.vmem %s3, %s200
        %p202 = scmp.lt.s32.totalorder %s18, 1
        %s203 = scalar_select %p202, %s18, 1
        %s204 = smul.addr %s203, 8
        %s205 = scalar_lea.vmem %s3, %s204
        %v206 = vld [vmem:[%s174] sm:$0xff]
        %v207 = vld [vmem:[%s174 + $0x8] sm:$0xff]
        %v208 = vld [vmem:[%s174 + $0x10] sm:$0xff]
        %v209 = vld [vmem:[%s174 + $0x18] sm:$0xff]
        %v210 = vld [vmem:[#allocation4] sm:$0xff]
        %v211 = vld [vmem:[#allocation4 + $0x8] sm:$0xff]
        %v212 = vld [vmem:[#allocation4 + $0x10] sm:$0xff]
        %v213 = vld [vmem:[#allocation4 + $0x18] sm:$0xff]
        %v214 = vld [vmem:[#allocation4 + $0x20] sm:$0xff]
        %v215 = vld [vmem:[#allocation4 + $0x28] sm:$0xff]
        %v216 = vld [vmem:[#allocation4 + $0x30] sm:$0xff]
        %v217 = vld [vmem:[#allocation4 + $0x38] sm:$0xff]
        %v218 = vld [vmem:[#allocation4 + $0x40] sm:$0xff]
        %v219 = vld [vmem:[#allocation4 + $0x48] sm:$0xff]
        %v220 = vld [vmem:[#allocation4 + $0x50] sm:$0xff]
        %v221 = vld [vmem:[#allocation4 + $0x58] sm:$0xff]
        %v222 = vld [vmem:[#allocation4 + $0x60] sm:$0xff]
        %v223 = vld [vmem:[#allocation4 + $0x68] sm:$0xff]
        %v224 = vld [vmem:[#allocation4 + $0x70] sm:$0xff]
        %v225 = vld [vmem:[#allocation4 + $0x78] sm:$0xff]
        %v226 = vld [vmem:[#allocation4 + $0x80] sm:$0xff]
        %v227 = vld [vmem:[#allocation4 + $0x88] sm:$0xff]
        %v228 = vld [vmem:[#allocation4 + $0x90] sm:$0xff]
        %v229 = vld [vmem:[#allocation4 + $0x98] sm:$0xff]
        %v230 = vld [vmem:[#allocation4 + $0xa0] sm:$0xff]
        %v231 = vld [vmem:[#allocation4 + $0xa8] sm:$0xff]
        %v232 = vld [vmem:[#allocation4 + $0xb0] sm:$0xff]
        %v233 = vld [vmem:[#allocation4 + $0xb8] sm:$0xff]
        %v234 = vld [vmem:[#allocation4 + $0xc0] sm:$0xff]
        %v235 = vld [vmem:[#allocation4 + $0xc8] sm:$0xff]
        %v236 = vld [vmem:[#allocation4 + $0xd0] sm:$0xff]
        %v237 = vld [vmem:[#allocation4 + $0xd8] sm:$0xff]
        %v238 = vld [vmem:[#allocation4 + $0xe0] sm:$0xff]
        %v239 = vld [vmem:[#allocation4 + $0xe8] sm:$0xff]
        %v240 = vld [vmem:[#allocation4 + $0xf0] sm:$0xff]
        %v241 = vld [vmem:[#allocation4 + $0xf8] sm:$0xff]
        %v242 = vld [vmem:[#allocation4 + $0x100] sm:$0xff]
        %v243 = vld [vmem:[#allocation4 + $0x108] sm:$0xff]
        %v244 = vld [vmem:[#allocation4 + $0x110] sm:$0xff]
        %v245 = vld [vmem:[#allocation4 + $0x118] sm:$0xff]
        %v246 = vld [vmem:[#allocation4 + $0x120] sm:$0xff]
        %v247 = vld [vmem:[#allocation4 + $0x128] sm:$0xff]
        %v248 = vld [vmem:[#allocation4 + $0x130] sm:$0xff]
        %v249 = vld [vmem:[#allocation4 + $0x138] sm:$0xff]
        %v250 = vld [vmem:[#allocation4 + $0x140] sm:$0xff]
        %v251 = vld [vmem:[#allocation4 + $0x148] sm:$0xff]
        %v252 = vld [vmem:[#allocation4 + $0x150] sm:$0xff]
        %v253 = vld [vmem:[#allocation4 + $0x158] sm:$0xff]
        %v254 = vld [vmem:[#allocation4 + $0x160] sm:$0xff]
        %v255 = vld [vmem:[#allocation4 + $0x168] sm:$0xff]
        %v256 = vld [vmem:[#allocation4 + $0x170] sm:$0xff]
        %v257 = vld [vmem:[#allocation4 + $0x178] sm:$0xff]
        %v258 = vld [vmem:[#allocation4 + $0x180] sm:$0xff]
        %v259 = vld [vmem:[#allocation4 + $0x188] sm:$0xff]
        %v260 = vld [vmem:[#allocation4 + $0x190] sm:$0xff]
        %v261 = vld [vmem:[#allocation4 + $0x198] sm:$0xff]
        %v262 = vld [vmem:[#allocation4 + $0x1a0] sm:$0xff]
        %v263 = vld [vmem:[#allocation4 + $0x1a8] sm:$0xff]
        %v264 = vld [vmem:[#allocation4 + $0x1b0] sm:$0xff]
        %v265 = vld [vmem:[#allocation4 + $0x1b8] sm:$0xff]
        %v266 = vld [vmem:[#allocation4 + $0x1c0] sm:$0xff]
        %v267 = vld [vmem:[#allocation4 + $0x1c8] sm:$0xff]
        %v268 = vld [vmem:[#allocation4 + $0x1d0] sm:$0xff]
        %v269 = vld [vmem:[#allocation4 + $0x1d8] sm:$0xff]
        %v270 = vld [vmem:[#allocation4 + $0x1e0] sm:$0xff]
        %v271 = vld [vmem:[#allocation4 + $0x1e8] sm:$0xff]
        %v272 = vld [vmem:[#allocation4 + $0x1f0] sm:$0xff]
        %v273 = vld [vmem:[#allocation4 + $0x1f8] sm:$0xff]
        %v274 = vld [vmem:[%s2] sm:$0x1]
        %v276 = vperm.slane %v274, 0
        %278 = vmatpush.msra.mxu0 %v225
        %279 = vmatpush.msra.mxu0 %v224
        %280 = vmatpush.msra.mxu0 %v223
        %281 = vmatpush.msra.mxu0 %v222
        %282 = vmatpush.msra.mxu0 %v221
        %283 = vmatpush.msra.mxu0 %v220
        %284 = vmatpush.msra.mxu0 %v219
        %285 = vmatpush.msra.mxu0 %v218
        %286 = vmatpush.msra.mxu0 %v217
        %287 = vmatpush.msra.mxu0 %v216
        %288 = vmatpush.msra.mxu0 %v215
        %289 = vmatpush.msra.mxu0 %v214
        %290 = vmatpush.msra.mxu0 %v213
        %291 = vmatpush.msra.mxu0 %v212
        %292 = vmatpush.msra.mxu0 %v211
        %293 = vmatpush.msra.mxu0 %v210
        %294 = vmatmul.f32.gmra.mxu0 %v206
        %v295 = vpop.f32.mrf.mxu0
        %v296 = vadd.f32 %v276, %v295
        %297 = vdwg.mxu0
        %298 = vmatpush.msra.mxu0 %v241
        %299 = vmatpush.msra.mxu0 %v240
        %300 = vmatpush.msra.mxu0 %v239
        %301 = vmatpush.msra.mxu0 %v238
        %302 = vmatpush.msra.mxu0 %v237
        %303 = vmatpush.msra.mxu0 %v236
        %304 = vmatpush.msra.mxu0 %v235
        %305 = vmatpush.msra.mxu0 %v234
        %306 = vmatpush.msra.mxu0 %v233
        %307 = vmatpush.msra.mxu0 %v232
        %308 = vmatpush.msra.mxu0 %v231
        %309 = vmatpush.msra.mxu0 %v230
        %310 = vmatpush.msra.mxu0 %v229
        %311 = vmatpush.msra.mxu0 %v228
        %312 = vmatpush.msra.mxu0 %v227
        %313 = vmatpush.msra.mxu0 %v226
        %314 = vmatmul.f32.gmra.mxu0 %v207
        %v315 = vpop.f32.mrf.mxu0
        %v316 = vadd.f32 %v296, %v315
        %317 = vdwg.mxu0
        %318 = vmatpush.msra.mxu0 %v257
        %319 = vmatpush.msra.mxu0 %v256
        %320 = vmatpush.msra.mxu0 %v255
        %321 = vmatpush.msra.mxu0 %v254
        %322 = vmatpush.msra.mxu0 %v253
        %323 = vmatpush.msra.mxu0 %v252
        %324 = vmatpush.msra.mxu0 %v251
        %325 = vmatpush.msra.mxu0 %v250
        %326 = vmatpush.msra.mxu0 %v249
        %327 = vmatpush.msra.mxu0 %v248
        %328 = vmatpush.msra.mxu0 %v247
        %329 = vmatpush.msra.mxu0 %v246
        %330 = vmatpush.msra.mxu0 %v245
        %331 = vmatpush.msra.mxu0 %v244
        %332 = vmatpush.msra.mxu0 %v243
        %333 = vmatpush.msra.mxu0 %v242
        %334 = vmatmul.f32.gmra.mxu0 %v208
        %v335 = vpop.f32.mrf.mxu0
        %v336 = vadd.f32 %v316, %v335
        %337 = vdwg.mxu0
        %338 = vmatpush.msra.mxu0 %v273
        %339 = vmatpush.msra.mxu0 %v272
        %340 = vmatpush.msra.mxu0 %v271
        %341 = vmatpush.msra.mxu0 %v270
        %342 = vmatpush.msra.mxu0 %v269
        %343 = vmatpush.msra.mxu0 %v268
        %344 = vmatpush.msra.mxu0 %v267
        %345 = vmatpush.msra.mxu0 %v266
        %346 = vmatpush.msra.mxu0 %v265
        %347 = vmatpush.msra.mxu0 %v264
        %348 = vmatpush.msra.mxu0 %v263
        %349 = vmatpush.msra.mxu0 %v262
        %350 = vmatpush.msra.mxu0 %v261
        %351 = vmatpush.msra.mxu0 %v260
        %352 = vmatpush.msra.mxu0 %v259
        %353 = vmatpush.msra.mxu0 %v258
        %354 = vmatmul.f32.gmra.mxu0 %v209
        %v355 = vpop.f32.mrf.mxu0
        %v356 = vadd.f32 %v336, %v355
        %357 = vdwg.mxu0
        %358 = vst [vmem:[%s205] sm:$0xff] %v356
        %p359 = scmp.lt.s32.totalorder %s18, 1
        %s360 = scalar_select %p359, %s18, 1
        %s361 = smul.addr %s360, 8
        %s362 = scalar_lea.vmem %s3, %s361
        // Predicated region
        $region41: #{ppp_forward.6} parent=31 // pred_check
          %p363 = pneg %p104
        $region42: #{ppp_forward.6} parent=31 // pred_check_branch
          %365 = sbr.rel (%p363) target = $region44
        $region43: #{ppp_forward.6} parent=31 // pred_region
          _
        $region44: #{ppp_forward.6} parent=31 // pred_fallthru
          _
      $region32: #{ppp_forward.6} parent=5 // pred_fallthru
        _
      %p366 = scmp.le.s32.totalorder 2, %s13
      // Predicated region
      $region45: #{ppp_forward.6} parent=5 // pred_check
        %p367 = pneg %p366
      $region46: #{ppp_forward.6} parent=5 // pred_check_branch
        %369 = sbr.rel (%p367) target = $region48
      $region47: #{ppp_forward.6} parent=5 // pred_region
        %s370 = ssub.s32 %s13, 2
        // Predicated region
        $region49: #{ppp_forward.6} parent=47 // pred_check
          %p371 = pneg %p110
        $region50: #{ppp_forward.6} parent=47 // pred_check_branch
          %373 = sbr.rel (%p371) target = $region52
        $region51: #{ppp_forward.6} parent=47 // pred_region
          %p374 = scmp.lt.s32.totalorder %s19, 1
          %s375 = scalar_select %p374, %s19, 1
          %s376 = smul.addr %s375, 8
          %s377 = scalar_lea.vmem %s3, %s376
        $region52: #{ppp_forward.6} parent=47 // pred_fallthru
          _
      $region48: #{ppp_forward.6} parent=5 // pred_fallthru
        _
    $region6: #{ppp_forward.6} parent=1 // loop_footer
      %s17 = sadd.s32 1, %s13
    $region7: #{ppp_forward.6} parent=1 // loop_footer_branch
      %12 = sbr.rel target = $region3
    $region8: #{ppp_forward.6} parent=1 // loop_exit
      _
    %378 = vsyncpa [#allocation3], 1
    %s379 = scalar_lea.sflag [#allocation3], 1
    %380 = vsyncpa %s379, 1
    %381 = vsyncpa [#allocation5], 1

// kernel: ppp_forward.7
$region0: #{ppp_forward.7}
  #allocation0 [shape = 'u32[]', space=smem, size = 0x4, offset = 0x4, fixed_abs, tag = 'smem constant byte address 0x4 - core index']
  #allocation1 [shape = 'u32[72,128]{1,0:T(1,128)}', space=vmem, size = 0x9000, scoped, tag = 'internal scratch']
  %s0 = inlined_call_operand.hbm [shape: f32[2,4,768], index: 0, kind: input, shape index: {}]
  %s1 = inlined_call_operand.hbm [shape: f32[768,128], index: 1, kind: input, shape index: {}]
  %s2 = inlined_call_operand.vmem [shape: f32[1,128], index: 2, kind: input, shape index: {}]
  %s3 = inlined_call_operand.vmem [shape: f32[2,4,128], index: 3, kind: output, shape index: {}]
  %s4 = sld [smem:[#allocation0]]
  $region53: #{ppp_forward.7} parent=0
    _
  %s6 = ssub.s32 1, %s4
  %s7 = scalar_select 0, %s6, %s4
  $region1: #{ppp_forward.7} parent=0
    #allocation2 [shape = 'u8[24576]{0}', space=vmem, size = 0x6000, scoped, tag = 'input window, operand 0']
    #allocation3 [shape = 's32[2]{0}', space=sflag, size = 0x8, scoped, tag = 'scoped memory for ppp_forward.7']
    #allocation4 [shape = 'u8[393216]{0}', space=vmem, size = 0x60000, scoped, tag = 'input window, operand 1, single buffered']
    #allocation5 [shape = 's32[1]{0}', space=sflag, size = 0x4, scoped, tag = 'scoped memory for ppp_forward.7']
    %8 = vsyncpa [#allocation3], 0
    %s9 = scalar_lea.sflag [#allocation3], 1
    %10 = vsyncpa %s9, 0
    %11 = vsyncpa [#allocation5], 0
    loop: start=0, step=1, limit=4
    $region2: #{ppp_forward.7} parent=1 // loop_pre_header
      _
    $region3: #{ppp_forward.7} parent=1 // loop_header
      %s13 = sphi 0, %s17
      %p14 = scmp.ge.s32.totalorder %s13, 4
      %s23 = sphi 0, %s25
      %s26 = sphi 0, %s23
      %s27 = sphi 0, %s26
      %s43 = sphi 0, %s27
      %s47 = sphi 0, %s47
      %s49 = sphi 0, %s47
      %s50 = sphi 0, %s49
      %s64 = sphi 0, %s50
      %s68 = sphi 0, %s68
      %s70 = sphi 0, %s68
      %s71 = sphi 0, %s70
      %s85 = sphi 0, %s71
      %s91 = sphi 0, %s93
      %s94 = sphi 0, %s91
      %s95 = sphi 0, %s94
      %s111 = sphi 0, %s95
    $region4: #{ppp_forward.7} parent=1 // loop_header_branch
      %16 = sbr.rel (%p14) target = $region8
    $region5: #{ppp_forward.7} parent=1 // loop_body
      %s18 = ssub.s32 %s13, 1
      %s19 = ssub.s32 %s13, 2
      %s20 = sadd.s32 %s13, 1
      %s21 = ssub.s32 %s13, %s20
      %p22 = scmp.eq.s32.totalorder %s21, 0
      %s24 = sadd.s32 %s23, 1
      %s25 = scalar_select %p22, %s23, %s24
      %p28 = pneg %p22
      %p29 = scmp.eq.s32.totalorder %s13, 1
      %p30 = por %p28, %p29
      %p31 = scmp.ne.s32.totalorder %s23, %s26
      %p32 = scmp.eq.s32.totalorder %s13, 0
      %p33 = por %p31, %p32
      %p34 = scmp.ne.s32.totalorder %s23, %s26
      %p35 = scmp.eq.s32.totalorder %s18, 1
      %p36 = por %p34, %p35
      %p37 = scmp.ne.s32.totalorder %s26, %s27
      %p38 = scmp.eq.s32.totalorder %s18, 0
      %p39 = por %p37, %p38
      %p40 = scmp.ne.s32.totalorder %s26, %s27
      %p41 = scmp.eq.s32.totalorder %s19, 1
      %p42 = por %p40, %p41
      %p44 = scmp.ne.s32.totalorder %s27, %s43
      %p45 = scmp.eq.s32.totalorder %s19, 0
      %p46 = por %p44, %p45
      %s48 = sadd.s32 %s47, 1
      %p51 = scmp.eq.s32.totalorder %s13, 1
      %p52 = scmp.ne.s32.totalorder %s47, %s49
      %p53 = scmp.eq.s32.totalorder %s13, 0
      %p54 = por %p52, %p53
      %p55 = scmp.ne.s32.totalorder %s47, %s49
      %p56 = scmp.eq.s32.totalorder %s18, 1
      %p57 = por %p55, %p56
      %p58 = scmp.ne.s32.totalorder %s49, %s50
      %p59 = scmp.eq.s32.totalorder %s18, 0
      %p60 = por %p58, %p59
      %p61 = scmp.ne.s32.totalorder %s49, %s50
      %p62 = scmp.eq.s32.totalorder %s19, 1
      %p63 = por %p61, %p62
      %p65 = scmp.ne.s32.totalorder %s50, %s64
      %p66 = scmp.eq.s32.totalorder %s19, 0
      %p67 = por %p65, %p66
      %s69 = sadd.s32 %s68, 1
      %p72 = scmp.eq.s32.totalorder %s13, 1
      %p73 = scmp.ne.s32.totalorder %s68, %s70
      %p74 = scmp.eq.s32.totalorder %s13, 0
      %p75 = por %p73, %p74
      %p76 = scmp.ne.s32.totalorder %s68, %s70
      %p77 = scmp.eq.s32.totalorder %s18, 1
      %p78 = por %p76, %p77
      %p79 = scmp.ne.s32.totalorder %s70, %s71
      %p80 = scmp.eq.s32.totalorder %s18, 0
      %p81 = por %p79, %p80
      %p82 = scmp.ne.s32.totalorder %s70, %s71
      %p83 = scmp.eq.s32.totalorder %s19, 1
      %p84 = por %p82, %p83
      %p86 = scmp.ne.s32.totalorder %s71, %s85
      %p87 = scmp.eq.s32.totalorder %s19, 0
      %p88 = por %p86, %p87
      %s89 = ssub.s32 %s13, %s20
      %p90 = scmp.eq.s32.totalorder %s89, 0
      %s92 = sadd.s32 %s91, 1
      %s93 = scalar_select %p90, %s91, %s92
      %p96 = pneg %p90
      %p97 = scmp.eq.s32.totalorder %s13, 1
      %p98 = por %p96, %p97
      %p99 = scmp.ne.s32.totalorder %s91, %s94
      %p100 = scmp.eq.s32.totalorder %s13, 0
      %p101 = por %p99, %p100
      %p102 = scmp.ne.s32.totalorder %s91, %s94
      %p103 = scmp.eq.s32.totalorder %s18, 1
      %p104 = por %p102, %p103
      %p105 = scmp.ne.s32.totalorder %s94, %s95
      %p106 = scmp.eq.s32.totalorder %s18, 0
      %p107 = por %p105, %p106
      %p108 = scmp.ne.s32.totalorder %s94, %s95
      %p109 = scmp.eq.s32.totalorder %s19, 1
      %p110 = por %p108, %p109
      %p112 = scmp.ne.s32.totalorder %s95, %s111
      %p113 = scmp.eq.s32.totalorder %s19, 0
      %p114 = por %p112, %p113
      %p115 = scmp.le.s32.totalorder 1, %s13
      %p116 = scmp.lt.s32.totalorder %s13, 3
      %p117 = pnand %p115, %p116
      %p118 = pneg %p117
      // Predicated region
      $region9: #{ppp_forward.7} parent=5 // pred_check
        _
      $region10: #{ppp_forward.7} parent=5 // pred_check_branch
        %120 = sbr.rel (%p117) target = $region12
      $region11: #{ppp_forward.7} parent=5 // pred_region
        %s121 = ssub.s32 %s13, 1
        // Predicated region
        $region13: #{ppp_forward.7} parent=11 // pred_check
          %p122 = pneg %p60
        $region14: #{ppp_forward.7} parent=11 // pred_check_branch
          %124 = sbr.rel (%p122) target = $region16
        $region15: #{ppp_forward.7} parent=11 // pred_region
          %126 = vsyncadd [#allocation5], 0
          %s127 = sshll.u32 %s1, 4
          %s128 = int_to_ptr.hbm [resolvable:$true] %s127
          %s129 = sshll.u32 [#allocation4], 4
          %s130 = int_to_ptr.vmem [resolvable:$true] %s129
          %135 = dma.hbm_to_vmem [thread:$0]  %s128, 12288, %s130, [#allocation5], 128, 128, 8
        $region16: #{ppp_forward.7} parent=11 // pred_fallthru
          _
        // Predicated region
        $region17: #{ppp_forward.7} parent=11 // pred_check
          %p136 = pneg %p81
        $region18: #{ppp_forward.7} parent=11 // pred_check_branch
          %138 = sbr.rel (%p136) target = $region20
        $region19: #{ppp_forward.7} parent=11 // pred_region
          _
        $region20: #{ppp_forward.7} parent=11 // pred_fallthru
          _
      $region12: #{ppp_forward.7} parent=5 // pred_fallthru
        _
      %p139 = scmp.lt.s32.totalorder %s13, 2
      // Predicated region
      $region21: #{ppp_forward.7} parent=5 // pred_check
        %p140 = pneg %p139
      $region22: #{ppp_forward.7} parent=5 // pred_check_branch
        %142 = sbr.rel (%p140) target = $region24
      $region23: #{ppp_forward.7} parent=5 // pred_region
        // Predicated region
        $region25: #{ppp_forward.7} parent=23 // pred_check
          %p143 = pneg %p33
        $region26: #{ppp_forward.7} parent=23 // pred_check_branch
          %145 = sbr.rel (%p143) target = $region28
        $region27: #{ppp_forward.7} parent=23 // pred_region
          %s146 = sand.u32 %s23, 1
          %s147 = scalar_lea.sflag [#allocation3], %s146
          %s148 = sand.u32 %s23, 1
          %s149 = smul.addr %s148, 24
          %s150 = scalar_lea.vmem [#allocation2], %s149
          %152 = vsyncadd %s147, 0
          %s153 = smul.addr %s13, 6
          %s154 = smul.addr %s153, 4
          %s155 = scalar_lea.hbm %s0, %s154
          %s157 = sshll.u32 %s155, 4
          %s158 = int_to_ptr.hbm [resolvable:$true] %s157
          %s159 = sshll.u32 %s150, 4
          %s160 = int_to_ptr.vmem [resolvable:$true] %s159
          %162 = dma.hbm_to_vmem [thread:$0]  %s158, 384, %s160, %s147
        $region28: #{ppp_forward.7} parent=23 // pred_fallthru
          _
      $region24: #{ppp_forward.7} parent=5 // pred_fallthru
        _
      %p163 = scmp.le.s32.totalorder 1, %s13
      %p164 = scmp.lt.s32.totalorder %s13, 3
      %p165 = pnand %p163, %p164
      %p166 = pneg %p165
      // Predicated region
      $region29: #{ppp_forward.7} parent=5 // pred_check
        _
      $region30: #{ppp_forward.7} parent=5 // pred_check_branch
        %168 = sbr.rel (%p165) target = $region32
      $region31: #{ppp_forward.7} parent=5 // pred_region
        %s169 = ssub.s32 %s13, 1
        %s170 = sand.u32 %s26, 1
        %s171 = scalar_lea.sflag [#allocation3], %s170
        %s172 = sand.u32 %s26, 1
        %s173 = smul.addr %s172, 24
        %s174 = scalar_lea.vmem [#allocation2], %s173
        // Predicated region
        $region33: #{ppp_forward.7} parent=31 // pred_check
          %p175 = pneg %p39
        $region34: #{ppp_forward.7} parent=31 // pred_check_branch
          %177 = sbr.rel (%p175) target = $region36
        $region35: #{ppp_forward.7} parent=31 // pred_region
          %179 = dma.done %s171, 384
        $region36: #{ppp_forward.7} parent=31 // pred_fallthru
          _
        // Predicated region
        $region37: #{ppp_forward.7} parent=31 // pred_check
          %p180 = pneg %p60
        $region38: #{ppp_forward.7} parent=31 // pred_check_branch
          %182 = sbr.rel (%p180) target = $region40
        $region39: #{ppp_forward.7} parent=31 // pred_region
          %184 = dma.done [#allocation5], 12288
        $region40: #{ppp_forward.7} parent=31 // pred_fallthru
          _
        %s185 = sand.u32 %s26, 1
        %s186 = scalar_lea.sflag [#allocation3], %s185
        %s187 = sand.u32 %s26, 1
        %s188 = smul.addr %s187, 24
        %s189 = scalar_lea.vmem [#allocation2], %s188
        %p190 = pneg %p39
        %p191 = pneg %p36
        %p192 = pneg %p60
        %p193 = pneg %p57
        %p194 = pneg %p81
        %p195 = pneg %p78
        %p196 = pneg %p107
        %p197 = pneg %p104
        %p198 = scmp.lt.s32.totalorder %s18, 1
        %s199 = scalar_select %p198, %s18, 1
        %s200 = smul.addr %s199, 4
        %s201 = scalar_lea.vmem %s3, %s200
        %p202 = scmp.lt.s32.totalorder %s18, 1
        %s203 = scalar_select %p202, %s18, 1
        %s204 = smul.addr %s203, 4
        %s205 = scalar_lea.vmem %s3, %s204
        %v206 = vld [vmem:[%s174] sm:$0xff]
        %v207 = vld [vmem:[%s174 + $0x8] sm:$0xff]
        %v208 = vld [vmem:[%s174 + $0x10] sm:$0xff]
        %v209 = vld [vmem:[#allocation4] sm:$0xff]
        %v210 = vld [vmem:[#allocation4 + $0x8] sm:$0xff]
        %v211 = vld [vmem:[#allocation4 + $0x10] sm:$0xff]
        %v212 = vld [vmem:[#allocation4 + $0x18] sm:$0xff]
        %v213 = vld [vmem:[#allocation4 + $0x20] sm:$0xff]
        %v214 = vld [vmem:[#allocation4 + $0x28] sm:$0xff]
        %v215 = vld [vmem:[#allocation4 + $0x30] sm:$0xff]
        %v216 = vld [vmem:[#allocation4 + $0x38] sm:$0xff]
        %v217 = vld [vmem:[#allocation4 + $0x40] sm:$0xff]
        %v218 = vld [vmem:[#allocation4 + $0x48] sm:$0xff]
        %v219 = vld [vmem:[#allocation4 + $0x50] sm:$0xff]
        %v220 = vld [vmem:[#allocation4 + $0x58] sm:$0xff]
        %v221 = vld [vmem:[#allocation4 + $0x60] sm:$0xff]
        %v222 = vld [vmem:[#allocation4 + $0x68] sm:$0xff]
        %v223 = vld [vmem:[#allocation4 + $0x70] sm:$0xff]
        %v224 = vld [vmem:[#allocation4 + $0x78] sm:$0xff]
        %v225 = vld [vmem:[#allocation4 + $0x80] sm:$0xff]
        %v226 = vld [vmem:[#allocation4 + $0x88] sm:$0xff]
        %v227 = vld [vmem:[#allocation4 + $0x90] sm:$0xff]
        %v228 = vld [vmem:[#allocation4 + $0x98] sm:$0xff]
        %v229 = vld [vmem:[#allocation4 + $0xa0] sm:$0xff]
        %v230 = vld [vmem:[#allocation4 + $0xa8] sm:$0xff]
        %v231 = vld [vmem:[#allocation4 + $0xb0] sm:$0xff]
        %v232 = vld [vmem:[#allocation4 + $0xb8] sm:$0xff]
        %v233 = vld [vmem:[#allocation4 + $0xc0] sm:$0xff]
        %v234 = vld [vmem:[#allocation4 + $0xc8] sm:$0xff]
        %v235 = vld [vmem:[#allocation4 + $0xd0] sm:$0xff]
        %v236 = vld [vmem:[#allocation4 + $0xd8] sm:$0xff]
        %v237 = vld [vmem:[#allocation4 + $0xe0] sm:$0xff]
        %v238 = vld [vmem:[#allocation4 + $0xe8] sm:$0xff]
        %v239 = vld [vmem:[#allocation4 + $0xf0] sm:$0xff]
        %v240 = vld [vmem:[#allocation4 + $0xf8] sm:$0xff]
        %v241 = vld [vmem:[#allocation4 + $0x100] sm:$0xff]
        %v242 = vld [vmem:[#allocation4 + $0x108] sm:$0xff]
        %v243 = vld [vmem:[#allocation4 + $0x110] sm:$0xff]
        %v244 = vld [vmem:[#allocation4 + $0x118] sm:$0xff]
        %v245 = vld [vmem:[#allocation4 + $0x120] sm:$0xff]
        %v246 = vld [vmem:[#allocation4 + $0x128] sm:$0xff]
        %v247 = vld [vmem:[#allocation4 + $0x130] sm:$0xff]
        %v248 = vld [vmem:[#allocation4 + $0x138] sm:$0xff]
        %v249 = vld [vmem:[#allocation4 + $0x140] sm:$0xff]
        %v250 = vld [vmem:[#allocation4 + $0x148] sm:$0xff]
        %v251 = vld [vmem:[#allocation4 + $0x150] sm:$0xff]
        %v252 = vld [vmem:[#allocation4 + $0x158] sm:$0xff]
        %v253 = vld [vmem:[#allocation4 + $0x160] sm:$0xff]
        %v254 = vld [vmem:[#allocation4 + $0x168] sm:$0xff]
        %v255 = vld [vmem:[#allocation4 + $0x170] sm:$0xff]
        %v256 = vld [vmem:[#allocation4 + $0x178] sm:$0xff]
        %v257 = vld [vmem:[#allocation4 + $0x180] sm:$0xff]
        %v258 = vld [vmem:[#allocation4 + $0x188] sm:$0xff]
        %v259 = vld [vmem:[#allocation4 + $0x190] sm:$0xff]
        %v260 = vld [vmem:[#allocation4 + $0x198] sm:$0xff]
        %v261 = vld [vmem:[#allocation4 + $0x1a0] sm:$0xff]
        %v262 = vld [vmem:[#allocation4 + $0x1a8] sm:$0xff]
        %v263 = vld [vmem:[#allocation4 + $0x1b0] sm:$0xff]
        %v264 = vld [vmem:[#allocation4 + $0x1b8] sm:$0xff]
        %v265 = vld [vmem:[#allocation4 + $0x1c0] sm:$0xff]
        %v266 = vld [vmem:[#allocation4 + $0x1c8] sm:$0xff]
        %v267 = vld [vmem:[#allocation4 + $0x1d0] sm:$0xff]
        %v268 = vld [vmem:[#allocation4 + $0x1d8] sm:$0xff]
        %v269 = vld [vmem:[#allocation4 + $0x1e0] sm:$0xff]
        %v270 = vld [vmem:[#allocation4 + $0x1e8] sm:$0xff]
        %v271 = vld [vmem:[#allocation4 + $0x1f0] sm:$0xff]
        %v272 = vld [vmem:[#allocation4 + $0x1f8] sm:$0xff]
        %v273 = vld [vmem:[#allocation4 + $0x200] sm:$0xff]
        %v274 = vld [vmem:[#allocation4 + $0x208] sm:$0xff]
        %v275 = vld [vmem:[#allocation4 + $0x210] sm:$0xff]
        %v276 = vld [vmem:[#allocation4 + $0x218] sm:$0xff]
        %v277 = vld [vmem:[#allocation4 + $0x220] sm:$0xff]
        %v278 = vld [vmem:[#allocation4 + $0x228] sm:$0xff]
        %v279 = vld [vmem:[#allocation4 + $0x230] sm:$0xff]
        %v280 = vld [vmem:[#allocation4 + $0x238] sm:$0xff]
        %v281 = vld [vmem:[#allocation4 + $0x240] sm:$0xff]
        %v282 = vld [vmem:[#allocation4 + $0x248] sm:$0xff]
        %v283 = vld [vmem:[#allocation4 + $0x250] sm:$0xff]
        %v284 = vld [vmem:[#allocation4 + $0x258] sm:$0xff]
        %v285 = vld [vmem:[#allocation4 + $0x260] sm:$0xff]
        %v286 = vld [vmem:[#allocation4 + $0x268] sm:$0xff]
        %v287 = vld [vmem:[#allocation4 + $0x270] sm:$0xff]
        %v288 = vld [vmem:[#allocation4 + $0x278] sm:$0xff]
        %v289 = vld [vmem:[#allocation4 + $0x280] sm:$0xff]
        %v290 = vld [vmem:[#allocation4 + $0x288] sm:$0xff]
        %v291 = vld [vmem:[#allocation4 + $0x290] sm:$0xff]
        %v292 = vld [vmem:[#allocation4 + $0x298] sm:$0xff]
        %v293 = vld [vmem:[#allocation4 + $0x2a0] sm:$0xff]
        %v294 = vld [vmem:[#allocation4 + $0x2a8] sm:$0xff]
        %v295 = vld [vmem:[#allocation4 + $0x2b0] sm:$0xff]
        %v296 = vld [vmem:[#allocation4 + $0x2b8] sm:$0xff]
        %v297 = vld [vmem:[#allocation4 + $0x2c0] sm:$0xff]
        %v298 = vld [vmem:[#allocation4 + $0x2c8] sm:$0xff]
        %v299 = vld [vmem:[#allocation4 + $0x2d0] sm:$0xff]
        %v300 = vld [vmem:[#allocation4 + $0x2d8] sm:$0xff]
        %v301 = vld [vmem:[#allocation4 + $0x2e0] sm:$0xff]
        %v302 = vld [vmem:[#allocation4 + $0x2e8] sm:$0xff]
        %v303 = vld [vmem:[#allocation4 + $0x2f0] sm:$0xff]
        %v304 = vld [vmem:[#allocation4 + $0x2f8] sm:$0xff]
        %v305 = vld [vmem:[%s2] sm:$0x1]
        %v307 = vperm.slane %v305, 0
        %312 = vst [vmem:[#allocation1] ss:$2 sm:$0xff] %v206
        %s313 = scalar_lea.vmem [#allocation1], 16
        %314 = vst [vmem:[%s313] ss:$2 sm:$0xff] %v207
        %s315 = scalar_lea.vmem [#allocation1], 32
        %316 = vst [vmem:[%s315] ss:$2 sm:$0xff] %v208
        %v317 = vld.sshfl [vmem:[#allocation1] sm:$0xff pattern:$0x75316420]
        %v318 = vld.sshfl [vmem:[#allocation1 + $0x8] sm:$0xff pattern:$0x75316420]
        %v319 = vld.sshfl [vmem:[#allocation1 + $0x10] sm:$0xff pattern:$0x75316420]
        %v320 = vld.sshfl [vmem:[#allocation1 + $0x18] sm:$0xff pattern:$0x75316420]
        %v321 = vld.sshfl [vmem:[#allocation1 + $0x20] sm:$0xff pattern:$0x75316420]
        %v322 = vld.sshfl [vmem:[#allocation1 + $0x28] sm:$0xff pattern:$0x75316420]
        %329 = vmatpush.msra.mxu0 %v224
        %330 = vmatpush.msra.mxu0 %v223
        %331 = vmatpush.msra.mxu0 %v222
        %332 = vmatpush.msra.mxu0 %v221
        %333 = vmatpush.msra.mxu0 %v220
        %334 = vmatpush.msra.mxu0 %v219
        %335 = vmatpush.msra.mxu0 %v218
        %336 = vmatpush.msra.mxu0 %v217
        %337 = vmatpush.msra.mxu0 %v216
        %338 = vmatpush.msra.mxu0 %v215
        %339 = vmatpush.msra.mxu0 %v214
        %340 = vmatpush.msra.mxu0 %v213
        %341 = vmatpush.msra.mxu0 %v212
        %342 = vmatpush.msra.mxu0 %v211
        %343 = vmatpush.msra.mxu0 %v210
        %344 = vmatpush.msra.mxu0 %v209
        %345 = vmatmul.f32.gmra.mxu0 %v317
        %v346 = vpop.f32.mrf.mxu0
        %v347 = vadd.f32 %v307, %v346
        %348 = vdwg.mxu0
        %349 = vmatpush.msra.mxu0 %v240
        %350 = vmatpush.msra.mxu0 %v239
        %351 = vmatpush.msra.mxu0 %v238
        %352 = vmatpush.msra.mxu0 %v237
        %353 = vmatpush.msra.mxu0 %v236
        %354 = vmatpush.msra.mxu0 %v235
        %355 = vmatpush.msra.mxu0 %v234
        %356 = vmatpush.msra.mxu0 %v233
        %357 = vmatpush.msra.mxu0 %v232
        %358 = vmatpush.msra.mxu0 %v231
        %359 = vmatpush.msra.mxu0 %v230
        %360 = vmatpush.msra.mxu0 %v229
        %361 = vmatpush.msra.mxu0 %v228
        %362 = vmatpush.msra.mxu0 %v227
        %363 = vmatpush.msra.mxu0 %v226
        %364 = vmatpush.msra.mxu0 %v225
        %365 = vmatmul.f32.gmra.mxu0 %v318
        %v366 = vpop.f32.mrf.mxu0
        %v367 = vadd.f32 %v347, %v366
        %368 = vdwg.mxu0
        %369 = vmatpush.msra.mxu0 %v256
        %370 = vmatpush.msra.mxu0 %v255
        %371 = vmatpush.msra.mxu0 %v254
        %372 = vmatpush.msra.mxu0 %v253
        %373 = vmatpush.msra.mxu0 %v252
        %374 = vmatpush.msra.mxu0 %v251
        %375 = vmatpush.msra.mxu0 %v250
        %376 = vmatpush.msra.mxu0 %v249
        %377 = vmatpush.msra.mxu0 %v248
        %378 = vmatpush.msra.mxu0 %v247
        %379 = vmatpush.msra.mxu0 %v246
        %380 = vmatpush.msra.mxu0 %v245
        %381 = vmatpush.msra.mxu0 %v244
        %382 = vmatpush.msra.mxu0 %v243
        %383 = vmatpush.msra.mxu0 %v242
        %384 = vmatpush.msra.mxu0 %v241
        %385 = vmatmul.f32.gmra.mxu0 %v319
        %v386 = vpop.f32.mrf.mxu0
        %v387 = vadd.f32 %v367, %v386
        %388 = vdwg.mxu0
        %389 = vmatpush.msra.mxu0 %v272
        %390 = vmatpush.msra.mxu0 %v271
        %391 = vmatpush.msra.mxu0 %v270
        %392 = vmatpush.msra.mxu0 %v269
        %393 = vmatpush.msra.mxu0 %v268
        %394 = vmatpush.msra.mxu0 %v267
        %395 = vmatpush.msra.mxu0 %v266
        %396 = vmatpush.msra.mxu0 %v265
        %397 = vmatpush.msra.mxu0 %v264
        %398 = vmatpush.msra.mxu0 %v263
        %399 = vmatpush.msra.mxu0 %v262
        %400 = vmatpush.msra.mxu0 %v261
        %401 = vmatpush.msra.mxu0 %v260
        %402 = vmatpush.msra.mxu0 %v259
        %403 = vmatpush.msra.mxu0 %v258
        %404 = vmatpush.msra.mxu0 %v257
        %405 = vmatmul.f32.gmra.mxu0 %v320
        %v406 = vpop.f32.mrf.mxu0
        %v407 = vadd.f32 %v387, %v406
        %408 = vdwg.mxu0
        %409 = vmatpush.msra.mxu0 %v288
        %410 = vmatpush.msra.mxu0 %v287
        %411 = vmatpush.msra.mxu0 %v286
        %412 = vmatpush.msra.mxu0 %v285
        %413 = vmatpush.msra.mxu0 %v284
        %414 = vmatpush.msra.mxu0 %v283
        %415 = vmatpush.msra.mxu0 %v282
        %416 = vmatpush.msra.mxu0 %v281
        %417 = vmatpush.msra.mxu0 %v280
        %418 = vmatpush.msra.mxu0 %v279
        %419 = vmatpush.msra.mxu0 %v278
        %420 = vmatpush.msra.mxu0 %v277
        %421 = vmatpush.msra.mxu0 %v276
        %422 = vmatpush.msra.mxu0 %v275
        %423 = vmatpush.msra.mxu0 %v274
        %424 = vmatpush.msra.mxu0 %v273
        %425 = vmatmul.f32.gmra.mxu0 %v321
        %v426 = vpop.f32.mrf.mxu0
        %v427 = vadd.f32 %v407, %v426
        %428 = vdwg.mxu0
        %429 = vmatpush.msra.mxu0 %v304
        %430 = vmatpush.msra.mxu0 %v303
        %431 = vmatpush.msra.mxu0 %v302
        %432 = vmatpush.msra.mxu0 %v301
        %433 = vmatpush.msra.mxu0 %v300
        %434 = vmatpush.msra.mxu0 %v299
        %435 = vmatpush.msra.mxu0 %v298
        %436 = vmatpush.msra.mxu0 %v297
        %437 = vmatpush.msra.mxu0 %v296
        %438 = vmatpush.msra.mxu0 %v295
        %439 = vmatpush.msra.mxu0 %v294
        %440 = vmatpush.msra.mxu0 %v293
        %441 = vmatpush.msra.mxu0 %v292
        %442 = vmatpush.msra.mxu0 %v291
        %443 = vmatpush.msra.mxu0 %v290
        %444 = vmatpush.msra.mxu0 %v289
        %445 = vmatmul.f32.gmra.mxu0 %v322
        %v446 = vpop.f32.mrf.mxu0
        %v447 = vadd.f32 %v427, %v446
        %448 = vdwg.mxu0
        %449 = vst [vmem:[%s205] sm:$0xf] %v447
        %p450 = scmp.lt.s32.totalorder %s18, 1
        %s451 = scalar_select %p450, %s18, 1
        %s452 = smul.addr %s451, 4
        %s453 = scalar_lea.vmem %s3, %s452
        // Predicated region
        $region41: #{ppp_forward.7} parent=31 // pred_check
          %p454 = pneg %p104
        $region42: #{ppp_forward.7} parent=31 // pred_check_branch
          %456 = sbr.rel (%p454) target = $region44
        $region43: #{ppp_forward.7} parent=31 // pred_region
          _
        $region44: #{ppp_forward.7} parent=31 // pred_fallthru
          _
      $region32: #{ppp_forward.7} parent=5 // pred_fallthru
        _
      %p457 = scmp.le.s32.totalorder 2, %s13
      // Predicated region
      $region45: #{ppp_forward.7} parent=5 // pred_check
        %p458 = pneg %p457
      $region46: #{ppp_forward.7} parent=5 // pred_check_branch
        %460 = sbr.rel (%p458) target = $region48
      $region47: #{ppp_forward.7} parent=5 // pred_region
        %s461 = ssub.s32 %s13, 2
        // Predicated region
        $region49: #{ppp_forward.7} parent=47 // pred_check
          %p462 = pneg %p110
        $region50: #{ppp_forward.7} parent=47 // pred_check_branch
          %464 = sbr.rel (%p462) target = $region52
        $region51: #{ppp_forward.7} parent=47 // pred_region
          %p465 = scmp.lt.s32.totalorder %s19, 1
          %s466 = scalar_select %p465, %s19, 1
          %s467 = smul.addr %s466, 4
          %s468 = scalar_lea.vmem %s3, %s467
        $region52: #{ppp_forward.7} parent=47 // pred_fallthru
          _
      $region48: #{ppp_forward.7} parent=5 // pred_fallthru
        _
    $region6: #{ppp_forward.7} parent=1 // loop_footer
      %s17 = sadd.s32 1, %s13
    $region7: #{ppp_forward.7} parent=1 // loop_footer_branch
      %12 = sbr.rel target = $region3
    $region8: #{ppp_forward.7} parent=1 // loop_exit
      _
    %469 = vsyncpa [#allocation3], 1
    %s470 = scalar_lea.sflag [#allocation3], 1
    %471 = vsyncpa %s470, 1
    %472 = vsyncpa [#allocation5], 1

// kernel: ppp_forward.11
$region0: #{ppp_forward.11}
  #allocation0 [shape = 'u32[]', space=smem, size = 0x4, offset = 0x4, fixed_abs, tag = 'smem constant byte address 0x4 - core index']
  #allocation1 [shape = 'u32[72,128]{1,0:T(1,128)}', space=vmem, size = 0x9000, scoped, tag = 'internal scratch']
  #allocation2 [shape = 'f32[1,1]{1,0:T(1,128)S(1)}', space=vmem, size = 0x200, scoped, tag = 'scoped memory for ppp_forward.11']
  %s0 = inlined_call_operand.vmem [shape: f32[2,16,128], index: 0, kind: input, shape index: {}]
  %s1 = inlined_call_operand.vmem [shape: f32[1,128], index: 1, kind: input, shape index: {}]
  %s2 = inlined_call_operand.<no memory space> [shape: f32[1,1], index: 2, kind: input, shape index: {}]
  %s3 = inlined_call_operand.vmem [shape: f32[2,1], index: 3, kind: output, shape index: {}]
  %s4 = sld [smem:[#allocation0]]
  $region22: #{ppp_forward.11} parent=0
    _
  %s6 = ssub.s32 1, %s4
  %s7 = scalar_select 0, %s6, %s4
  %v8 = vstv %s2
  %9 = vst [vmem:[#allocation2] sm:$0x1] %v8
  // Predicated region
  $region2: #{ppp_forward.11} parent=0 // pred_check
    _
  $region3: #{ppp_forward.11} parent=0 // pred_check_branch
    %11 = sbr.rel (0) target = $region5
  $region4: #{ppp_forward.11} parent=0 // pred_region
    _
  $region5: #{ppp_forward.11} parent=0 // pred_fallthru
    _
  // Predicated region
  $region6: #{ppp_forward.11} parent=0 // pred_check
    _
  $region7: #{ppp_forward.11} parent=0 // pred_check_branch
    %13 = sbr.rel (0) target = $region9
  $region8: #{ppp_forward.11} parent=0 // pred_region
    _
  $region9: #{ppp_forward.11} parent=0 // pred_fallthru
    _
  // Predicated region
  $region10: #{ppp_forward.11} parent=0 // pred_check
    _
  $region11: #{ppp_forward.11} parent=0 // pred_check_branch
    %15 = sbr.rel (0) target = $region13
  $region12: #{ppp_forward.11} parent=0 // pred_region
    _
  $region13: #{ppp_forward.11} parent=0 // pred_fallthru
    _
  %v16 = vld [vmem:[%s0] sm:$0xff]
  %v17 = vld [vmem:[%s0 + $0x8] sm:$0xff]
  %v18 = vld [vmem:[%s0 + $0x10] sm:$0xff]
  %v19 = vld [vmem:[%s0 + $0x18] sm:$0xff]
  %v20 = vadd.f32 %v16, %v17
  %v21 = vrot.slane %v20, 4
  %v22 = vadd.f32 %v20, %v21
  %v23 = vrot.slane %v22, 2
  %v24 = vadd.f32 %v22, %v23
  %v25 = vrot.slane %v24, 1
  %v26 = vadd.f32 %v24, %v25
  %v27 = vadd.f32 %v18, %v19
  %v28 = vrot.slane %v27, 4
  %v29 = vadd.f32 %v27, %v28
  %v30 = vrot.slane %v29, 2
  %v31 = vadd.f32 %v29, %v30
  %v32 = vrot.slane %v31, 1
  %v33 = vadd.f32 %v31, %v32
  %v34 = vmul.f32 %v26, 0.0625
  %v35 = vmul.f32 %v33, 0.0625
  %v36 = vld [vmem:[%s1] sm:$0x1]
  %v38 = vperm.slane %v36, 0
  %v40 = vmul.f32 %v34, %v38
  %v41 = vmul.f32 %v35, %v38
  %v44 = vrot.slane %v41, 7
  %vm45 = vcmask 1041409
  %v46 = vsel %vm45, %v44, %v40
  %vm48 = vcmask 1041408
  %v49 = vsel %vm48, %v46, 0.0
  %50 = vadd.xlane.f32.xlu0 %v49
  %v51 = vpop.xlane.xlu0 %50
  %v52 = vld [vmem:[#allocation2] sm:$0x1]
  %v54 = vperm.slane %v52, 0
  %v56 = vadd.f32 %v51, %v54
  %vm57 = vcmask 1024
  %58 = vst.msk [vmem:[%s3] sm:$0x3] %vm57, %v56
  // Predicated region
  $region14: #{ppp_forward.11} parent=0 // pred_check
    _
  $region15: #{ppp_forward.11} parent=0 // pred_check_branch
    %60 = sbr.rel (0) target = $region17
  $region16: #{ppp_forward.11} parent=0 // pred_region
    _
  $region17: #{ppp_forward.11} parent=0 // pred_fallthru
    _
  // Predicated region
  $region18: #{ppp_forward.11} parent=0 // pred_check
    _
  $region19: #{ppp_forward.11} parent=0 // pred_check_branch
    %62 = sbr.rel (0) target = $region21
  $region20: #{ppp_forward.11} parent=0 // pred_region
    _
  $region21: #{ppp_forward.11} parent=0 // pred_fallthru
    _

// kernel: ppp_forward.9
$region0: #{ppp_forward.9}
  #allocation0 [shape = 'u32[]', space=smem, size = 0x4, offset = 0x4, fixed_abs, tag = 'smem constant byte address 0x4 - core index']
  #allocation1 [shape = 'u32[72,128]{1,0:T(1,128)}', space=vmem, size = 0x9000, scoped, tag = 'internal scratch']
  %s0 = inlined_call_operand.vmem [shape: f32[2,16,128], index: 0, kind: input, shape index: {}]
  %s1 = inlined_call_operand.hbm [shape: f32[128,384], index: 1, kind: input, shape index: {}]
  %s2 = inlined_call_operand.hbm [shape: f32[4,32,128], index: 2, kind: input, shape index: {}]
  %s3 = inlined_call_operand.vmem [shape: f32[1,128], index: 3, kind: input, shape index: {}]
  %s4 = inlined_call_operand.hbm [shape: f32[128,256], index: 4, kind: input, shape index: {}]
  %s5 = inlined_call_operand.vmem [shape: f32[1,256], index: 5, kind: input, shape index: {}]
  %s6 = inlined_call_operand.hbm [shape: f32[256,128], index: 6, kind: input, shape index: {}]
  %s7 = inlined_call_operand.vmem [shape: f32[1,128], index: 7, kind: input, shape index: {}]
  %s8 = inlined_call_operand.vmem [shape: f32[2,16,128], index: 8, kind: output, shape index: {}]
  %s9 = sld [smem:[#allocation0]]
  $region81: #{ppp_forward.9} parent=0
    _
  %s11 = ssub.s32 1, %s9
  %s12 = scalar_select 0, %s11, %s9
  $region1: #{ppp_forward.9} parent=0
    #allocation2 [shape = 'u8[196608]{0}', space=vmem, size = 0x30000, scoped, tag = 'input window, operand 1, single buffered']
    #allocation3 [shape = 's32[2]{0}', space=sflag, size = 0x8, scoped, tag = 'scoped memory for ppp_forward.9']
    #allocation4 [shape = 'u8[65536]{0}', space=vmem, size = 0x10000, scoped, tag = 'input window, operand 2, single buffered']
    #allocation5 [shape = 's32[1]{0}', space=sflag, size = 0x4, scoped, tag = 'scoped memory for ppp_forward.9']
    #allocation6 [shape = 'u8[131072]{0}', space=vmem, size = 0x20000, scoped, tag = 'input window, operand 4, single buffered']
    #allocation7 [shape = 'u8[131072]{0}', space=vmem, size = 0x20000, scoped, tag = 'input window, operand 6, single buffered']
    #allocation8 [shape = 's32[1]{0}', space=sflag, size = 0x4, scoped, tag = 'scoped memory for ppp_forward.9']
    %13 = vsyncpa [#allocation3], 0
    %14 = vsyncpa [#allocation5], 0
    %15 = vsyncpa [#allocation8], 0
    loop: start=0, step=1, limit=4
    $region2: #{ppp_forward.9} parent=1 // loop_pre_header
      _
    $region3: #{ppp_forward.9} parent=1 // loop_header
      %s17 = sphi 0, %s21
      %p18 = scmp.ge.s32.totalorder %s17, 4
      %s27 = sphi 0, %s29
      %s30 = sphi 0, %s27
      %s31 = sphi 0, %s30
      %s47 = sphi 0, %s31
      %s51 = sphi 0, %s51
      %s53 = sphi 0, %s51
      %s54 = sphi 0, %s53
      %s68 = sphi 0, %s54
      %s72 = sphi 0, %s72
      %s74 = sphi 0, %s72
      %s75 = sphi 0, %s74
      %s89 = sphi 0, %s75
      %s93 = sphi 0, %s93
      %s95 = sphi 0, %s93
      %s96 = sphi 0, %s95
      %s110 = sphi 0, %s96
      %s114 = sphi 0, %s114
      %s116 = sphi 0, %s114
      %s117 = sphi 0, %s116
      %s131 = sphi 0, %s117
      %s135 = sphi 0, %s135
      %s137 = sphi 0, %s135
      %s138 = sphi 0, %s137
      %s152 = sphi 0, %s138
      %s156 = sphi 0, %s156
      %s158 = sphi 0, %s156
      %s159 = sphi 0, %s158
      %s173 = sphi 0, %s159
      %s177 = sphi 0, %s177
      %s179 = sphi 0, %s177
      %s180 = sphi 0, %s179
      %s194 = sphi 0, %s180
      %s200 = sphi 0, %s202
      %s203 = sphi 0, %s200
      %s204 = sphi 0, %s203
      %s220 = sphi 0, %s204
    $region4: #{ppp_forward.9} parent=1 // loop_header_branch
      %20 = sbr.rel (%p18) target = $region8
    $region5: #{ppp_forward.9} parent=1 // loop_body
      %s22 = ssub.s32 %s17, 1
      %s23 = ssub.s32 %s17, 2
      %s24 = sadd.s32 %s17, 1
      %s25 = ssub.s32 %s17, %s24
      %p26 = scmp.eq.s32.totalorder %s25, 0
      %s28 = sadd.s32 %s27, 1
      %s29 = scalar_select %p26, %s27, %s28
      %p32 = pneg %p26
      %p33 = scmp.eq.s32.totalorder %s17, 1
      %p34 = por %p32, %p33
      %p35 = scmp.ne.s32.totalorder %s27, %s30
      %p36 = scmp.eq.s32.totalorder %s17, 0
      %p37 = por %p35, %p36
      %p38 = scmp.ne.s32.totalorder %s27, %s30
      %p39 = scmp.eq.s32.totalorder %s22, 1
      %p40 = por %p38, %p39
      %p41 = scmp.ne.s32.totalorder %s30, %s31
      %p42 = scmp.eq.s32.totalorder %s22, 0
      %p43 = por %p41, %p42
      %p44 = scmp.ne.s32.totalorder %s30, %s31
      %p45 = scmp.eq.s32.totalorder %s23, 1
      %p46 = por %p44, %p45
      %p48 = scmp.ne.s32.totalorder %s31, %s47
      %p49 = scmp.eq.s32.totalorder %s23, 0
      %p50 = por %p48, %p49
      %s52 = sadd.s32 %s51, 1
      %p55 = scmp.eq.s32.totalorder %s17, 1
      %p56 = scmp.ne.s32.totalorder %s51, %s53
      %p57 = scmp.eq.s32.totalorder %s17, 0
      %p58 = por %p56, %p57
      %p59 = scmp.ne.s32.totalorder %s51, %s53
      %p60 = scmp.eq.s32.totalorder %s22, 1
      %p61 = por %p59, %p60
      %p62 = scmp.ne.s32.totalorder %s53, %s54
      %p63 = scmp.eq.s32.totalorder %s22, 0
      %p64 = por %p62, %p63
      %p65 = scmp.ne.s32.totalorder %s53, %s54
      %p66 = scmp.eq.s32.totalorder %s23, 1
      %p67 = por %p65, %p66
      %p69 = scmp.ne.s32.totalorder %s54, %s68
      %p70 = scmp.eq.s32.totalorder %s23, 0
      %p71 = por %p69, %p70
      %s73 = sadd.s32 %s72, 1
      %p76 = scmp.eq.s32.totalorder %s17, 1
      %p77 = scmp.ne.s32.totalorder %s72, %s74
      %p78 = scmp.eq.s32.totalorder %s17, 0
      %p79 = por %p77, %p78
      %p80 = scmp.ne.s32.totalorder %s72, %s74
      %p81 = scmp.eq.s32.totalorder %s22, 1
      %p82 = por %p80, %p81
      %p83 = scmp.ne.s32.totalorder %s74, %s75
      %p84 = scmp.eq.s32.totalorder %s22, 0
      %p85 = por %p83, %p84
      %p86 = scmp.ne.s32.totalorder %s74, %s75
      %p87 = scmp.eq.s32.totalorder %s23, 1
      %p88 = por %p86, %p87
      %p90 = scmp.ne.s32.totalorder %s75, %s89
      %p91 = scmp.eq.s32.totalorder %s23, 0
      %p92 = por %p90, %p91
      %s94 = sadd.s32 %s93, 1
      %p97 = scmp.eq.s32.totalorder %s17, 1
      %p98 = scmp.ne.s32.totalorder %s93, %s95
      %p99 = scmp.eq.s32.totalorder %s17, 0
      %p100 = por %p98, %p99
      %p101 = scmp.ne.s32.totalorder %s93, %s95
      %p102 = scmp.eq.s32.totalorder %s22, 1
      %p103 = por %p101, %p102
      %p104 = scmp.ne.s32.totalorder %s95, %s96
      %p105 = scmp.eq.s32.totalorder %s22, 0
      %p106 = por %p104, %p105
      %p107 = scmp.ne.s32.totalorder %s95, %s96
      %p108 = scmp.eq.s32.totalorder %s23, 1
      %p109 = por %p107, %p108
      %p111 = scmp.ne.s32.totalorder %s96, %s110
      %p112 = scmp.eq.s32.totalorder %s23, 0
      %p113 = por %p111, %p112
      %s115 = sadd.s32 %s114, 1
      %p118 = scmp.eq.s32.totalorder %s17, 1
      %p119 = scmp.ne.s32.totalorder %s114, %s116
      %p120 = scmp.eq.s32.totalorder %s17, 0
      %p121 = por %p119, %p120
      %p122 = scmp.ne.s32.totalorder %s114, %s116
      %p123 = scmp.eq.s32.totalorder %s22, 1
      %p124 = por %p122, %p123
      %p125 = scmp.ne.s32.totalorder %s116, %s117
      %p126 = scmp.eq.s32.totalorder %s22, 0
      %p127 = por %p125, %p126
      %p128 = scmp.ne.s32.totalorder %s116, %s117
      %p129 = scmp.eq.s32.totalorder %s23, 1
      %p130 = por %p128, %p129
      %p132 = scmp.ne.s32.totalorder %s117, %s131
      %p133 = scmp.eq.s32.totalorder %s23, 0
      %p134 = por %p132, %p133
      %s136 = sadd.s32 %s135, 1
      %p139 = scmp.eq.s32.totalorder %s17, 1
      %p140 = scmp.ne.s32.totalorder %s135, %s137
      %p141 = scmp.eq.s32.totalorder %s17, 0
      %p142 = por %p140, %p141
      %p143 = scmp.ne.s32.totalorder %s135, %s137
      %p144 = scmp.eq.s32.totalorder %s22, 1
      %p145 = por %p143, %p144
      %p146 = scmp.ne.s32.totalorder %s137, %s138
      %p147 = scmp.eq.s32.totalorder %s22, 0
      %p148 = por %p146, %p147
      %p149 = scmp.ne.s32.totalorder %s137, %s138
      %p150 = scmp.eq.s32.totalorder %s23, 1
      %p151 = por %p149, %p150
      %p153 = scmp.ne.s32.totalorder %s138, %s152
      %p154 = scmp.eq.s32.totalorder %s23, 0
      %p155 = por %p153, %p154
      %s157 = sadd.s32 %s156, 1
      %p160 = scmp.eq.s32.totalorder %s17, 1
      %p161 = scmp.ne.s32.totalorder %s156, %s158
      %p162 = scmp.eq.s32.totalorder %s17, 0
      %p163 = por %p161, %p162
      %p164 = scmp.ne.s32.totalorder %s156, %s158
      %p165 = scmp.eq.s32.totalorder %s22, 1
      %p166 = por %p164, %p165
      %p167 = scmp.ne.s32.totalorder %s158, %s159
      %p168 = scmp.eq.s32.totalorder %s22, 0
      %p169 = por %p167, %p168
      %p170 = scmp.ne.s32.totalorder %s158, %s159
      %p171 = scmp.eq.s32.totalorder %s23, 1
      %p172 = por %p170, %p171
      %p174 = scmp.ne.s32.totalorder %s159, %s173
      %p175 = scmp.eq.s32.totalorder %s23, 0
      %p176 = por %p174, %p175
      %s178 = sadd.s32 %s177, 1
      %p181 = scmp.eq.s32.totalorder %s17, 1
      %p182 = scmp.ne.s32.totalorder %s177, %s179
      %p183 = scmp.eq.s32.totalorder %s17, 0
      %p184 = por %p182, %p183
      %p185 = scmp.ne.s32.totalorder %s177, %s179
      %p186 = scmp.eq.s32.totalorder %s22, 1
      %p187 = por %p185, %p186
      %p188 = scmp.ne.s32.totalorder %s179, %s180
      %p189 = scmp.eq.s32.totalorder %s22, 0
      %p190 = por %p188, %p189
      %p191 = scmp.ne.s32.totalorder %s179, %s180
      %p192 = scmp.eq.s32.totalorder %s23, 1
      %p193 = por %p191, %p192
      %p195 = scmp.ne.s32.totalorder %s180, %s194
      %p196 = scmp.eq.s32.totalorder %s23, 0
      %p197 = por %p195, %p196
      %s198 = ssub.s32 %s17, %s24
      %p199 = scmp.eq.s32.totalorder %s198, 0
      %s201 = sadd.s32 %s200, 1
      %s202 = scalar_select %p199, %s200, %s201
      %p205 = pneg %p199
      %p206 = scmp.eq.s32.totalorder %s17, 1
      %p207 = por %p205, %p206
      %p208 = scmp.ne.s32.totalorder %s200, %s203
      %p209 = scmp.eq.s32.totalorder %s17, 0
      %p210 = por %p208, %p209
      %p211 = scmp.ne.s32.totalorder %s200, %s203
      %p212 = scmp.eq.s32.totalorder %s22, 1
      %p213 = por %p211, %p212
      %p214 = scmp.ne.s32.totalorder %s203, %s204
      %p215 = scmp.eq.s32.totalorder %s22, 0
      %p216 = por %p214, %p215
      %p217 = scmp.ne.s32.totalorder %s203, %s204
      %p218 = scmp.eq.s32.totalorder %s23, 1
      %p219 = por %p217, %p218
      %p221 = scmp.ne.s32.totalorder %s204, %s220
      %p222 = scmp.eq.s32.totalorder %s23, 0
      %p223 = por %p221, %p222
      %p224 = scmp.le.s32.totalorder 1, %s17
      %p225 = scmp.lt.s32.totalorder %s17, 3
      %p226 = pnand %p224, %p225
      %p227 = pneg %p226
      // Predicated region
      $region9: #{ppp_forward.9} parent=5 // pred_check
        _
      $region10: #{ppp_forward.9} parent=5 // pred_check_branch
        %229 = sbr.rel (%p226) target = $region12
      $region11: #{ppp_forward.9} parent=5 // pred_region
        %s230 = ssub.s32 %s17, 1
        // Predicated region
        $region13: #{ppp_forward.9} parent=11 // pred_check
          %p231 = pneg %p64
        $region14: #{ppp_forward.9} parent=11 // pred_check_branch
          %233 = sbr.rel (%p231) target = $region16
        $region15: #{ppp_forward.9} parent=11 // pred_region
          %235 = vsyncadd [#allocation3], 0
          %s236 = sshll.u32 %s1, 4
          %s237 = int_to_ptr.hbm [resolvable:$true] %s236
          %s238 = sshll.u32 [#allocation2], 4
          %s239 = int_to_ptr.vmem [resolvable:$true] %s238
          %244 = dma.hbm_to_vmem [thread:$0]  %s237, 6144, %s239, [#allocation3], 384, 384, 24
        $region16: #{ppp_forward.9} parent=11 // pred_fallthru
          _
        // Predicated region
        $region17: #{ppp_forward.9} parent=11 // pred_check
          %p245 = pneg %p85
        $region18: #{ppp_forward.9} parent=11 // pred_check_branch
          %247 = sbr.rel (%p245) target = $region20
        $region19: #{ppp_forward.9} parent=11 // pred_region
          %249 = vsyncadd [#allocation5], 0
          %s250 = sshll.u32 %s2, 4
          %s251 = int_to_ptr.hbm [resolvable:$true] %s250
          %s252 = sshll.u32 [#allocation4], 4
          %s253 = int_to_ptr.vmem [resolvable:$true] %s252
          %258 = dma.hbm_to_vmem [thread:$0]  %s251, 2048, %s253, [#allocation5], 128, 128, 8
        $region20: #{ppp_forward.9} parent=11 // pred_fallthru
          _
        // Predicated region
        $region21: #{ppp_forward.9} parent=11 // pred_check
          %p259 = pneg %p106
        $region22: #{ppp_forward.9} parent=11 // pred_check_branch
          %261 = sbr.rel (%p259) target = $region24
        $region23: #{ppp_forward.9} parent=11 // pred_region
          _
        $region24: #{ppp_forward.9} parent=11 // pred_fallthru
          _
        // Predicated region
        $region25: #{ppp_forward.9} parent=11 // pred_check
          %p262 = pneg %p127
        $region26: #{ppp_forward.9} parent=11 // pred_check_branch
          %264 = sbr.rel (%p262) target = $region28
        $region27: #{ppp_forward.9} parent=11 // pred_region
          %266 = vsyncadd [#allocation5], 0
          %s267 = sshll.u32 %s4, 4
          %s268 = int_to_ptr.hbm [resolvable:$true] %s267
          %s269 = sshll.u32 [#allocation6], 4
          %s270 = int_to_ptr.vmem [resolvable:$true] %s269
          %275 = dma.hbm_to_vmem [thread:$0]  %s268, 4096, %s270, [#allocation5], 256, 256, 16
        $region28: #{ppp_forward.9} parent=11 // pred_fallthru
          _
        // Predicated region
        $region29: #{ppp_forward.9} parent=11 // pred_check
          %p276 = pneg %p148
        $region30: #{ppp_forward.9} parent=11 // pred_check_branch
          %278 = sbr.rel (%p276) target = $region32
        $region31: #{ppp_forward.9} parent=11 // pred_region
          _
        $region32: #{ppp_forward.9} parent=11 // pred_fallthru
          _
        // Predicated region
        $region33: #{ppp_forward.9} parent=11 // pred_check
          %p279 = pneg %p169
        $region34: #{ppp_forward.9} parent=11 // pred_check_branch
          %281 = sbr.rel (%p279) target = $region36
        $region35: #{ppp_forward.9} parent=11 // pred_region
          %283 = vsyncadd [#allocation8], 0
          %s284 = sshll.u32 %s6, 4
          %s285 = int_to_ptr.hbm [resolvable:$true] %s284
          %s286 = sshll.u32 [#allocation7], 4
          %s287 = int_to_ptr.vmem [resolvable:$true] %s286
          %292 = dma.hbm_to_vmem [thread:$0]  %s285, 4096, %s287, [#allocation8], 128, 128, 8
        $region36: #{ppp_forward.9} parent=11 // pred_fallthru
          _
        // Predicated region
        $region37: #{ppp_forward.9} parent=11 // pred_check
          %p293 = pneg %p190
        $region38: #{ppp_forward.9} parent=11 // pred_check_branch
          %295 = sbr.rel (%p293) target = $region40
        $region39: #{ppp_forward.9} parent=11 // pred_region
          _
        $region40: #{ppp_forward.9} parent=11 // pred_fallthru
          _
      $region12: #{ppp_forward.9} parent=5 // pred_fallthru
        _
      %p296 = scmp.lt.s32.totalorder %s17, 2
      // Predicated region
      $region41: #{ppp_forward.9} parent=5 // pred_check
        %p297 = pneg %p296
      $region42: #{ppp_forward.9} parent=5 // pred_check_branch
        %299 = sbr.rel (%p297) target = $region44
      $region43: #{ppp_forward.9} parent=5 // pred_region
        // Predicated region
        $region45: #{ppp_forward.9} parent=43 // pred_check
          %p300 = pneg %p37
        $region46: #{ppp_forward.9} parent=43 // pred_check_branch
          %302 = sbr.rel (%p300) target = $region48
        $region47: #{ppp_forward.9} parent=43 // pred_region
          %p303 = scmp.lt.s32.totalorder %s17, 1
          %s304 = scalar_select %p303, %s17, 1
          %s305 = smul.addr %s304, 2
          %s306 = smul.addr %s305, 8
          %s307 = scalar_lea.vmem %s0, %s306
        $region48: #{ppp_forward.9} parent=43 // pred_fallthru
          _
      $region44: #{ppp_forward.9} parent=5 // pred_fallthru
        _
      %p308 = scmp.le.s32.totalorder 1, %s17
      %p309 = scmp.lt.s32.totalorder %s17, 3
      %p310 = pnand %p308, %p309
      %p311 = pneg %p310
      // Predicated region
      $region49: #{ppp_forward.9} parent=5 // pred_check
        _
      $region50: #{ppp_forward.9} parent=5 // pred_check_branch
        %313 = sbr.rel (%p310) target = $region52
      $region51: #{ppp_forward.9} parent=5 // pred_region
        %s314 = ssub.s32 %s17, 1
        // Predicated region
        $region53: #{ppp_forward.9} parent=51 // pred_check
          %p315 = pneg %p64
        $region54: #{ppp_forward.9} parent=51 // pred_check_branch
          %317 = sbr.rel (%p315) target = $region56
        $region55: #{ppp_forward.9} parent=51 // pred_region
          %319 = dma.done [#allocation3], 6144
        $region56: #{ppp_forward.9} parent=51 // pred_fallthru
          _
        // Predicated region
        $region57: #{ppp_forward.9} parent=51 // pred_check
          %p320 = pneg %p85
        $region58: #{ppp_forward.9} parent=51 // pred_check_branch
          %322 = sbr.rel (%p320) target = $region60
        $region59: #{ppp_forward.9} parent=51 // pred_region
          %324 = dma.done [#allocation5], 2048
        $region60: #{ppp_forward.9} parent=51 // pred_fallthru
          _
        // Predicated region
        $region61: #{ppp_forward.9} parent=51 // pred_check
          %p325 = pneg %p127
        $region62: #{ppp_forward.9} parent=51 // pred_check_branch
          %327 = sbr.rel (%p325) target = $region64
        $region63: #{ppp_forward.9} parent=51 // pred_region
          %329 = dma.done [#allocation5], 4096
        $region64: #{ppp_forward.9} parent=51 // pred_fallthru
          _
        // Predicated region
        $region65: #{ppp_forward.9} parent=51 // pred_check
          %p330 = pneg %p169
        $region66: #{ppp_forward.9} parent=51 // pred_check_branch
          %332 = sbr.rel (%p330) target = $region68
        $region67: #{ppp_forward.9} parent=51 // pred_region
          %334 = dma.done [#allocation8], 4096
        $region68: #{ppp_forward.9} parent=51 // pred_fallthru
          _
        %p335 = scmp.lt.s32.totalorder %s22, 1
        %s336 = scalar_select %p335, %s22, 1
        %s337 = smul.addr %s336, 2
        %s338 = smul.addr %s337, 8
        %s339 = scalar_lea.vmem %s0, %s338
        %p340 = pneg %p43
        %p341 = pneg %p40
        %p342 = pneg %p64
        %p343 = pneg %p61
        %p344 = pneg %p85
        %p345 = pneg %p82
        %p346 = pneg %p106
        %p347 = pneg %p103
        %p348 = pneg %p127
        %p349 = pneg %p124
        %p350 = pneg %p148
        %p351 = pneg %p145
        %p352 = pneg %p169
        %p353 = pneg %p166
        %p354 = pneg %p190
        %p355 = pneg %p187
        %p356 = pneg %p216
        %p357 = pneg %p213
        %p358 = scmp.lt.s32.totalorder %s22, 1
        %s359 = scalar_select %p358, %s22, 1
        %s360 = smul.addr %s359, 2
        %s361 = smul.addr %s360, 8
        %s362 = scalar_lea.vmem %s8, %s361
        %p363 = scmp.lt.s32.totalorder %s22, 1
        %s364 = scalar_select %p363, %s22, 1
        %s365 = smul.addr %s364, 2
        %s366 = smul.addr %s365, 8
        %s367 = scalar_lea.vmem %s0, %s366
        %p368 = scmp.lt.s32.totalorder %s22, 1
        %s369 = scalar_select %p368, %s22, 1
        %s370 = smul.addr %s369, 2
        %s371 = smul.addr %s370, 8
        %s372 = scalar_lea.vmem %s8, %s371
        %v373 = vld [vmem:[%s367] sm:$0xff]
        %v374 = vld [vmem:[%s367 + $0x8] sm:$0xff]
        %v375 = vld [vmem:[#allocation2] sm:$0xff]
        %v376 = vld [vmem:[#allocation2 + $0x8] sm:$0xff]
        %v377 = vld [vmem:[#allocation2 + $0x10] sm:$0xff]
        %v378 = vld [vmem:[#allocation2 + $0x18] sm:$0xff]
        %v379 = vld [vmem:[#allocation2 + $0x20] sm:$0xff]
        %v380 = vld [vmem:[#allocation2 + $0x28] sm:$0xff]
        %v381 = vld [vmem:[#allocation2 + $0x30] sm:$0xff]
        %v382 = vld [vmem:[#allocation2 + $0x38] sm:$0xff]
        %v383 = vld [vmem:[#allocation2 + $0x40] sm:$0xff]
        %v384 = vld [vmem:[#allocation2 + $0x48] sm:$0xff]
        %v385 = vld [vmem:[#allocation2 + $0x50] sm:$0xff]
        %v386 = vld [vmem:[#allocation2 + $0x58] sm:$0xff]
        %v387 = vld [vmem:[#allocation2 + $0x60] sm:$0xff]
        %v388 = vld [vmem:[#allocation2 + $0x68] sm:$0xff]
        %v389 = vld [vmem:[#allocation2 + $0x70] sm:$0xff]
        %v390 = vld [vmem:[#allocation2 + $0x78] sm:$0xff]
        %v391 = vld [vmem:[#allocation2 + $0x80] sm:$0xff]
        %v392 = vld [vmem:[#allocation2 + $0x88] sm:$0xff]
        %v393 = vld [vmem:[#allocation2 + $0x90] sm:$0xff]
        %v394 = vld [vmem:[#allocation2 + $0x98] sm:$0xff]
        %v395 = vld [vmem:[#allocation2 + $0xa0] sm:$0xff]
        %v396 = vld [vmem:[#allocation2 + $0xa8] sm:$0xff]
        %v397 = vld [vmem:[#allocation2 + $0xb0] sm:$0xff]
        %v398 = vld [vmem:[#allocation2 + $0xb8] sm:$0xff]
        %v399 = vld [vmem:[#allocation2 + $0xc0] sm:$0xff]
        %v400 = vld [vmem:[#allocation2 + $0xc8] sm:$0xff]
        %v401 = vld [vmem:[#allocation2 + $0xd0] sm:$0xff]
        %v402 = vld [vmem:[#allocation2 + $0xd8] sm:$0xff]
        %v403 = vld [vmem:[#allocation2 + $0xe0] sm:$0xff]
        %v404 = vld [vmem:[#allocation2 + $0xe8] sm:$0xff]
        %v405 = vld [vmem:[#allocation2 + $0xf0] sm:$0xff]
        %v406 = vld [vmem:[#allocation2 + $0xf8] sm:$0xff]
        %v407 = vld [vmem:[#allocation2 + $0x100] sm:$0xff]
        %v408 = vld [vmem:[#allocation2 + $0x108] sm:$0xff]
        %v409 = vld [vmem:[#allocation2 + $0x110] sm:$0xff]
        %v410 = vld [vmem:[#allocation2 + $0x118] sm:$0xff]
        %v411 = vld [vmem:[#allocation2 + $0x120] sm:$0xff]
        %v412 = vld [vmem:[#allocation2 + $0x128] sm:$0xff]
        %v413 = vld [vmem:[#allocation2 + $0x130] sm:$0xff]
        %v414 = vld [vmem:[#allocation2 + $0x138] sm:$0xff]
        %v415 = vld [vmem:[#allocation2 + $0x140] sm:$0xff]
        %v416 = vld [vmem:[#allocation2 + $0x148] sm:$0xff]
        %v417 = vld [vmem:[#allocation2 + $0x150] sm:$0xff]
        %v418 = vld [vmem:[#allocation2 + $0x158] sm:$0xff]
        %v419 = vld [vmem:[#allocation2 + $0x160] sm:$0xff]
        %v420 = vld [vmem:[#allocation2 + $0x168] sm:$0xff]
        %v421 = vld [vmem:[#allocation2 + $0x170] sm:$0xff]
        %v422 = vld [vmem:[#allocation2 + $0x178] sm:$0xff]
        %423 = vmatpush.msra.mxu0 %v420
        %424 = vmatpush.msra.mxu0 %v417
        %425 = vmatpush.msra.mxu0 %v414
        %426 = vmatpush.msra.mxu0 %v411
        %427 = vmatpush.msra.mxu0 %v408
        %428 = vmatpush.msra.mxu0 %v405
        %429 = vmatpush.msra.mxu0 %v402
        %430 = vmatpush.msra.mxu0 %v399
        %431 = vmatpush.msra.mxu0 %v396
        %432 = vmatpush.msra.mxu0 %v393
        %433 = vmatpush.msra.mxu0 %v390
        %434 = vmatpush.msra.mxu0 %v387
        %435 = vmatpush.msra.mxu0 %v384
        %436 = vmatpush.msra.mxu0 %v381
        %437 = vmatpush.msra.mxu0 %v378
        %438 = vmatpush.msra.mxu0 %v375
        %439 = vmatmul.f32.gmra.mxu0 %v373
        %v440 = vpop.f32.mrf.mxu0
        %v441 = vadd.f32 0.0, %v440
        %442 = vmatmul.f32.gmra.mxu0 %v374
        %v443 = vpop.f32.mrf.mxu0
        %v444 = vadd.f32 0.0, %v443
        %445 = vdwg.mxu0
        %446 = vmatpush.msra.mxu0 %v421
        %447 = vmatpush.msra.mxu0 %v418
        %448 = vmatpush.msra.mxu0 %v415
        %449 = vmatpush.msra.mxu0 %v412
        %450 = vmatpush.msra.mxu0 %v409
        %451 = vmatpush.msra.mxu0 %v406
        %452 = vmatpush.msra.mxu0 %v403
        %453 = vmatpush.msra.mxu0 %v400
        %454 = vmatpush.msra.mxu0 %v397
        %455 = vmatpush.msra.mxu0 %v394
        %456 = vmatpush.msra.mxu0 %v391
        %457 = vmatpush.msra.mxu0 %v388
        %458 = vmatpush.msra.mxu0 %v385
        %459 = vmatpush.msra.mxu0 %v382
        %460 = vmatpush.msra.mxu0 %v379
        %461 = vmatpush.msra.mxu0 %v376
        %462 = vmatmul.f32.gmra.mxu0 %v373
        %v463 = vpop.f32.mrf.mxu0
        %v464 = vadd.f32 0.0, %v463
        %465 = vmatmul.f32.gmra.mxu0 %v374
        %v466 = vpop.f32.mrf.mxu0
        %v467 = vadd.f32 0.0, %v466
        %468 = vdwg.mxu0
        %469 = vmatpush.msra.mxu0 %v422
        %470 = vmatpush.msra.mxu0 %v419
        %471 = vmatpush.msra.mxu0 %v416
        %472 = vmatpush.msra.mxu0 %v413
        %473 = vmatpush.msra.mxu0 %v410
        %474 = vmatpush.msra.mxu0 %v407
        %475 = vmatpush.msra.mxu0 %v404
        %476 = vmatpush.msra.mxu0 %v401
        %477 = vmatpush.msra.mxu0 %v398
        %478 = vmatpush.msra.mxu0 %v395
        %479 = vmatpush.msra.mxu0 %v392
        %480 = vmatpush.msra.mxu0 %v389
        %481 = vmatpush.msra.mxu0 %v386
        %482 = vmatpush.msra.mxu0 %v383
        %483 = vmatpush.msra.mxu0 %v380
        %484 = vmatpush.msra.mxu0 %v377
        %485 = vmatmul.f32.gmra.mxu0 %v373
        %v486 = vpop.f32.mrf.mxu0
        %v487 = vadd.f32 0.0, %v486
        %488 = vmatmul.f32.gmra.mxu0 %v374
        %v489 = vpop.f32.mrf.mxu0
        %v490 = vadd.f32 0.0, %v489
        %491 = vdwg.mxu0
        %492 = vxpose.xlu0.b32.start [1/16] %v441, 128
        %493 = vxpose.xlu0.b32.cont [2/16] %v444, 128
        %494 = vxpose.xlu0.b32.cont [3/16] 0.0, 128
        %495 = vxpose.xlu0.b32.cont [4/16] 0.0, 128
        %496 = vxpose.xlu0.b32.cont [5/16] 0.0, 128
        %497 = vxpose.xlu0.b32.cont [6/16] 0.0, 128
        %498 = vxpose.xlu0.b32.cont [7/16] 0.0, 128
        %499 = vxpose.xlu0.b32.cont [8/16] 0.0, 128
        %500 = vxpose.xlu0.b32.cont [9/16] 0.0, 128
        %501 = vxpose.xlu0.b32.cont [10/16] 0.0, 128
        %502 = vxpose.xlu0.b32.cont [11/16] 0.0, 128
        %503 = vxpose.xlu0.b32.cont [12/16] 0.0, 128
        %504 = vxpose.xlu0.b32.cont [13/16] 0.0, 128
        %505 = vxpose.xlu0.b32.cont [14/16] 0.0, 128
        %506 = vxpose.xlu0.b32.cont [15/16] 0.0, 128
        %507 = vxpose.xlu0.b32.end [16/16] 0.0, 128
        %v508 = vpop.trf.xlu0
        %v509 = vpop.trf.xlu0
        %v510 = vpop.trf.xlu0
        %v511 = vpop.trf.xlu0
        %v512 = vpop.trf.xlu0
        %v513 = vpop.trf.xlu0
        %v514 = vpop.trf.xlu0
        %v515 = vpop.trf.xlu0
        %v516 = vpop.trf.xlu0
        %v517 = vpop.trf.xlu0
        %v518 = vpop.trf.xlu0
        %v519 = vpop.trf.xlu0
        %v520 = vpop.trf.xlu0
        %v521 = vpop.trf.xlu0
        %v522 = vpop.trf.xlu0
        %v523 = vpop.trf.xlu0
        %524 = vxpose.xlu0.b32.start [1/16] %v464, 128
        %525 = vxpose.xlu0.b32.cont [2/16] %v467, 128
        %526 = vxpose.xlu0.b32.cont [3/16] 0.0, 128
        %527 = vxpose.xlu0.b32.cont [4/16] 0.0, 128
        %528 = vxpose.xlu0.b32.cont [5/16] 0.0, 128
        %529 = vxpose.xlu0.b32.cont [6/16] 0.0, 128
        %530 = vxpose.xlu0.b32.cont [7/16] 0.0, 128
        %531 = vxpose.xlu0.b32.cont [8/16] 0.0, 128
        %532 = vxpose.xlu0.b32.cont [9/16] 0.0, 128
        %533 = vxpose.xlu0.b32.cont [10/16] 0.0, 128
        %534 = vxpose.xlu0.b32.cont [11/16] 0.0, 128
        %535 = vxpose.xlu0.b32.cont [12/16] 0.0, 128
        %536 = vxpose.xlu0.b32.cont [13/16] 0.0, 128
        %537 = vxpose.xlu0.b32.cont [14/16] 0.0, 128
        %538 = vxpose.xlu0.b32.cont [15/16] 0.0, 128
        %539 = vxpose.xlu0.b32.end [16/16] 0.0, 128
        %v540 = vpop.trf.xlu0
        %v541 = vpop.trf.xlu0
        %v542 = vpop.trf.xlu0
        %v543 = vpop.trf.xlu0
        %v544 = vpop.trf.xlu0
        %v545 = vpop.trf.xlu0
        %v546 = vpop.trf.xlu0
        %v547 = vpop.trf.xlu0
        %v548 = vpop.trf.xlu0
        %v549 = vpop.trf.xlu0
        %v550 = vpop.trf.xlu0
        %v551 = vpop.trf.xlu0
        %v552 = vpop.trf.xlu0
        %v553 = vpop.trf.xlu0
        %v554 = vpop.trf.xlu0
        %v555 = vpop.trf.xlu0
        %556 = vxpose.xlu0.b32.start [1/16] %v487, 128
        %557 = vxpose.xlu0.b32.cont [2/16] %v490, 128
        %558 = vxpose.xlu0.b32.cont [3/16] 0.0, 128
        %559 = vxpose.xlu0.b32.cont [4/16] 0.0, 128
        %560 = vxpose.xlu0.b32.cont [5/16] 0.0, 128
        %561 = vxpose.xlu0.b32.cont [6/16] 0.0, 128
        %562 = vxpose.xlu0.b32.cont [7/16] 0.0, 128
        %563 = vxpose.xlu0.b32.cont [8/16] 0.0, 128
        %564 = vxpose.xlu0.b32.cont [9/16] 0.0, 128
        %565 = vxpose.xlu0.b32.cont [10/16] 0.0, 128
        %566 = vxpose.xlu0.b32.cont [11/16] 0.0, 128
        %567 = vxpose.xlu0.b32.cont [12/16] 0.0, 128
        %568 = vxpose.xlu0.b32.cont [13/16] 0.0, 128
        %569 = vxpose.xlu0.b32.cont [14/16] 0.0, 128
        %570 = vxpose.xlu0.b32.cont [15/16] 0.0, 128
        %571 = vxpose.xlu0.b32.end [16/16] 0.0, 128
        %v572 = vpop.trf.xlu0
        %v573 = vpop.trf.xlu0
        %v574 = vpop.trf.xlu0
        %v575 = vpop.trf.xlu0
        %v576 = vpop.trf.xlu0
        %v577 = vpop.trf.xlu0
        %v578 = vpop.trf.xlu0
        %v579 = vpop.trf.xlu0
        %v580 = vpop.trf.xlu0
        %v581 = vpop.trf.xlu0
        %v582 = vpop.trf.xlu0
        %v583 = vpop.trf.xlu0
        %v584 = vpop.trf.xlu0
        %v585 = vpop.trf.xlu0
        %v586 = vpop.trf.xlu0
        %v587 = vpop.trf.xlu0
        %588 = vxpose.xlu0.b32.start [1/16] %v508, 128
        %589 = vxpose.xlu0.b32.cont [2/16] %v509, 128
        %590 = vxpose.xlu0.b32.cont [3/16] %v510, 128
        %591 = vxpose.xlu0.b32.cont [4/16] %v511, 128
        %592 = vxpose.xlu0.b32.cont [5/16] 0.0, 128
        %593 = vxpose.xlu0.b32.cont [6/16] 0.0, 128
        %594 = vxpose.xlu0.b32.cont [7/16] 0.0, 128
        %595 = vxpose.xlu0.b32.cont [8/16] 0.0, 128
        %596 = vxpose.xlu0.b32.cont [9/16] 0.0, 128
        %597 = vxpose.xlu0.b32.cont [10/16] 0.0, 128
        %598 = vxpose.xlu0.b32.cont [11/16] 0.0, 128
        %599 = vxpose.xlu0.b32.cont [12/16] 0.0, 128
        %600 = vxpose.xlu0.b32.cont [13/16] 0.0, 128
        %601 = vxpose.xlu0.b32.cont [14/16] 0.0, 128
        %602 = vxpose.xlu0.b32.cont [15/16] 0.0, 128
        %603 = vxpose.xlu0.b32.end [16/16] 0.0, 128
        %v604 = vpop.trf.xlu0
        %v605 = vpop.trf.xlu0
        %v606 = vpop.trf.xlu0
        %v607 = vpop.trf.xlu0
        %v608 = vpop.trf.xlu0
        %v609 = vpop.trf.xlu0
        %v610 = vpop.trf.xlu0
        %v611 = vpop.trf.xlu0
        %v612 = vpop.trf.xlu0
        %v613 = vpop.trf.xlu0
        %v614 = vpop.trf.xlu0
        %v615 = vpop.trf.xlu0
        %v616 = vpop.trf.xlu0
        %v617 = vpop.trf.xlu0
        %v618 = vpop.trf.xlu0
        %v619 = vpop.trf.xlu0
        %620 = vxpose.xlu0.b32.start [1/16] %v512, 128
        %621 = vxpose.xlu0.b32.cont [2/16] %v513, 128
        %622 = vxpose.xlu0.b32.cont [3/16] %v514, 128
        %623 = vxpose.xlu0.b32.cont [4/16] %v515, 128
        %624 = vxpose.xlu0.b32.cont [5/16] 0.0, 128
        %625 = vxpose.xlu0.b32.cont [6/16] 0.0, 128
        %626 = vxpose.xlu0.b32.cont [7/16] 0.0, 128
        %627 = vxpose.xlu0.b32.cont [8/16] 0.0, 128
        %628 = vxpose.xlu0.b32.cont [9/16] 0.0, 128
        %629 = vxpose.xlu0.b32.cont [10/16] 0.0, 128
        %630 = vxpose.xlu0.b32.cont [11/16] 0.0, 128
        %631 = vxpose.xlu0.b32.cont [12/16] 0.0, 128
        %632 = vxpose.xlu0.b32.cont [13/16] 0.0, 128
        %633 = vxpose.xlu0.b32.cont [14/16] 0.0, 128
        %634 = vxpose.xlu0.b32.cont [15/16] 0.0, 128
        %635 = vxpose.xlu0.b32.end [16/16] 0.0, 128
        %v636 = vpop.trf.xlu0
        %v637 = vpop.trf.xlu0
        %v638 = vpop.trf.xlu0
        %v639 = vpop.trf.xlu0
        %v640 = vpop.trf.xlu0
        %v641 = vpop.trf.xlu0
        %v642 = vpop.trf.xlu0
        %v643 = vpop.trf.xlu0
        %v644 = vpop.trf.xlu0
        %v645 = vpop.trf.xlu0
        %v646 = vpop.trf.xlu0
        %v647 = vpop.trf.xlu0
        %v648 = vpop.trf.xlu0
        %v649 = vpop.trf.xlu0
        %v650 = vpop.trf.xlu0
        %v651 = vpop.trf.xlu0
        %652 = vxpose.xlu0.b32.start [1/16] %v516, 128
        %653 = vxpose.xlu0.b32.cont [2/16] %v517, 128
        %654 = vxpose.xlu0.b32.cont [3/16] %v518, 128
        %655 = vxpose.xlu0.b32.cont [4/16] %v519, 128
        %656 = vxpose.xlu0.b32.cont [5/16] 0.0, 128
        %657 = vxpose.xlu0.b32.cont [6/16] 0.0, 128
        %658 = vxpose.xlu0.b32.cont [7/16] 0.0, 128
        %659 = vxpose.xlu0.b32.cont [8/16] 0.0, 128
        %660 = vxpose.xlu0.b32.cont [9/16] 0.0, 128
        %661 = vxpose.xlu0.b32.cont [10/16] 0.0, 128
        %662 = vxpose.xlu0.b32.cont [11/16] 0.0, 128
        %663 = vxpose.xlu0.b32.cont [12/16] 0.0, 128
        %664 = vxpose.xlu0.b32.cont [13/16] 0.0, 128
        %665 = vxpose.xlu0.b32.cont [14/16] 0.0, 128
        %666 = vxpose.xlu0.b32.cont [15/16] 0.0, 128
        %667 = vxpose.xlu0.b32.end [16/16] 0.0, 128
        %v668 = vpop.trf.xlu0
        %v669 = vpop.trf.xlu0
        %v670 = vpop.trf.xlu0
        %v671 = vpop.trf.xlu0
        %v672 = vpop.trf.xlu0
        %v673 = vpop.trf.xlu0
        %v674 = vpop.trf.xlu0
        %v675 = vpop.trf.xlu0
        %v676 = vpop.trf.xlu0
        %v677 = vpop.trf.xlu0
        %v678 = vpop.trf.xlu0
        %v679 = vpop.trf.xlu0
        %v680 = vpop.trf.xlu0
        %v681 = vpop.trf.xlu0
        %v682 = vpop.trf.xlu0
        %v683 = vpop.trf.xlu0
        %684 = vxpose.xlu0.b32.start [1/16] %v520, 128
        %685 = vxpose.xlu0.b32.cont [2/16] %v521, 128
        %686 = vxpose.xlu0.b32.cont [3/16] %v522, 128
        %687 = vxpose.xlu0.b32.cont [4/16] %v523, 128
        %688 = vxpose.xlu0.b32.cont [5/16] 0.0, 128
        %689 = vxpose.xlu0.b32.cont [6/16] 0.0, 128
        %690 = vxpose.xlu0.b32.cont [7/16] 0.0, 128
        %691 = vxpose.xlu0.b32.cont [8/16] 0.0, 128
        %692 = vxpose.xlu0.b32.cont [9/16] 0.0, 128
        %693 = vxpose.xlu0.b32.cont [10/16] 0.0, 128
        %694 = vxpose.xlu0.b32.cont [11/16] 0.0, 128
        %695 = vxpose.xlu0.b32.cont [12/16] 0.0, 128
        %696 = vxpose.xlu0.b32.cont [13/16] 0.0, 128
        %697 = vxpose.xlu0.b32.cont [14/16] 0.0, 128
        %698 = vxpose.xlu0.b32.cont [15/16] 0.0, 128
        %699 = vxpose.xlu0.b32.end [16/16] 0.0, 128
        %v700 = vpop.trf.xlu0
        %v701 = vpop.trf.xlu0
        %v702 = vpop.trf.xlu0
        %v703 = vpop.trf.xlu0
        %v704 = vpop.trf.xlu0
        %v705 = vpop.trf.xlu0
        %v706 = vpop.trf.xlu0
        %v707 = vpop.trf.xlu0
        %v708 = vpop.trf.xlu0
        %v709 = vpop.trf.xlu0
        %v710 = vpop.trf.xlu0
        %v711 = vpop.trf.xlu0
        %v712 = vpop.trf.xlu0
        %v713 = vpop.trf.xlu0
        %v714 = vpop.trf.xlu0
        %v715 = vpop.trf.xlu0
        %v716 = vmul.f32 %v604, 0.17677669
        %v717 = vmul.f32 %v605, 0.17677669
        %v718 = vmul.f32 %v636, 0.17677669
        %v719 = vmul.f32 %v637, 0.17677669
        %v720 = vmul.f32 %v668, 0.17677669
        %v721 = vmul.f32 %v669, 0.17677669
        %v722 = vmul.f32 %v700, 0.17677669
        %v723 = vmul.f32 %v701, 0.17677669
        %vm724 = vcmask 261120
        %v726 = vsel %vm724, %v716, 0
        %v729 = vsel %vm724, %v717, 0
        %731 = vmatpush.msra.mxu0 0.0
        %732 = vmatpush.msra.mxu0 0.0
        %733 = vmatpush.msra.mxu0 0.0
        %734 = vmatpush.msra.mxu0 0.0
        %735 = vmatpush.msra.mxu0 0.0
        %736 = vmatpush.msra.mxu0 0.0
        %737 = vmatpush.msra.mxu0 0.0
        %738 = vmatpush.msra.mxu0 0.0
        %739 = vmatpush.msra.mxu0 0.0
        %740 = vmatpush.msra.mxu0 0.0
        %741 = vmatpush.msra.mxu0 0.0
        %742 = vmatpush.msra.mxu0 0.0
        %743 = vmatpush.msra.mxu0 %v543
        %744 = vmatpush.msra.mxu0 %v542
        %745 = vmatpush.msra.mxu0 %v541
        %746 = vmatpush.msra.mxu0 %v540
        %747 = vmatmul.f32.gmra.mxu0 %v726
        %v748 = vpop.f32.mrf.mxu0
        %v749 = vadd.f32 0.0, %v748
        %750 = vmatmul.f32.gmra.mxu0 %v729
        %v751 = vpop.f32.mrf.mxu0
        %v752 = vadd.f32 0.0, %v751
        %753 = vdwg.mxu0
        %v755 = vsel %vm724, %v718, 0
        %v758 = vsel %vm724, %v719, 0
        %760 = vmatpush.msra.mxu0 0.0
        %761 = vmatpush.msra.mxu0 0.0
        %762 = vmatpush.msra.mxu0 0.0
        %763 = vmatpush.msra.mxu0 0.0
        %764 = vmatpush.msra.mxu0 0.0
        %765 = vmatpush.msra.mxu0 0.0
        %766 = vmatpush.msra.mxu0 0.0
        %767 = vmatpush.msra.mxu0 0.0
        %768 = vmatpush.msra.mxu0 0.0
        %769 = vmatpush.msra.mxu0 0.0
        %770 = vmatpush.msra.mxu0 0.0
        %771 = vmatpush.msra.mxu0 0.0
        %772 = vmatpush.msra.mxu0 %v547
        %773 = vmatpush.msra.mxu0 %v546
        %774 = vmatpush.msra.mxu0 %v545
        %775 = vmatpush.msra.mxu0 %v544
        %776 = vmatmul.f32.gmra.mxu0 %v755
        %v777 = vpop.f32.mrf.mxu0
        %v778 = vadd.f32 0.0, %v777
        %779 = vmatmul.f32.gmra.mxu0 %v758
        %v780 = vpop.f32.mrf.mxu0
        %v781 = vadd.f32 0.0, %v780
        %782 = vdwg.mxu0
        %v784 = vsel %vm724, %v720, 0
        %v787 = vsel %vm724, %v721, 0
        %789 = vmatpush.msra.mxu0 0.0
        %790 = vmatpush.msra.mxu0 0.0
        %791 = vmatpush.msra.mxu0 0.0
        %792 = vmatpush.msra.mxu0 0.0
        %793 = vmatpush.msra.mxu0 0.0
        %794 = vmatpush.msra.mxu0 0.0
        %795 = vmatpush.msra.mxu0 0.0
        %796 = vmatpush.msra.mxu0 0.0
        %797 = vmatpush.msra.mxu0 0.0
        %798 = vmatpush.msra.mxu0 0.0
        %799 = vmatpush.msra.mxu0 0.0
        %800 = vmatpush.msra.mxu0 0.0
        %801 = vmatpush.msra.mxu0 %v551
        %802 = vmatpush.msra.mxu0 %v550
        %803 = vmatpush.msra.mxu0 %v549
        %804 = vmatpush.msra.mxu0 %v548
        %805 = vmatmul.f32.gmra.mxu0 %v784
        %v806 = vpop.f32.mrf.mxu0
        %v807 = vadd.f32 0.0, %v806
        %808 = vmatmul.f32.gmra.mxu0 %v787
        %v809 = vpop.f32.mrf.mxu0
        %v810 = vadd.f32 0.0, %v809
        %811 = vdwg.mxu0
        %v813 = vsel %vm724, %v722, 0
        %v816 = vsel %vm724, %v723, 0
        %818 = vmatpush.msra.mxu0 0.0
        %819 = vmatpush.msra.mxu0 0.0
        %820 = vmatpush.msra.mxu0 0.0
        %821 = vmatpush.msra.mxu0 0.0
        %822 = vmatpush.msra.mxu0 0.0
        %823 = vmatpush.msra.mxu0 0.0
        %824 = vmatpush.msra.mxu0 0.0
        %825 = vmatpush.msra.mxu0 0.0
        %826 = vmatpush.msra.mxu0 0.0
        %827 = vmatpush.msra.mxu0 0.0
        %828 = vmatpush.msra.mxu0 0.0
        %829 = vmatpush.msra.mxu0 0.0
        %830 = vmatpush.msra.mxu0 %v555
        %831 = vmatpush.msra.mxu0 %v554
        %832 = vmatpush.msra.mxu0 %v553
        %833 = vmatpush.msra.mxu0 %v552
        %834 = vmatmul.f32.gmra.mxu0 %v813
        %v835 = vpop.f32.mrf.mxu0
        %v836 = vadd.f32 0.0, %v835
        %837 = vmatmul.f32.gmra.mxu0 %v816
        %v838 = vpop.f32.mrf.mxu0
        %v839 = vadd.f32 0.0, %v838
        %840 = vdwg.mxu0
        %vm841 = vcmask 130048
        %v842 = vsel %vm841, %v749, -inf
        %843 = vmax.xlane.f32.xlu0 %v842
        %v844 = vpop.xlane.xlu0 %843
        %v845 = vsel %vm841, %v752, -inf
        %846 = vmax.xlane.f32.xlu0 %v845
        %v847 = vpop.xlane.xlu0 %846
        %v848 = vsel %vm841, %v778, -inf
        %849 = vmax.xlane.f32.xlu0 %v848
        %v850 = vpop.xlane.xlu0 %849
        %v851 = vsel %vm841, %v781, -inf
        %852 = vmax.xlane.f32.xlu0 %v851
        %v853 = vpop.xlane.xlu0 %852
        %v854 = vsel %vm841, %v807, -inf
        %855 = vmax.xlane.f32.xlu0 %v854
        %v856 = vpop.xlane.xlu0 %855
        %v857 = vsel %vm841, %v810, -inf
        %858 = vmax.xlane.f32.xlu0 %v857
        %v859 = vpop.xlane.xlu0 %858
        %v860 = vsel %vm841, %v836, -inf
        %861 = vmax.xlane.f32.xlu0 %v860
        %v862 = vpop.xlane.xlu0 %861
        %v863 = vsel %vm841, %v839, -inf
        %864 = vmax.xlane.f32.xlu0 %v863
        %v865 = vpop.xlane.xlu0 %864
        %v866 = vsub.f32 %v749, %v844
        %v867 = vsub.f32 %v752, %v847
        %v868 = vsub.f32 %v778, %v850
        %v869 = vsub.f32 %v781, %v853
        %v870 = vsub.f32 %v807, %v856
        %v871 = vsub.f32 %v810, %v859
        %v872 = vsub.f32 %v836, %v862
        %v873 = vsub.f32 %v839, %v865
        %v874 = vmul.f32 %v866, 1.442695
        %v875 = vpow.pop %v874
        %v876 = vmul.f32 %v867, 1.442695
        %v877 = vpow.pop %v876
        %v878 = vmul.f32 %v868, 1.442695
        %v879 = vpow.pop %v878
        %v880 = vmul.f32 %v869, 1.442695
        %v881 = vpow.pop %v880
        %v882 = vmul.f32 %v870, 1.442695
        %v883 = vpow.pop %v882
        %v884 = vmul.f32 %v871, 1.442695
        %v885 = vpow.pop %v884
        %v886 = vmul.f32 %v872, 1.442695
        %v887 = vpow.pop %v886
        %v888 = vmul.f32 %v873, 1.442695
        %v889 = vpow.pop %v888
        %v890 = vsel %vm841, %v875, 0.0
        %891 = vadd.xlane.f32.xlu0 %v890
        %v892 = vpop.xlane.xlu0 %891
        %v893 = vsel %vm841, %v877, 0.0
        %894 = vadd.xlane.f32.xlu0 %v893
        %v895 = vpop.xlane.xlu0 %894
        %v896 = vsel %vm841, %v879, 0.0
        %897 = vadd.xlane.f32.xlu0 %v896
        %v898 = vpop.xlane.xlu0 %897
        %v899 = vsel %vm841, %v881, 0.0
        %900 = vadd.xlane.f32.xlu0 %v899
        %v901 = vpop.xlane.xlu0 %900
        %v902 = vsel %vm841, %v883, 0.0
        %903 = vadd.xlane.f32.xlu0 %v902
        %v904 = vpop.xlane.xlu0 %903
        %v905 = vsel %vm841, %v885, 0.0
        %906 = vadd.xlane.f32.xlu0 %v905
        %v907 = vpop.xlane.xlu0 %906
        %v908 = vsel %vm841, %v887, 0.0
        %909 = vadd.xlane.f32.xlu0 %v908
        %v910 = vpop.xlane.xlu0 %909
        %v911 = vsel %vm841, %v889, 0.0
        %912 = vadd.xlane.f32.xlu0 %v911
        %v913 = vpop.xlane.xlu0 %912
        %v914 = vrcp.pop %v892
        %v915 = vmul.f32 %v892, %v914
        %v916 = vsub.f32 1.0, %v915
        %v917 = vmul.f32 %v914, %v916
        %v918 = vadd.f32 %v914, %v917
        %vm919 = vweird.f32 %v892
        %vm920 = vweird.f32 %v914
        %vm921 = vmor %vm919, %vm920
        %v922 = vsel %vm921, %v914, %v918
        %v923 = vand.u32 2147483647, %v892
        %vm924 = vcmp.eq.f32.partialorder %v923, 8.507059e+37
        %v925 = vand.u32 %v892, 2147483648
        %v926 = vor.u32 1.1754944e-38, %v925
        %v927 = vsel %vm924, %v926, %v922
        %v928 = vmul.f32 %v875, %v927
        %v929 = vrcp.pop %v895
        %v930 = vmul.f32 %v895, %v929
        %v931 = vsub.f32 1.0, %v930
        %v932 = vmul.f32 %v929, %v931
        %v933 = vadd.f32 %v929, %v932
        %vm934 = vweird.f32 %v895
        %vm935 = vweird.f32 %v929
        %vm936 = vmor %vm934, %vm935
        %v937 = vsel %vm936, %v929, %v933
        %v938 = vand.u32 2147483647, %v895
        %vm939 = vcmp.eq.f32.partialorder %v938, 8.507059e+37
        %v940 = vand.u32 %v895, 2147483648
        %v941 = vor.u32 1.1754944e-38, %v940
        %v942 = vsel %vm939, %v941, %v937
        %v943 = vmul.f32 %v877, %v942
        %v944 = vrcp.pop %v898
        %v945 = vmul.f32 %v898, %v944
        %v946 = vsub.f32 1.0, %v945
        %v947 = vmul.f32 %v944, %v946
        %v948 = vadd.f32 %v944, %v947
        %vm949 = vweird.f32 %v898
        %vm950 = vweird.f32 %v944
        %vm951 = vmor %vm949, %vm950
        %v952 = vsel %vm951, %v944, %v948
        %v953 = vand.u32 2147483647, %v898
        %vm954 = vcmp.eq.f32.partialorder %v953, 8.507059e+37
        %v955 = vand.u32 %v898, 2147483648
        %v956 = vor.u32 1.1754944e-38, %v955
        %v957 = vsel %vm954, %v956, %v952
        %v958 = vmul.f32 %v879, %v957
        %v959 = vrcp.pop %v901
        %v960 = vmul.f32 %v901, %v959
        %v961 = vsub.f32 1.0, %v960
        %v962 = vmul.f32 %v959, %v961
        %v963 = vadd.f32 %v959, %v962
        %vm964 = vweird.f32 %v901
        %vm965 = vweird.f32 %v959
        %vm966 = vmor %vm964, %vm965
        %v967 = vsel %vm966, %v959, %v963
        %v968 = vand.u32 2147483647, %v901
        %vm969 = vcmp.eq.f32.partialorder %v968, 8.507059e+37
        %v970 = vand.u32 %v901, 2147483648
        %v971 = vor.u32 1.1754944e-38, %v970
        %v972 = vsel %vm969, %v971, %v967
        %v973 = vmul.f32 %v881, %v972
        %v974 = vrcp.pop %v904
        %v975 = vmul.f32 %v904, %v974
        %v976 = vsub.f32 1.0, %v975
        %v977 = vmul.f32 %v974, %v976
        %v978 = vadd.f32 %v974, %v977
        %vm979 = vweird.f32 %v904
        %vm980 = vweird.f32 %v974
        %vm981 = vmor %vm979, %vm980
        %v982 = vsel %vm981, %v974, %v978
        %v983 = vand.u32 2147483647, %v904
        %vm984 = vcmp.eq.f32.partialorder %v983, 8.507059e+37
        %v985 = vand.u32 %v904, 2147483648
        %v986 = vor.u32 1.1754944e-38, %v985
        %v987 = vsel %vm984, %v986, %v982
        %v988 = vmul.f32 %v883, %v987
        %v989 = vrcp.pop %v907
        %v990 = vmul.f32 %v907, %v989
        %v991 = vsub.f32 1.0, %v990
        %v992 = vmul.f32 %v989, %v991
        %v993 = vadd.f32 %v989, %v992
        %vm994 = vweird.f32 %v907
        %vm995 = vweird.f32 %v989
        %vm996 = vmor %vm994, %vm995
        %v997 = vsel %vm996, %v989, %v993
        %v998 = vand.u32 2147483647, %v907
        %vm999 = vcmp.eq.f32.partialorder %v998, 8.507059e+37
        %v1000 = vand.u32 %v907, 2147483648
        %v1001 = vor.u32 1.1754944e-38, %v1000
        %v1002 = vsel %vm999, %v1001, %v997
        %v1003 = vmul.f32 %v885, %v1002
        %v1004 = vrcp.pop %v910
        %v1005 = vmul.f32 %v910, %v1004
        %v1006 = vsub.f32 1.0, %v1005
        %v1007 = vmul.f32 %v1004, %v1006
        %v1008 = vadd.f32 %v1004, %v1007
        %vm1009 = vweird.f32 %v910
        %vm1010 = vweird.f32 %v1004
        %vm1011 = vmor %vm1009, %vm1010
        %v1012 = vsel %vm1011, %v1004, %v1008
        %v1013 = vand.u32 2147483647, %v910
        %vm1014 = vcmp.eq.f32.partialorder %v1013, 8.507059e+37
        %v1015 = vand.u32 %v910, 2147483648
        %v1016 = vor.u32 1.1754944e-38, %v1015
        %v1017 = vsel %vm1014, %v1016, %v1012
        %v1018 = vmul.f32 %v887, %v1017
        %v1019 = vrcp.pop %v913
        %v1020 = vmul.f32 %v913, %v1019
        %v1021 = vsub.f32 1.0, %v1020
        %v1022 = vmul.f32 %v1019, %v1021
        %v1023 = vadd.f32 %v1019, %v1022
        %vm1024 = vweird.f32 %v913
        %vm1025 = vweird.f32 %v1019
        %vm1026 = vmor %vm1024, %vm1025
        %v1027 = vsel %vm1026, %v1019, %v1023
        %v1028 = vand.u32 2147483647, %v913
        %vm1029 = vcmp.eq.f32.partialorder %v1028, 8.507059e+37
        %v1030 = vand.u32 %v913, 2147483648
        %v1031 = vor.u32 1.1754944e-38, %v1030
        %v1032 = vsel %vm1029, %v1031, %v1027
        %v1033 = vmul.f32 %v889, %v1032
        %v1035 = vsel %vm841, %v928, 0
        %v1038 = vsel %vm841, %v943, 0
        %v1041 = vsel %vm841, %v572, 0
        %v1044 = vsel %vm841, %v573, 0
        %v1047 = vsel %vm841, %v574, 0
        %v1050 = vsel %vm841, %v575, 0
        %1052 = vmatpush.xpose.msra.mxu0 0.0
        %1053 = vmatpush.xpose.msra.mxu0 0.0
        %1054 = vmatpush.xpose.msra.mxu0 0.0
        %1055 = vmatpush.xpose.msra.mxu0 0.0
        %1056 = vmatpush.xpose.msra.mxu0 0.0
        %1057 = vmatpush.xpose.msra.mxu0 0.0
        %1058 = vmatpush.xpose.msra.mxu0 0.0
        %1059 = vmatpush.xpose.msra.mxu0 0.0
        %1060 = vmatpush.xpose.msra.mxu0 0.0
        %1061 = vmatpush.xpose.msra.mxu0 0.0
        %1062 = vmatpush.xpose.msra.mxu0 0.0
        %1063 = vmatpush.xpose.msra.mxu0 0.0
        %1064 = vmatpush.xpose.msra.mxu0 %v1050
        %1065 = vmatpush.xpose.msra.mxu0 %v1047
        %1066 = vmatpush.xpose.msra.mxu0 %v1044
        %1067 = vmatpush.xpose.msra.mxu0 %v1041
        %1068 = vmatmul.f32.gmra.mxu0 %v1035
        %v1069 = vpop.f32.mrf.mxu0
        %v1070 = vadd.f32 0.0, %v1069
        %1071 = vmatmul.f32.gmra.mxu0 %v1038
        %v1072 = vpop.f32.mrf.mxu0
        %v1073 = vadd.f32 0.0, %v1072
        %1074 = vdwg.mxu0
        %v1076 = vsel %vm841, %v958, 0
        %v1079 = vsel %vm841, %v973, 0
        %v1082 = vsel %vm841, %v576, 0
        %v1085 = vsel %vm841, %v577, 0
        %v1088 = vsel %vm841, %v578, 0
        %v1091 = vsel %vm841, %v579, 0
        %1093 = vmatpush.xpose.msra.mxu0 0.0
        %1094 = vmatpush.xpose.msra.mxu0 0.0
        %1095 = vmatpush.xpose.msra.mxu0 0.0
        %1096 = vmatpush.xpose.msra.mxu0 0.0
        %1097 = vmatpush.xpose.msra.mxu0 0.0
        %1098 = vmatpush.xpose.msra.mxu0 0.0
        %1099 = vmatpush.xpose.msra.mxu0 0.0
        %1100 = vmatpush.xpose.msra.mxu0 0.0
        %1101 = vmatpush.xpose.msra.mxu0 0.0
        %1102 = vmatpush.xpose.msra.mxu0 0.0
        %1103 = vmatpush.xpose.msra.mxu0 0.0
        %1104 = vmatpush.xpose.msra.mxu0 0.0
        %1105 = vmatpush.xpose.msra.mxu0 %v1091
        %1106 = vmatpush.xpose.msra.mxu0 %v1088
        %1107 = vmatpush.xpose.msra.mxu0 %v1085
        %1108 = vmatpush.xpose.msra.mxu0 %v1082
        %1109 = vmatmul.f32.gmra.mxu0 %v1076
        %v1110 = vpop.f32.mrf.mxu0
        %v1111 = vadd.f32 0.0, %v1110
        %1112 = vmatmul.f32.gmra.mxu0 %v1079
        %v1113 = vpop.f32.mrf.mxu0
        %v1114 = vadd.f32 0.0, %v1113
        %1115 = vdwg.mxu0
        %v1117 = vsel %vm841, %v988, 0
        %v1120 = vsel %vm841, %v1003, 0
        %v1123 = vsel %vm841, %v580, 0
        %v1126 = vsel %vm841, %v581, 0
        %v1129 = vsel %vm841, %v582, 0
        %v1132 = vsel %vm841, %v583, 0
        %1134 = vmatpush.xpose.msra.mxu0 0.0
        %1135 = vmatpush.xpose.msra.mxu0 0.0
        %1136 = vmatpush.xpose.msra.mxu0 0.0
        %1137 = vmatpush.xpose.msra.mxu0 0.0
        %1138 = vmatpush.xpose.msra.mxu0 0.0
        %1139 = vmatpush.xpose.msra.mxu0 0.0
        %1140 = vmatpush.xpose.msra.mxu0 0.0
        %1141 = vmatpush.xpose.msra.mxu0 0.0
        %1142 = vmatpush.xpose.msra.mxu0 0.0
        %1143 = vmatpush.xpose.msra.mxu0 0.0
        %1144 = vmatpush.xpose.msra.mxu0 0.0
        %1145 = vmatpush.xpose.msra.mxu0 0.0
        %1146 = vmatpush.xpose.msra.mxu0 %v1132
        %1147 = vmatpush.xpose.msra.mxu0 %v1129
        %1148 = vmatpush.xpose.msra.mxu0 %v1126
        %1149 = vmatpush.xpose.msra.mxu0 %v1123
        %1150 = vmatmul.f32.gmra.mxu0 %v1117
        %v1151 = vpop.f32.mrf.mxu0
        %v1152 = vadd.f32 0.0, %v1151
        %1153 = vmatmul.f32.gmra.mxu0 %v1120
        %v1154 = vpop.f32.mrf.mxu0
        %v1155 = vadd.f32 0.0, %v1154
        %1156 = vdwg.mxu0
        %v1158 = vsel %vm841, %v1018, 0
        %v1161 = vsel %vm841, %v1033, 0
        %v1164 = vsel %vm841, %v584, 0
        %v1167 = vsel %vm841, %v585, 0
        %v1170 = vsel %vm841, %v586, 0
        %v1173 = vsel %vm841, %v587, 0
        %1175 = vmatpush.xpose.msra.mxu0 0.0
        %1176 = vmatpush.xpose.msra.mxu0 0.0
        %1177 = vmatpush.xpose.msra.mxu0 0.0
        %1178 = vmatpush.xpose.msra.mxu0 0.0
        %1179 = vmatpush.xpose.msra.mxu0 0.0
        %1180 = vmatpush.xpose.msra.mxu0 0.0
        %1181 = vmatpush.xpose.msra.mxu0 0.0
        %1182 = vmatpush.xpose.msra.mxu0 0.0
        %1183 = vmatpush.xpose.msra.mxu0 0.0
        %1184 = vmatpush.xpose.msra.mxu0 0.0
        %1185 = vmatpush.xpose.msra.mxu0 0.0
        %1186 = vmatpush.xpose.msra.mxu0 0.0
        %1187 = vmatpush.xpose.msra.mxu0 %v1173
        %1188 = vmatpush.xpose.msra.mxu0 %v1170
        %1189 = vmatpush.xpose.msra.mxu0 %v1167
        %1190 = vmatpush.xpose.msra.mxu0 %v1164
        %1191 = vmatmul.f32.gmra.mxu0 %v1158
        %v1192 = vpop.f32.mrf.mxu0
        %v1193 = vadd.f32 0.0, %v1192
        %1194 = vmatmul.f32.gmra.mxu0 %v1161
        %v1195 = vpop.f32.mrf.mxu0
        %v1196 = vadd.f32 0.0, %v1195
        %1197 = vdwg.mxu0
        %v1198 = vld [vmem:[#allocation4] sm:$0xff]
        %v1199 = vld [vmem:[#allocation4 + $0x8] sm:$0xff]
        %v1200 = vld [vmem:[#allocation4 + $0x10] sm:$0xff]
        %v1201 = vld [vmem:[#allocation4 + $0x18] sm:$0xff]
        %v1202 = vld [vmem:[#allocation4 + $0x20] sm:$0xff]
        %v1203 = vld [vmem:[#allocation4 + $0x28] sm:$0xff]
        %v1204 = vld [vmem:[#allocation4 + $0x30] sm:$0xff]
        %v1205 = vld [vmem:[#allocation4 + $0x38] sm:$0xff]
        %v1206 = vld [vmem:[#allocation4 + $0x40] sm:$0xff]
        %v1207 = vld [vmem:[#allocation4 + $0x48] sm:$0xff]
        %v1208 = vld [vmem:[#allocation4 + $0x50] sm:$0xff]
        %v1209 = vld [vmem:[#allocation4 + $0x58] sm:$0xff]
        %v1210 = vld [vmem:[#allocation4 + $0x60] sm:$0xff]
        %v1211 = vld [vmem:[#allocation4 + $0x68] sm:$0xff]
        %v1212 = vld [vmem:[#allocation4 + $0x70] sm:$0xff]
        %v1213 = vld [vmem:[#allocation4 + $0x78] sm:$0xff]
        %v1215 = vsel %vm724, %v1070, 0
        %v1218 = vsel %vm724, %v1073, 0
        %1220 = vmatpush.msra.mxu0 0.0
        %1221 = vmatpush.msra.mxu0 0.0
        %1222 = vmatpush.msra.mxu0 0.0
        %1223 = vmatpush.msra.mxu0 0.0
        %1224 = vmatpush.msra.mxu0 0.0
        %1225 = vmatpush.msra.mxu0 0.0
        %1226 = vmatpush.msra.mxu0 0.0
        %1227 = vmatpush.msra.mxu0 0.0
        %1228 = vmatpush.msra.mxu0 0.0
        %1229 = vmatpush.msra.mxu0 0.0
        %1230 = vmatpush.msra.mxu0 0.0
        %1231 = vmatpush.msra.mxu0 0.0
        %1232 = vmatpush.msra.mxu0 %v1201
        %1233 = vmatpush.msra.mxu0 %v1200
        %1234 = vmatpush.msra.mxu0 %v1199
        %1235 = vmatpush.msra.mxu0 %v1198
        %1236 = vmatmul.f32.gmra.mxu0 %v1215
        %v1237 = vpop.f32.mrf.mxu0
        %v1238 = vadd.f32 0.0, %v1237
        %1239 = vmatmul.f32.gmra.mxu0 %v1218
        %v1240 = vpop.f32.mrf.mxu0
        %v1241 = vadd.f32 0.0, %v1240
        %1242 = vdwg.mxu0
        %v1244 = vsel %vm724, %v1111, 0
        %v1247 = vsel %vm724, %v1114, 0
        %1249 = vmatpush.msra.mxu0 0.0
        %1250 = vmatpush.msra.mxu0 0.0
        %1251 = vmatpush.msra.mxu0 0.0
        %1252 = vmatpush.msra.mxu0 0.0
        %1253 = vmatpush.msra.mxu0 0.0
        %1254 = vmatpush.msra.mxu0 0.0
        %1255 = vmatpush.msra.mxu0 0.0
        %1256 = vmatpush.msra.mxu0 0.0
        %1257 = vmatpush.msra.mxu0 0.0
        %1258 = vmatpush.msra.mxu0 0.0
        %1259 = vmatpush.msra.mxu0 0.0
        %1260 = vmatpush.msra.mxu0 0.0
        %1261 = vmatpush.msra.mxu0 %v1205
        %1262 = vmatpush.msra.mxu0 %v1204
        %1263 = vmatpush.msra.mxu0 %v1203
        %1264 = vmatpush.msra.mxu0 %v1202
        %1265 = vmatmul.f32.gmra.mxu0 %v1244
        %v1266 = vpop.f32.mrf.mxu0
        %v1267 = vadd.f32 0.0, %v1266
        %1268 = vmatmul.f32.gmra.mxu0 %v1247
        %v1269 = vpop.f32.mrf.mxu0
        %v1270 = vadd.f32 0.0, %v1269
        %1271 = vdwg.mxu0
        %v1273 = vsel %vm724, %v1152, 0
        %v1276 = vsel %vm724, %v1155, 0
        %1278 = vmatpush.msra.mxu0 0.0
        %1279 = vmatpush.msra.mxu0 0.0
        %1280 = vmatpush.msra.mxu0 0.0
        %1281 = vmatpush.msra.mxu0 0.0
        %1282 = vmatpush.msra.mxu0 0.0
        %1283 = vmatpush.msra.mxu0 0.0
        %1284 = vmatpush.msra.mxu0 0.0
        %1285 = vmatpush.msra.mxu0 0.0
        %1286 = vmatpush.msra.mxu0 0.0
        %1287 = vmatpush.msra.mxu0 0.0
        %1288 = vmatpush.msra.mxu0 0.0
        %1289 = vmatpush.msra.mxu0 0.0
        %1290 = vmatpush.msra.mxu0 %v1209
        %1291 = vmatpush.msra.mxu0 %v1208
        %1292 = vmatpush.msra.mxu0 %v1207
        %1293 = vmatpush.msra.mxu0 %v1206
        %1294 = vmatmul.f32.gmra.mxu0 %v1273
        %v1295 = vpop.f32.mrf.mxu0
        %v1296 = vadd.f32 0.0, %v1295
        %1297 = vmatmul.f32.gmra.mxu0 %v1276
        %v1298 = vpop.f32.mrf.mxu0
        %v1299 = vadd.f32 0.0, %v1298
        %1300 = vdwg.mxu0
        %v1302 = vsel %vm724, %v1193, 0
        %v1305 = vsel %vm724, %v1196, 0
        %1307 = vmatpush.msra.mxu0 0.0
        %1308 = vmatpush.msra.mxu0 0.0
        %1309 = vmatpush.msra.mxu0 0.0
        %1310 = vmatpush.msra.mxu0 0.0
        %1311 = vmatpush.msra.mxu0 0.0
        %1312 = vmatpush.msra.mxu0 0.0
        %1313 = vmatpush.msra.mxu0 0.0
        %1314 = vmatpush.msra.mxu0 0.0
        %1315 = vmatpush.msra.mxu0 0.0
        %1316 = vmatpush.msra.mxu0 0.0
        %1317 = vmatpush.msra.mxu0 0.0
        %1318 = vmatpush.msra.mxu0 0.0
        %1319 = vmatpush.msra.mxu0 %v1213
        %1320 = vmatpush.msra.mxu0 %v1212
        %1321 = vmatpush.msra.mxu0 %v1211
        %1322 = vmatpush.msra.mxu0 %v1210
        %1323 = vmatmul.f32.gmra.mxu0 %v1302
        %v1324 = vpop.f32.mrf.mxu0
        %v1325 = vadd.f32 0.0, %v1324
        %1326 = vmatmul.f32.gmra.mxu0 %v1305
        %v1327 = vpop.f32.mrf.mxu0
        %v1328 = vadd.f32 0.0, %v1327
        %1329 = vdwg.mxu0
        %v1330 = vadd.f32 %v1238, %v1267
        %v1331 = vadd.f32 %v1330, %v1296
        %v1332 = vadd.f32 %v1331, %v1325
        %v1333 = vadd.f32 %v1241, %v1270
        %v1334 = vadd.f32 %v1333, %v1299
        %v1335 = vadd.f32 %v1334, %v1328
        %v1336 = vld [vmem:[%s3] sm:$0x1]
        %v1338 = vperm.slane %v1336, 0
        %v1340 = vadd.f32 %v1332, %v1338
        %v1341 = vadd.f32 %v1335, %v1338
        %v1342 = vadd.f32 %v1340, %v373
        %v1343 = vadd.f32 %v1341, %v374
        %v1344 = vld [vmem:[#allocation6] sm:$0xff]
        %v1345 = vld [vmem:[#allocation6 + $0x8] sm:$0xff]
        %v1346 = vld [vmem:[#allocation6 + $0x10] sm:$0xff]
        %v1347 = vld [vmem:[#allocation6 + $0x18] sm:$0xff]
        %v1348 = vld [vmem:[#allocation6 + $0x20] sm:$0xff]
        %v1349 = vld [vmem:[#allocation6 + $0x28] sm:$0xff]
        %v1350 = vld [vmem:[#allocation6 + $0x30] sm:$0xff]
        %v1351 = vld [vmem:[#allocation6 + $0x38] sm:$0xff]
        %v1352 = vld [vmem:[#allocation6 + $0x40] sm:$0xff]
        %v1353 = vld [vmem:[#allocation6 + $0x48] sm:$0xff]
        %v1354 = vld [vmem:[#allocation6 + $0x50] sm:$0xff]
        %v1355 = vld [vmem:[#allocation6 + $0x58] sm:$0xff]
        %v1356 = vld [vmem:[#allocation6 + $0x60] sm:$0xff]
        %v1357 = vld [vmem:[#allocation6 + $0x68] sm:$0xff]
        %v1358 = vld [vmem:[#allocation6 + $0x70] sm:$0xff]
        %v1359 = vld [vmem:[#allocation6 + $0x78] sm:$0xff]
        %v1360 = vld [vmem:[#allocation6 + $0x80] sm:$0xff]
        %v1361 = vld [vmem:[#allocation6 + $0x88] sm:$0xff]
        %v1362 = vld [vmem:[#allocation6 + $0x90] sm:$0xff]
        %v1363 = vld [vmem:[#allocation6 + $0x98] sm:$0xff]
        %v1364 = vld [vmem:[#allocation6 + $0xa0] sm:$0xff]
        %v1365 = vld [vmem:[#allocation6 + $0xa8] sm:$0xff]
        %v1366 = vld [vmem:[#allocation6 + $0xb0] sm:$0xff]
        %v1367 = vld [vmem:[#allocation6 + $0xb8] sm:$0xff]
        %v1368 = vld [vmem:[#allocation6 + $0xc0] sm:$0xff]
        %v1369 = vld [vmem:[#allocation6 + $0xc8] sm:$0xff]
        %v1370 = vld [vmem:[#allocation6 + $0xd0] sm:$0xff]
        %v1371 = vld [vmem:[#allocation6 + $0xd8] sm:$0xff]
        %v1372 = vld [vmem:[#allocation6 + $0xe0] sm:$0xff]
        %v1373 = vld [vmem:[#allocation6 + $0xe8] sm:$0xff]
        %v1374 = vld [vmem:[#allocation6 + $0xf0] sm:$0xff]
        %v1375 = vld [vmem:[#allocation6 + $0xf8] sm:$0xff]
        %v1376 = vld [vmem:[%s5] sm:$0x3]
        %v1378 = vperm.slane %v1376, 0
        %v1379 = vperm.slane %v1376, 1
        %1382 = vmatpush.msra.mxu0 %v1374
        %1383 = vmatpush.msra.mxu0 %v1372
        %1384 = vmatpush.msra.mxu0 %v1370
        %1385 = vmatpush.msra.mxu0 %v1368
        %1386 = vmatpush.msra.mxu0 %v1366
        %1387 = vmatpush.msra.mxu0 %v1364
        %1388 = vmatpush.msra.mxu0 %v1362
        %1389 = vmatpush.msra.mxu0 %v1360
        %1390 = vmatpush.msra.mxu0 %v1358
        %1391 = vmatpush.msra.mxu0 %v1356
        %1392 = vmatpush.msra.mxu0 %v1354
        %1393 = vmatpush.msra.mxu0 %v1352
        %1394 = vmatpush.msra.mxu0 %v1350
        %1395 = vmatpush.msra.mxu0 %v1348
        %1396 = vmatpush.msra.mxu0 %v1346
        %1397 = vmatpush.msra.mxu0 %v1344
        %1398 = vmatmul.f32.gmra.mxu0 %v1342
        %v1399 = vpop.f32.mrf.mxu0
        %v1400 = vadd.f32 %v1378, %v1399
        %1401 = vmatmul.f32.gmra.mxu0 %v1343
        %v1402 = vpop.f32.mrf.mxu0
        %v1403 = vadd.f32 %v1378, %v1402
        %1404 = vdwg.mxu0
        %1405 = vmatpush.msra.mxu0 %v1375
        %1406 = vmatpush.msra.mxu0 %v1373
        %1407 = vmatpush.msra.mxu0 %v1371
        %1408 = vmatpush.msra.mxu0 %v1369
        %1409 = vmatpush.msra.mxu0 %v1367
        %1410 = vmatpush.msra.mxu0 %v1365
        %1411 = vmatpush.msra.mxu0 %v1363
        %1412 = vmatpush.msra.mxu0 %v1361
        %1413 = vmatpush.msra.mxu0 %v1359
        %1414 = vmatpush.msra.mxu0 %v1357
        %1415 = vmatpush.msra.mxu0 %v1355
        %1416 = vmatpush.msra.mxu0 %v1353
        %1417 = vmatpush.msra.mxu0 %v1351
        %1418 = vmatpush.msra.mxu0 %v1349
        %1419 = vmatpush.msra.mxu0 %v1347
        %1420 = vmatpush.msra.mxu0 %v1345
        %1421 = vmatmul.f32.gmra.mxu0 %v1342
        %v1422 = vpop.f32.mrf.mxu0
        %v1423 = vadd.f32 %v1379, %v1422
        %1424 = vmatmul.f32.gmra.mxu0 %v1343
        %v1425 = vpop.f32.mrf.mxu0
        %v1426 = vadd.f32 %v1379, %v1425
        %1427 = vdwg.mxu0
        %v1428 = vmul.f32 %v1400, 0.5
        %v1429 = vmul.f32 %v1423, 0.5
        %v1430 = vmul.f32 %v1403, 0.5
        %v1431 = vmul.f32 %v1426, 0.5
        %v1432 = vmul.f32 %v1400, 0.70710677
        %v1433 = vmul.f32 %v1423, 0.70710677
        %v1434 = vmul.f32 %v1403, 0.70710677
        %v1435 = vmul.f32 %v1426, 0.70710677
        %v1436 = vmul.f32 %v1432, %v1432
        %v1437 = vmin.f32 16.0, %v1436
        %v1438 = vmul.f32 %v1437, 2.1237322e-06
        %v1439 = vadd.f32 %v1438, 0.00028619796
        %v1440 = vmul.f32 %v1437, %v1439
        %v1441 = vadd.f32 %v1440, 0.0036580483
        %v1442 = vmul.f32 %v1437, %v1441
        %v1443 = vadd.f32 %v1442, 0.05243302
        %v1444 = vmul.f32 %v1437, %v1443
        %v1445 = vadd.f32 %v1444, 0.18741608
        %v1446 = vmul.f32 %v1437, %v1445
        %v1447 = vadd.f32 %v1446, 1.1283791
        %v1448 = vmul.f32 %v1432, %v1447
        %v1449 = vmul.f32 %v1437, 3.8918573e-05
        %v1450 = vadd.f32 %v1449, 0.001143296
        %v1451 = vmul.f32 %v1437, %v1450
        %v1452 = vadd.f32 %v1451, 0.014752088
        %v1453 = vmul.f32 %v1437, %v1452
        %v1454 = vadd.f32 %v1453, 0.112945676
        %v1455 = vmul.f32 %v1437, %v1454
        %v1456 = vadd.f32 %v1455, 0.4994258
        %v1457 = vmul.f32 %v1437, %v1456
        %v1458 = vadd.f32 %v1457, 1.0
        %v1459 = vrcp.pop %v1458
        %v1460 = vmul.f32 %v1458, %v1459
        %v1461 = vsub.f32 1.0, %v1460
        %v1462 = vmul.f32 %v1459, %v1461
        %v1463 = vadd.f32 %v1459, %v1462
        %vm1464 = vweird.f32 %v1458
        %vm1465 = vweird.f32 %v1459
        %vm1466 = vmor %vm1464, %vm1465
        %v1467 = vsel %vm1466, %v1459, %v1463
        %v1468 = vand.u32 2147483647, %v1458
        %vm1469 = vcmp.eq.f32.partialorder %v1468, 8.507059e+37
        %v1470 = vand.u32 %v1458, 2147483648
        %v1471 = vor.u32 1.1754944e-38, %v1470
        %v1472 = vsel %vm1469, %v1471, %v1467
        %v1473 = vmul.f32 %v1448, %v1472
        %v1474 = vmin.f32 %v1473, 1.0
        %v1475 = vmax.f32 %v1474, -1.0
        %v1476 = vmul.f32 %v1433, %v1433
        %v1477 = vmin.f32 16.0, %v1476
        %v1478 = vmul.f32 %v1477, 2.1237322e-06
        %v1479 = vadd.f32 %v1478, 0.00028619796
        %v1480 = vmul.f32 %v1477, %v1479
        %v1481 = vadd.f32 %v1480, 0.0036580483
        %v1482 = vmul.f32 %v1477, %v1481
        %v1483 = vadd.f32 %v1482, 0.05243302
        %v1484 = vmul.f32 %v1477, %v1483
        %v1485 = vadd.f32 %v1484, 0.18741608
        %v1486 = vmul.f32 %v1477, %v1485
        %v1487 = vadd.f32 %v1486, 1.1283791
        %v1488 = vmul.f32 %v1433, %v1487
        %v1489 = vmul.f32 %v1477, 3.8918573e-05
        %v1490 = vadd.f32 %v1489, 0.001143296
        %v1491 = vmul.f32 %v1477, %v1490
        %v1492 = vadd.f32 %v1491, 0.014752088
        %v1493 = vmul.f32 %v1477, %v1492
        %v1494 = vadd.f32 %v1493, 0.112945676
        %v1495 = vmul.f32 %v1477, %v1494
        %v1496 = vadd.f32 %v1495, 0.4994258
        %v1497 = vmul.f32 %v1477, %v1496
        %v1498 = vadd.f32 %v1497, 1.0
        %v1499 = vrcp.pop %v1498
        %v1500 = vmul.f32 %v1498, %v1499
        %v1501 = vsub.f32 1.0, %v1500
        %v1502 = vmul.f32 %v1499, %v1501
        %v1503 = vadd.f32 %v1499, %v1502
        %vm1504 = vweird.f32 %v1498
        %vm1505 = vweird.f32 %v1499
        %vm1506 = vmor %vm1504, %vm1505
        %v1507 = vsel %vm1506, %v1499, %v1503
        %v1508 = vand.u32 2147483647, %v1498
        %vm1509 = vcmp.eq.f32.partialorder %v1508, 8.507059e+37
        %v1510 = vand.u32 %v1498, 2147483648
        %v1511 = vor.u32 1.1754944e-38, %v1510
        %v1512 = vsel %vm1509, %v1511, %v1507
        %v1513 = vmul.f32 %v1488, %v1512
        %v1514 = vmin.f32 %v1513, 1.0
        %v1515 = vmax.f32 %v1514, -1.0
        %v1516 = vmul.f32 %v1434, %v1434
        %v1517 = vmin.f32 16.0, %v1516
        %v1518 = vmul.f32 %v1517, 2.1237322e-06
        %v1519 = vadd.f32 %v1518, 0.00028619796
        %v1520 = vmul.f32 %v1517, %v1519
        %v1521 = vadd.f32 %v1520, 0.0036580483
        %v1522 = vmul.f32 %v1517, %v1521
        %v1523 = vadd.f32 %v1522, 0.05243302
        %v1524 = vmul.f32 %v1517, %v1523
        %v1525 = vadd.f32 %v1524, 0.18741608
        %v1526 = vmul.f32 %v1517, %v1525
        %v1527 = vadd.f32 %v1526, 1.1283791
        %v1528 = vmul.f32 %v1434, %v1527
        %v1529 = vmul.f32 %v1517, 3.8918573e-05
        %v1530 = vadd.f32 %v1529, 0.001143296
        %v1531 = vmul.f32 %v1517, %v1530
        %v1532 = vadd.f32 %v1531, 0.014752088
        %v1533 = vmul.f32 %v1517, %v1532
        %v1534 = vadd.f32 %v1533, 0.112945676
        %v1535 = vmul.f32 %v1517, %v1534
        %v1536 = vadd.f32 %v1535, 0.4994258
        %v1537 = vmul.f32 %v1517, %v1536
        %v1538 = vadd.f32 %v1537, 1.0
        %v1539 = vrcp.pop %v1538
        %v1540 = vmul.f32 %v1538, %v1539
        %v1541 = vsub.f32 1.0, %v1540
        %v1542 = vmul.f32 %v1539, %v1541
        %v1543 = vadd.f32 %v1539, %v1542
        %vm1544 = vweird.f32 %v1538
        %vm1545 = vweird.f32 %v1539
        %vm1546 = vmor %vm1544, %vm1545
        %v1547 = vsel %vm1546, %v1539, %v1543
        %v1548 = vand.u32 2147483647, %v1538
        %vm1549 = vcmp.eq.f32.partialorder %v1548, 8.507059e+37
        %v1550 = vand.u32 %v1538, 2147483648
        %v1551 = vor.u32 1.1754944e-38, %v1550
        %v1552 = vsel %vm1549, %v1551, %v1547
        %v1553 = vmul.f32 %v1528, %v1552
        %v1554 = vmin.f32 %v1553, 1.0
        %v1555 = vmax.f32 %v1554, -1.0
        %v1556 = vmul.f32 %v1435, %v1435
        %v1557 = vmin.f32 16.0, %v1556
        %v1558 = vmul.f32 %v1557, 2.1237322e-06
        %v1559 = vadd.f32 %v1558, 0.00028619796
        %v1560 = vmul.f32 %v1557, %v1559
        %v1561 = vadd.f32 %v1560, 0.0036580483
        %v1562 = vmul.f32 %v1557, %v1561
        %v1563 = vadd.f32 %v1562, 0.05243302
        %v1564 = vmul.f32 %v1557, %v1563
        %v1565 = vadd.f32 %v1564, 0.18741608
        %v1566 = vmul.f32 %v1557, %v1565
        %v1567 = vadd.f32 %v1566, 1.1283791
        %v1568 = vmul.f32 %v1435, %v1567
        %v1569 = vmul.f32 %v1557, 3.8918573e-05
        %v1570 = vadd.f32 %v1569, 0.001143296
        %v1571 = vmul.f32 %v1557, %v1570
        %v1572 = vadd.f32 %v1571, 0.014752088
        %v1573 = vmul.f32 %v1557, %v1572
        %v1574 = vadd.f32 %v1573, 0.112945676
        %v1575 = vmul.f32 %v1557, %v1574
        %v1576 = vadd.f32 %v1575, 0.4994258
        %v1577 = vmul.f32 %v1557, %v1576
        %v1578 = vadd.f32 %v1577, 1.0
        %v1579 = vrcp.pop %v1578
        %v1580 = vmul.f32 %v1578, %v1579
        %v1581 = vsub.f32 1.0, %v1580
        %v1582 = vmul.f32 %v1579, %v1581
        %v1583 = vadd.f32 %v1579, %v1582
        %vm1584 = vweird.f32 %v1578
        %vm1585 = vweird.f32 %v1579
        %vm1586 = vmor %vm1584, %vm1585
        %v1587 = vsel %vm1586, %v1579, %v1583
        %v1588 = vand.u32 2147483647, %v1578
        %vm1589 = vcmp.eq.f32.partialorder %v1588, 8.507059e+37
        %v1590 = vand.u32 %v1578, 2147483648
        %v1591 = vor.u32 1.1754944e-38, %v1590
        %v1592 = vsel %vm1589, %v1591, %v1587
        %v1593 = vmul.f32 %v1568, %v1592
        %v1594 = vmin.f32 %v1593, 1.0
        %v1595 = vmax.f32 %v1594, -1.0
        %v1596 = vadd.f32 %v1475, 1.0
        %v1597 = vadd.f32 %v1515, 1.0
        %v1598 = vadd.f32 %v1555, 1.0
        %v1599 = vadd.f32 %v1595, 1.0
        %v1600 = vmul.f32 %v1428, %v1596
        %v1601 = vmul.f32 %v1429, %v1597
        %v1602 = vmul.f32 %v1430, %v1598
        %v1603 = vmul.f32 %v1431, %v1599
        %v1604 = vld [vmem:[#allocation7] sm:$0xff]
        %v1605 = vld [vmem:[#allocation7 + $0x8] sm:$0xff]
        %v1606 = vld [vmem:[#allocation7 + $0x10] sm:$0xff]
        %v1607 = vld [vmem:[#allocation7 + $0x18] sm:$0xff]
        %v1608 = vld [vmem:[#allocation7 + $0x20] sm:$0xff]
        %v1609 = vld [vmem:[#allocation7 + $0x28] sm:$0xff]
        %v1610 = vld [vmem:[#allocation7 + $0x30] sm:$0xff]
        %v1611 = vld [vmem:[#allocation7 + $0x38] sm:$0xff]
        %v1612 = vld [vmem:[#allocation7 + $0x40] sm:$0xff]
        %v1613 = vld [vmem:[#allocation7 + $0x48] sm:$0xff]
        %v1614 = vld [vmem:[#allocation7 + $0x50] sm:$0xff]
        %v1615 = vld [vmem:[#allocation7 + $0x58] sm:$0xff]
        %v1616 = vld [vmem:[#allocation7 + $0x60] sm:$0xff]
        %v1617 = vld [vmem:[#allocation7 + $0x68] sm:$0xff]
        %v1618 = vld [vmem:[#allocation7 + $0x70] sm:$0xff]
        %v1619 = vld [vmem:[#allocation7 + $0x78] sm:$0xff]
        %v1620 = vld [vmem:[#allocation7 + $0x80] sm:$0xff]
        %v1621 = vld [vmem:[#allocation7 + $0x88] sm:$0xff]
        %v1622 = vld [vmem:[#allocation7 + $0x90] sm:$0xff]
        %v1623 = vld [vmem:[#allocation7 + $0x98] sm:$0xff]
        %v1624 = vld [vmem:[#allocation7 + $0xa0] sm:$0xff]
        %v1625 = vld [vmem:[#allocation7 + $0xa8] sm:$0xff]
        %v1626 = vld [vmem:[#allocation7 + $0xb0] sm:$0xff]
        %v1627 = vld [vmem:[#allocation7 + $0xb8] sm:$0xff]
        %v1628 = vld [vmem:[#allocation7 + $0xc0] sm:$0xff]
        %v1629 = vld [vmem:[#allocation7 + $0xc8] sm:$0xff]
        %v1630 = vld [vmem:[#allocation7 + $0xd0] sm:$0xff]
        %v1631 = vld [vmem:[#allocation7 + $0xd8] sm:$0xff]
        %v1632 = vld [vmem:[#allocation7 + $0xe0] sm:$0xff]
        %v1633 = vld [vmem:[#allocation7 + $0xe8] sm:$0xff]
        %v1634 = vld [vmem:[#allocation7 + $0xf0] sm:$0xff]
        %v1635 = vld [vmem:[#allocation7 + $0xf8] sm:$0xff]
        %v1636 = vld [vmem:[%s7] sm:$0x1]
        %v1638 = vperm.slane %v1636, 0
        %1640 = vmatpush.msra.mxu0 %v1619
        %1641 = vmatpush.msra.mxu0 %v1618
        %1642 = vmatpush.msra.mxu0 %v1617
        %1643 = vmatpush.msra.mxu0 %v1616
        %1644 = vmatpush.msra.mxu0 %v1615
        %1645 = vmatpush.msra.mxu0 %v1614
        %1646 = vmatpush.msra.mxu0 %v1613
        %1647 = vmatpush.msra.mxu0 %v1612
        %1648 = vmatpush.msra.mxu0 %v1611
        %1649 = vmatpush.msra.mxu0 %v1610
        %1650 = vmatpush.msra.mxu0 %v1609
        %1651 = vmatpush.msra.mxu0 %v1608
        %1652 = vmatpush.msra.mxu0 %v1607
        %1653 = vmatpush.msra.mxu0 %v1606
        %1654 = vmatpush.msra.mxu0 %v1605
        %1655 = vmatpush.msra.mxu0 %v1604
        %1656 = vmatmul.f32.gmra.mxu0 %v1600
        %v1657 = vpop.f32.mrf.mxu0
        %v1658 = vadd.f32 %v1638, %v1657
        %1659 = vmatmul.f32.gmra.mxu0 %v1602
        %v1660 = vpop.f32.mrf.mxu0
        %v1661 = vadd.f32 %v1638, %v1660
        %1662 = vdwg.mxu0
        %1663 = vmatpush.msra.mxu0 %v1635
        %1664 = vmatpush.msra.mxu0 %v1634
        %1665 = vmatpush.msra.mxu0 %v1633
        %1666 = vmatpush.msra.mxu0 %v1632
        %1667 = vmatpush.msra.mxu0 %v1631
        %1668 = vmatpush.msra.mxu0 %v1630
        %1669 = vmatpush.msra.mxu0 %v1629
        %1670 = vmatpush.msra.mxu0 %v1628
        %1671 = vmatpush.msra.mxu0 %v1627
        %1672 = vmatpush.msra.mxu0 %v1626
        %1673 = vmatpush.msra.mxu0 %v1625
        %1674 = vmatpush.msra.mxu0 %v1624
        %1675 = vmatpush.msra.mxu0 %v1623
        %1676 = vmatpush.msra.mxu0 %v1622
        %1677 = vmatpush.msra.mxu0 %v1621
        %1678 = vmatpush.msra.mxu0 %v1620
        %1679 = vmatmul.f32.gmra.mxu0 %v1601
        %v1680 = vpop.f32.mrf.mxu0
        %v1681 = vadd.f32 %v1658, %v1680
        %1682 = vmatmul.f32.gmra.mxu0 %v1603
        %v1683 = vpop.f32.mrf.mxu0
        %v1684 = vadd.f32 %v1661, %v1683
        %1685 = vdwg.mxu0
        %v1686 = vadd.f32 %v1681, %v1342
        %v1687 = vadd.f32 %v1684, %v1343
        %1688 = vst [vmem:[%s372] sm:$0xff] %v1686
        %1689 = vst [vmem:[%s372 + $0x8] sm:$0xff] %v1687
        %p1690 = scmp.lt.s32.totalorder %s22, 1
        %s1691 = scalar_select %p1690, %s22, 1
        %s1692 = smul.addr %s1691, 2
        %s1693 = smul.addr %s1692, 8
        %s1694 = scalar_lea.vmem %s8, %s1693
        // Predicated region
        $region69: #{ppp_forward.9} parent=51 // pred_check
          %p1695 = pneg %p213
        $region70: #{ppp_forward.9} parent=51 // pred_check_branch
          %1697 = sbr.rel (%p1695) target = $region72
        $region71: #{ppp_forward.9} parent=51 // pred_region
          _
        $region72: #{ppp_forward.9} parent=51 // pred_fallthru
          _
      $region52: #{ppp_forward.9} parent=5 // pred_fallthru
        _
      %p1698 = scmp.le.s32.totalorder 2, %s17
      // Predicated region
      $region73: #{ppp_forward.9} parent=5 // pred_check
        %p1699 = pneg %p1698
      $region74: #{ppp_forward.9} parent=5 // pred_check_branch
        %1701 = sbr.rel (%p1699) target = $region76
      $region75: #{ppp_forward.9} parent=5 // pred_region
        %s1702 = ssub.s32 %s17, 2
        // Predicated region
        $region77: #{ppp_forward.9} parent=75 // pred_check
          %p1703 = pneg %p219
        $region78: #{ppp_forward.9} parent=75 // pred_check_branch
          %1705 = sbr.rel (%p1703) target = $region80
        $region79: #{ppp_forward.9} parent=75 // pred_region
          %p1706 = scmp.lt.s32.totalorder %s23, 1
          %s1707 = scalar_select %p1706, %s23, 1
          %s1708 = smul.addr %s1707, 2
          %s1709 = smul.addr %s1708, 8
          %s1710 = scalar_lea.vmem %s8, %s1709
        $region80: #{ppp_forward.9} parent=75 // pred_fallthru
          _
      $region76: #{ppp_forward.9} parent=5 // pred_fallthru
        _
    $region6: #{ppp_forward.9} parent=1 // loop_footer
      %s21 = sadd.s32 1, %s17
    $region7: #{ppp_forward.9} parent=1 // loop_footer_branch
      %16 = sbr.rel target = $region3
    $region8: #{ppp_forward.9} parent=1 // loop_exit
      _
    %1711 = vsyncpa [#allocation3], 1
    %s1712 = scalar_lea.sflag [#allocation3], 1
    %1713 = vsyncpa %s1712, 1
    %1714 = vsyncpa [#allocation5], 1
    %1715 = vsyncpa [#allocation8], 1

</llo_original>
